<compile_context>
chip_gen: v5e
topology: v5e:2x2
jax: 0.10.0
libtpu: 0.0.40
codegen_flags: <defaults>
</compile_context>

<pallas_src>
import functools
import math

import jax
import jax.numpy as jnp
from jax.experimental import pallas as pl
from jax.experimental.pallas import tpu as pltpu


TRG_PAD_IDX = 1   # matches Decoder.trg_pad_idx
LN_EPS = 1e-5     # nn.LayerNorm default


# ------------------------------ fused kernel ------------------------------

def _decoder_kernel(
    ids_ref, pos_ref, enc_ref, tokemb_ref,
    sa_wqkv_ref, sa_bqkv_ref, sa_wo_ref, sa_bo_ref,
    ea_wq_ref, ea_bq_ref, ea_wkv_ref, ea_bkv_ref, ea_wo_ref, ea_bo_ref,
    ln_g_ref, ln_b_ref,
    w1_ref, b1_ref, w2_ref, b2_ref,
    wout_ref, bout_ref,
    out_ref, attn_ref,
    *, n_layers, n_heads, emb_scale, inv_attn_scale):
    f32 = jnp.float32
    T = ids_ref.shape[0]
    V, H = tokemb_ref.shape
    S = enc_ref.shape[0]
    nH = n_heads
    d = H // nH

    # ---- token embedding gather (one-hot @ table -> MXU) + positional add ----
    # TODO(synk): nn.Dropout layers are identity here (eval mode).
    ids = ids_ref[...]                                              # [T, 1] int32
    onehot = (jax.lax.broadcasted_iota(jnp.int32, (T, V), 1) == ids).astype(f32)
    x = (jnp.dot(onehot, tokemb_ref[...], preferred_element_type=f32)
         * emb_scale + pos_ref[...])                                # [T, H]
    enc = enc_ref[...]                                              # [S, H]

    # ---- target mask: keep[q,k] = pad[q] & (k <= q)  (pad on QUERY axis,
    #      matching trg_pad_mask.unsqueeze(1).unsqueeze(3) in the reference) ----
    row = jax.lax.broadcasted_iota(jnp.int32, (T, T), 0)
    col = jax.lax.broadcasted_iota(jnp.int32, (T, T), 1)
    keep = jnp.logical_and(col <= row, ids != TRG_PAD_IDX)          # [T, T] bool
    neg_inf = f32(-1e10)

    def layer_norm(z, g, b):
        # Fused statistics: one pass for mean and mean-of-squares.
        mu = jnp.mean(z, axis=-1, keepdims=True)
        var = jnp.maximum(jnp.mean(z * z, axis=-1, keepdims=True) - mu * mu, 0.0)
        return (z - mu) * jax.lax.rsqrt(var + LN_EPS) * g + b

    def softmax_last(e):
        m = jnp.max(e, axis=-1, keepdims=True)
        p = jnp.exp(e - m)
        return p / jnp.sum(p, axis=-1, keepdims=True)   # exact (emitted probs)

    def split_heads(z, off):
        # [R, >=off+H] -> [nH, R, d] via static lane slices + leading-axis stack.
        return jnp.stack([z[:, off + h * d: off + (h + 1) * d] for h in range(nH)],
                         axis=0)

    def merge_heads(ctx, wo_mat, bias_row):
        # concat-over-heads @ Wo == sum_h ctx_h @ Wo[h*d:(h+1)*d, :]
        out = jnp.dot(ctx[0], wo_mat[0:d, :], preferred_element_type=f32)
        for h in range(1, nH):
            out = out + jnp.dot(ctx[h], wo_mat[h * d:(h + 1) * d, :],
                                preferred_element_type=f32)
        return out + bias_row

    for l in range(n_layers):                                       # static unroll
        g = ln_g_ref[l]                                              # [1, H]
        b_ln = ln_b_ref[l]                                           # [1, H]

        # ----- self attention (fused QKV GEMM, batched-head einsums) -----
        qkv = jnp.dot(x, sa_wqkv_ref[l],
                      preferred_element_type=f32) + sa_bqkv_ref[l]   # [T, 3H]
        q3 = split_heads(qkv, 0)
        k3 = split_heads(qkv, H)
        v3 = split_heads(qkv, 2 * H)                                 # [nH, T, d]
        e = jnp.einsum('htd,hsd->hts', q3, k3,
                       preferred_element_type=f32) * inv_attn_scale  # [nH, T, T]
        e = jnp.where(keep[None, :, :], e, neg_inf)
        p = softmax_last(e)                 # self-attn probs discarded by reference
        ctx = jnp.einsum('hts,hsd->htd', p, v3, preferred_element_type=f32)
        sa = merge_heads(ctx, sa_wo_ref[l], sa_bo_ref[l])            # [T, H]
        x = layer_norm(x + sa, g, b_ln)

        # ----- encoder (cross) attention; src_mask is all-ones in the reference -----
        q = jnp.dot(x, ea_wq_ref[l],
                    preferred_element_type=f32) + ea_bq_ref[l]       # [T, H]
        kv = jnp.dot(enc, ea_wkv_ref[l],
                     preferred_element_type=f32) + ea_bkv_ref[l]     # [S, 2H]
        q3 = split_heads(q, 0)                                       # [nH, T, d]
        k3 = split_heads(kv, 0)
        v3 = split_heads(kv, H)                                      # [nH, S, d]
        e = jnp.einsum('htd,hsd->hts', q3, k3,
                       preferred_element_type=f32) * inv_attn_scale  # [nH, T, S]
        p = softmax_last(e)
        if l == n_layers - 1:
            # Lane-dense output block (Sp = 128): full unmasked zero store once,
            # then write the real probabilities into lanes [0, S).
            attn_ref[...] = jnp.zeros(attn_ref.shape, f32)
            attn_ref[:, :, 0:S] = p
        ctx = jnp.einsum('hts,hsd->htd', p, v3, preferred_element_type=f32)
        ea = merge_heads(ctx, ea_wo_ref[l], ea_bo_ref[l])
        x = layer_norm(x + ea, g, b_ln)

        # ----- positionwise feed-forward -----
        h1 = jnp.maximum(
            jnp.dot(x, w1_ref[l], preferred_element_type=f32) + b1_ref[l], 0.0)
        ff = jnp.dot(h1, w2_ref[l], preferred_element_type=f32) + b2_ref[l]
        x = layer_norm(x + ff, g, b_ln)

    # ---- final vocab projection (lane-padded to Vp=128, unmasked store) ----
    out_ref[...] = (jnp.dot(x, wout_ref[...], preferred_element_type=f32)
                    + bout_ref[...])


# ------------------------------- params -----------------------------------

def _lane_pad(n):
    return max(128, ((n + 127) // 128) * 128)


def init_params(key, output_dim, hid_dim, n_layers, n_heads, pf_dim, max_length):
    """Arrays-only parameter dict, pre-shaped / pre-padded for the kernel."""
    def dense(k, fan_in, fan_out):
        kw, kb = jax.random.split(k)
        lim = 1.0 / math.sqrt(fan_in)
        w = jax.random.uniform(kw, (fan_in, fan_out), jnp.float32, -lim, lim)
        b = jax.random.uniform(kb, (fan_out,), jnp.float32, -lim, lim)
        return w, b

    H, L, P = hid_dim, n_layers, pf_dim
    keys = jax.random.split(key, 3 + L)
    params = {
        "tok_emb": jax.random.normal(keys[0], (output_dim, H), jnp.float32),
        "pos_emb": jax.random.normal(keys[1], (max_length, H), jnp.float32),
    }

    Vp = _lane_pad(output_dim)
    w_out, b_out = dense(keys[2], H, output_dim)
    params["w_out"] = jnp.pad(w_out, ((0, 0), (0, Vp - output_dim)))     # [H, Vp]
    params["b_out"] = jnp.pad(b_out, ((0, Vp - output_dim),)).reshape(1, Vp)

    names = ("sa_wqkv", "sa_bqkv", "sa_wo", "sa_bo",
             "ea_wq", "ea_bq", "ea_wkv", "ea_bkv", "ea_wo", "ea_bo",
             "w1", "b1", "w2", "b2")
    stacks = {n: [] for n in names}

    for li in range(L):
        lk = jax.random.split(keys[3 + li], 10)
        # self attention: fused Wq|Wk|Wv
        wq, bq = dense(lk[0], H, H)
        wk, bk = dense(lk[1], H, H)
        wv, bv = dense(lk[2], H, H)
        wo, bo = dense(lk[3], H, H)
        stacks["sa_wqkv"].append(jnp.concatenate([wq, wk, wv], axis=1))
        stacks["sa_bqkv"].append(jnp.concatenate([bq, bk, bv], axis=0))
        stacks["sa_wo"].append(wo)
        stacks["sa_bo"].append(bo)
        # encoder attention: Wq (on trg), fused Wk|Wv (on enc)
        wq, bq = dense(lk[4], H, H)
        wk, bk = dense(lk[5], H, H)
        wv, bv = dense(lk[6], H, H)
        wo, bo = dense(lk[7], H, H)
        stacks["ea_wq"].append(wq)
        stacks["ea_bq"].append(bq)
        stacks["ea_wkv"].append(jnp.concatenate([wk, wv], axis=1))
        stacks["ea_bkv"].append(jnp.concatenate([bk, bv], axis=0))
        stacks["ea_wo"].append(wo)
        stacks["ea_bo"].append(bo)
        # positionwise feed-forward
        w1, b1 = dense(lk[8], H, P)
        w2, b2 = dense(lk[9], P, H)
        stacks["w1"].append(w1); stacks["b1"].append(b1)
        stacks["w2"].append(w2); stacks["b2"].append(b2)

    for n, vals in stacks.items():
        arr = jnp.stack(vals, axis=0)
        if arr.ndim == 2:                      # bias stacks -> [L, 1, width]
            arr = arr.reshape(L, 1, arr.shape[1])
        params[n] = arr

    # NOTE: the reference DecoderLayer shares ONE LayerNorm across all three
    # residual adds in a layer -> a single (gamma, beta) per layer.
    params["ln_g"] = jnp.ones((L, 1, H), jnp.float32)
    params["ln_b"] = jnp.zeros((L, 1, H), jnp.float32)
    return params


# ------------------------------- forward -----------------------------------

def _full_spec(shape):
    nd = len(shape)
    return pl.BlockSpec(shape, lambda b, _nd=nd: (0,) * _nd)


def decoder_forward(params, trg_tokens, enc_src, *, n_heads):
    # trg_tokens: int [B, T]; enc_src: float32 [B, S, H]
    B, T = trg_tokens.shape
    S = enc_src.shape[1]
    V, H = params["tok_emb"].shape
    L = params["sa_wqkv"].shape[0]
    P = params["w1"].shape[2]
    Vp = params["w_out"].shape[1]
    Sp = _lane_pad(S)
    d = H // n_heads

    ids = trg_tokens.astype(jnp.int32)[:, :, None]          # [B, T, 1]
    pos = params["pos_emb"][:T]                              # [T, H]

    kernel = functools.partial(
        _decoder_kernel, n_layers=L, n_heads=n_heads,
        emb_scale=float(math.sqrt(H)), inv_attn_scale=float(1.0 / math.sqrt(d)))

    in_specs = [
        pl.BlockSpec((None, T, 1), lambda b: (b, 0, 0)),     # token ids[b]
        pl.BlockSpec((T, H), lambda b: (0, 0)),              # pos_emb (resident)
        pl.BlockSpec((None, S, H), lambda b: (b, 0, 0)),     # enc_src[b]
        _full_spec((V, H)),                                  # token embedding table
        _full_spec((L, H, 3 * H)), _full_spec((L, 1, 3 * H)),   # sa_wqkv, sa_bqkv
        _full_spec((L, H, H)), _full_spec((L, 1, H)),            # sa_wo, sa_bo
        _full_spec((L, H, H)), _full_spec((L, 1, H)),            # ea_wq, ea_bq
        _full_spec((L, H, 2 * H)), _full_spec((L, 1, 2 * H)),    # ea_wkv, ea_bkv
        _full_spec((L, H, H)), _full_spec((L, 1, H)),            # ea_wo, ea_bo
        _full_spec((L, 1, H)), _full_spec((L, 1, H)),            # ln_g, ln_b
        _full_spec((L, H, P)), _full_spec((L, 1, P)),            # w1, b1
        _full_spec((L, P, H)), _full_spec((L, 1, H)),            # w2, b2
        _full_spec((H, Vp)), _full_spec((1, Vp)),                # w_out, b_out
    ]
    out_specs = [
        pl.BlockSpec((None, T, Vp), lambda b: (b, 0, 0)),          # logits[b]
        pl.BlockSpec((None, n_heads, T, Sp), lambda b: (b, 0, 0, 0)),  # attn[b]
    ]
    out_shape = [
        jax.ShapeDtypeStruct((B, T, Vp), jnp.float32),
        jax.ShapeDtypeStruct((B, n_heads, T, Sp), jnp.float32),
    ]

    # Advisory cost estimate so XLA schedules the surrounding (fused) ops well.
    flops_layer = (2 * T * H * 3 * H + 4 * T * T * H + 2 * T * H * H       # self
                   + 2 * T * H * H + 2 * S * H * 2 * H + 4 * T * S * H
                   + 2 * T * H * H                                          # cross
                   + 4 * T * H * P)                                         # ffn
    flops = B * (L * flops_layer + 2 * T * H * Vp + 2 * T * V * H)
    transcendentals = B * L * (n_heads * T * T + n_heads * T * S + 3 * T)
    args = (ids, pos, enc_src, params["tok_emb"],
            params["sa_wqkv"], params["sa_bqkv"], params["sa_wo"], params["sa_bo"],
            params["ea_wq"], params["ea_bq"], params["ea_wkv"], params["ea_bkv"],
            params["ea_wo"], params["ea_bo"],
            params["ln_g"], params["ln_b"],
            params["w1"], params["b1"], params["w2"], params["b2"],
            params["w_out"], params["b_out"])
    bytes_accessed = int(sum(a.size * a.dtype.itemsize for a in args)
                         + B * T * Vp * 4 + B * n_heads * T * Sp * 4)

    # Grid choice: one batch element per grid step, marked "parallel" so the
    # two steps shard across v7x's two TensorCores.  (Folding the batch into
    # the sublane axis would help single-TC v5e/v6e at tiny B but serializes
    # v7x; with B == num_cores the parallel grid is the better trade.)
    logits_p, attention_p = pl.pallas_call(
        kernel,
        grid=(B,),
        in_specs=in_specs,
        out_specs=out_specs,
        out_shape=out_shape,
        compiler_params=pltpu.CompilerParams(
            dimension_semantics=("parallel",),
            vmem_limit_bytes=32 * 1024 * 1024),
        cost_estimate=pl.CostEstimate(flops=flops,
                                      transcendentals=transcendentals,
                                      bytes_accessed=bytes_accessed),
    )(*args)

    # Drop the lane padding (downstream consumers may also use the padded
    # slabs directly; under jit these slices are cheap fused copies).
    output = logits_p[:, :, :V]
    attention = attention_p[:, :, :, :S]
    return output, attention


# --------------------------------- main ------------------------------------

if __name__ == "__main__":
    OUTPUT_DIM = 50   # target vocab
    HID_DIM = 32
    N_LAYERS = 2
    N_HEADS = 4
    PF_DIM = 64
    MAX_LENGTH = 70

    B, T_TRG, S_SRC = 2, 8, 10

    root = jax.random.PRNGKey(0)
    k_params, k_trg, k_enc = jax.random.split(root, 3)

    params = init_params(k_params, OUTPUT_DIM, HID_DIM, N_LAYERS, N_HEADS,
                         PF_DIM, MAX_LENGTH)

    trg = jax.random.randint(k_trg, (B, T_TRG), 0, OUTPUT_DIM, dtype=jnp.int32)
    enc_src = jax.random.normal(k_enc, (B, S_SRC, HID_DIM), jnp.float32)

    fwd = jax.jit(decoder_forward, static_argnames=("n_heads",))
    output, attention = fwd(params, trg, enc_src, n_heads=N_HEADS)
    output = jax.block_until_ready(output)
    attention = jax.block_until_ready(attention)

    assert output.shape == (B, T_TRG, OUTPUT_DIM)
    assert attention.shape == (B, N_HEADS, T_TRG, S_SRC)
    assert bool(jnp.all(jnp.isfinite(output)))
    assert bool(jnp.all(jnp.isfinite(attention)))
    # exact softmax -> cross-attention rows sum to 1
    assert bool(jnp.allclose(jnp.sum(attention, axis=-1), 1.0, atol=1e-4))

    print("KERNEL_OK")
</pallas_src>

<mosaic_0001>
module attributes {stable_mosaic.version = 11 : i64} {
  func.func @_decoder_kernel(%arg0: i32, %arg1: memref<1x8x1xi32, #tpu.memory_space<vmem>>, %arg2: memref<8x32xf32, #tpu.memory_space<vmem>>, %arg3: memref<1x10x32xf32, #tpu.memory_space<vmem>>, %arg4: memref<50x32xf32, #tpu.memory_space<vmem>>, %arg5: memref<2x32x96xf32, #tpu.memory_space<vmem>>, %arg6: memref<2x1x96xf32, #tpu.memory_space<vmem>>, %arg7: memref<2x32x32xf32, #tpu.memory_space<vmem>>, %arg8: memref<2x1x32xf32, #tpu.memory_space<vmem>>, %arg9: memref<2x32x32xf32, #tpu.memory_space<vmem>>, %arg10: memref<2x1x32xf32, #tpu.memory_space<vmem>>, %arg11: memref<2x32x64xf32, #tpu.memory_space<vmem>>, %arg12: memref<2x1x64xf32, #tpu.memory_space<vmem>>, %arg13: memref<2x32x32xf32, #tpu.memory_space<vmem>>, %arg14: memref<2x1x32xf32, #tpu.memory_space<vmem>>, %arg15: memref<2x1x32xf32, #tpu.memory_space<vmem>>, %arg16: memref<2x1x32xf32, #tpu.memory_space<vmem>>, %arg17: memref<2x32x64xf32, #tpu.memory_space<vmem>>, %arg18: memref<2x1x64xf32, #tpu.memory_space<vmem>>, %arg19: memref<2x64x32xf32, #tpu.memory_space<vmem>>, %arg20: memref<2x1x32xf32, #tpu.memory_space<vmem>>, %arg21: memref<32x128xf32, #tpu.memory_space<vmem>>, %arg22: memref<1x128xf32, #tpu.memory_space<vmem>>, %arg23: memref<1x8x128xf32, #tpu.memory_space<vmem>>, %arg24: memref<1x4x8x128xf32, #tpu.memory_space<vmem>>) attributes {dimension_semantics = [#tpu.dimension_semantics<parallel>], iteration_bounds = array<i64: 2>, scalar_prefetch = 0 : i64, scratch_operands = 0 : i64, tpu.core_type = #tpu.core_type<tc>, window_params = [{transform_indices = @transform_0, window_bounds = array<i64: 1, 8, 1>}, {pipeline_mode = #tpu.pipeline_mode<synchronous>, transform_indices = @transform_1, window_bounds = array<i64: 8, 32>}, {transform_indices = @transform_2, window_bounds = array<i64: 1, 10, 32>}, {pipeline_mode = #tpu.pipeline_mode<synchronous>, transform_indices = @transform_3, window_bounds = array<i64: 50, 32>}, {pipeline_mode = #tpu.pipeline_mode<synchronous>, transform_indices = @transform_4, window_bounds = array<i64: 2, 32, 96>}, {pipeline_mode = #tpu.pipeline_mode<synchronous>, transform_indices = @transform_5, window_bounds = array<i64: 2, 1, 96>}, {pipeline_mode = #tpu.pipeline_mode<synchronous>, transform_indices = @transform_6, window_bounds = array<i64: 2, 32, 32>}, {pipeline_mode = #tpu.pipeline_mode<synchronous>, transform_indices = @transform_7, window_bounds = array<i64: 2, 1, 32>}, {pipeline_mode = #tpu.pipeline_mode<synchronous>, transform_indices = @transform_8, window_bounds = array<i64: 2, 32, 32>}, {pipeline_mode = #tpu.pipeline_mode<synchronous>, transform_indices = @transform_9, window_bounds = array<i64: 2, 1, 32>}, {pipeline_mode = #tpu.pipeline_mode<synchronous>, transform_indices = @transform_10, window_bounds = array<i64: 2, 32, 64>}, {pipeline_mode = #tpu.pipeline_mode<synchronous>, transform_indices = @transform_11, window_bounds = array<i64: 2, 1, 64>}, {pipeline_mode = #tpu.pipeline_mode<synchronous>, transform_indices = @transform_12, window_bounds = array<i64: 2, 32, 32>}, {pipeline_mode = #tpu.pipeline_mode<synchronous>, transform_indices = @transform_13, window_bounds = array<i64: 2, 1, 32>}, {pipeline_mode = #tpu.pipeline_mode<synchronous>, transform_indices = @transform_14, window_bounds = array<i64: 2, 1, 32>}, {pipeline_mode = #tpu.pipeline_mode<synchronous>, transform_indices = @transform_15, window_bounds = array<i64: 2, 1, 32>}, {pipeline_mode = #tpu.pipeline_mode<synchronous>, transform_indices = @transform_16, window_bounds = array<i64: 2, 32, 64>}, {pipeline_mode = #tpu.pipeline_mode<synchronous>, transform_indices = @transform_17, window_bounds = array<i64: 2, 1, 64>}, {pipeline_mode = #tpu.pipeline_mode<synchronous>, transform_indices = @transform_18, window_bounds = array<i64: 2, 64, 32>}, {pipeline_mode = #tpu.pipeline_mode<synchronous>, transform_indices = @transform_19, window_bounds = array<i64: 2, 1, 32>}, {pipeline_mode = #tpu.pipeline_mode<synchronous>, transform_indices = @transform_20, window_bounds = array<i64: 32, 128>}, {pipeline_mode = #tpu.pipeline_mode<synchronous>, transform_indices = @transform_21, window_bounds = array<i64: 1, 128>}, {transform_indices = @transform_22, window_bounds = array<i64: 1, 8, 128>}, {transform_indices = @transform_23, window_bounds = array<i64: 1, 4, 8, 128>}]} {
    %c0 = arith.constant 0 : index
    %c0_0 = arith.constant 0 : index
    %c0_1 = arith.constant 0 : index
    %0 = vector.load %arg1[%c0, %c0_0, %c0_1] : memref<1x8x1xi32, #tpu.memory_space<vmem>>, vector<1x8x1xi32>
    %1 = vector.shape_cast %0 : vector<1x8x1xi32> to vector<8x1xi32>
    %2 = tpu.iota {dimensions = array<i32: 1>} : vector<8x50xi32>
    %3 = vector.broadcast %1 : vector<8x1xi32> to vector<8x50xi32>
    %4 = arith.cmpi eq, %2, %3 : vector<8x50xi32>
    %5 = arith.extui %4 : vector<8x50xi1> to vector<8x50xi32>
    %6 = arith.sitofp %5 : vector<8x50xi32> to vector<8x50xf32>
    %c0_2 = arith.constant 0 : index
    %c0_3 = arith.constant 0 : index
    %7 = vector.load %arg4[%c0_2, %c0_3] : memref<50x32xf32, #tpu.memory_space<vmem>>, vector<50x32xf32>
    %cst = arith.constant dense<0.000000e+00> : vector<8x32xf32>
    %8 = tpu.matmul %6, %7, %cst {dimension_numbers = #tpu.dot_dimension_numbers<[1], [0], [0], [1], [0, 0, 1, 1], [], []>} : vector<8x50xf32>, vector<50x32xf32>, vector<8x32xf32> -> vector<8x32xf32>
    %cst_4 = arith.constant 5.65685415 : f32
    %9 = vector.broadcast %cst_4 : f32 to vector<8x32xf32>
    %10 = arith.mulf %8, %9 : vector<8x32xf32>
    %c0_5 = arith.constant 0 : index
    %c0_6 = arith.constant 0 : index
    %11 = vector.load %arg2[%c0_5, %c0_6] : memref<8x32xf32, #tpu.memory_space<vmem>>, vector<8x32xf32>
    %12 = arith.addf %10, %11 : vector<8x32xf32>
    %c0_7 = arith.constant 0 : index
    %c0_8 = arith.constant 0 : index
    %c0_9 = arith.constant 0 : index
    %13 = vector.load %arg3[%c0_7, %c0_8, %c0_9] : memref<1x10x32xf32, #tpu.memory_space<vmem>>, vector<1x10x32xf32>
    %14 = vector.shape_cast %13 : vector<1x10x32xf32> to vector<10x32xf32>
    %15 = tpu.iota {dimensions = array<i32: 0>} : vector<8x8xi32>
    %16 = tpu.iota {dimensions = array<i32: 1>} : vector<8x8xi32>
    %17 = arith.cmpi sle, %16, %15 : vector<8x8xi32>
    %c1_i32 = arith.constant 1 : i32
    %18 = vector.broadcast %c1_i32 : i32 to vector<8x1xi32>
    %19 = arith.cmpi ne, %1, %18 : vector<8x1xi32>
    %20 = vector.broadcast %19 : vector<8x1xi1> to vector<8x8xi1>
    %21 = arith.andi %17, %20 : vector<8x8xi1>
    %c0_10 = arith.constant 0 : index
    %c0_11 = arith.constant 0 : index
    %c0_12 = arith.constant 0 : index
    %22 = vector.load %arg15[%c0_10, %c0_11, %c0_12] : memref<2x1x32xf32, #tpu.memory_space<vmem>>, vector<1x1x32xf32>
    %23 = vector.shape_cast %22 : vector<1x1x32xf32> to vector<1x32xf32>
    %c0_13 = arith.constant 0 : index
    %c0_14 = arith.constant 0 : index
    %c0_15 = arith.constant 0 : index
    %24 = vector.load %arg16[%c0_13, %c0_14, %c0_15] : memref<2x1x32xf32, #tpu.memory_space<vmem>>, vector<1x1x32xf32>
    %25 = vector.shape_cast %24 : vector<1x1x32xf32> to vector<1x32xf32>
    %c0_16 = arith.constant 0 : index
    %c0_17 = arith.constant 0 : index
    %c0_18 = arith.constant 0 : index
    %26 = vector.load %arg5[%c0_16, %c0_17, %c0_18] : memref<2x32x96xf32, #tpu.memory_space<vmem>>, vector<1x32x96xf32>
    %27 = vector.shape_cast %26 : vector<1x32x96xf32> to vector<32x96xf32>
    %cst_19 = arith.constant dense<0.000000e+00> : vector<8x96xf32>
    %28 = tpu.matmul %12, %27, %cst_19 {dimension_numbers = #tpu.dot_dimension_numbers<[1], [0], [0], [1], [0, 0, 1, 1], [], []>} : vector<8x32xf32>, vector<32x96xf32>, vector<8x96xf32> -> vector<8x96xf32>
    %c0_20 = arith.constant 0 : index
    %c0_21 = arith.constant 0 : index
    %c0_22 = arith.constant 0 : index
    %29 = vector.load %arg6[%c0_20, %c0_21, %c0_22] : memref<2x1x96xf32, #tpu.memory_space<vmem>>, vector<1x1x96xf32>
    %30 = vector.shape_cast %29 : vector<1x1x96xf32> to vector<1x96xf32>
    %31 = vector.broadcast %30 : vector<1x96xf32> to vector<8x96xf32>
    %32 = arith.addf %28, %31 : vector<8x96xf32>
    %33 = vector.extract_strided_slice %32 {offsets = [0, 0], sizes = [8, 8], strides = [1, 1]} : vector<8x96xf32> to vector<8x8xf32>
    %34 = vector.extract_strided_slice %32 {offsets = [0, 8], sizes = [8, 8], strides = [1, 1]} : vector<8x96xf32> to vector<8x8xf32>
    %35 = vector.extract_strided_slice %32 {offsets = [0, 16], sizes = [8, 8], strides = [1, 1]} : vector<8x96xf32> to vector<8x8xf32>
    %36 = vector.extract_strided_slice %32 {offsets = [0, 24], sizes = [8, 8], strides = [1, 1]} : vector<8x96xf32> to vector<8x8xf32>
    %37 = vector.shape_cast %33 : vector<8x8xf32> to vector<1x8x8xf32>
    %38 = vector.shape_cast %34 : vector<8x8xf32> to vector<1x8x8xf32>
    %39 = vector.shape_cast %35 : vector<8x8xf32> to vector<1x8x8xf32>
    %40 = vector.shape_cast %36 : vector<8x8xf32> to vector<1x8x8xf32>
    %41 = tpu.concatenate %37, %38, %39, %40 in 0 : vector<1x8x8xf32>, vector<1x8x8xf32>, vector<1x8x8xf32>, vector<1x8x8xf32> -> vector<4x8x8xf32>
    %42 = vector.extract_strided_slice %32 {offsets = [0, 32], sizes = [8, 8], strides = [1, 1]} : vector<8x96xf32> to vector<8x8xf32>
    %43 = vector.extract_strided_slice %32 {offsets = [0, 40], sizes = [8, 8], strides = [1, 1]} : vector<8x96xf32> to vector<8x8xf32>
    %44 = vector.extract_strided_slice %32 {offsets = [0, 48], sizes = [8, 8], strides = [1, 1]} : vector<8x96xf32> to vector<8x8xf32>
    %45 = vector.extract_strided_slice %32 {offsets = [0, 56], sizes = [8, 8], strides = [1, 1]} : vector<8x96xf32> to vector<8x8xf32>
    %46 = vector.shape_cast %42 : vector<8x8xf32> to vector<1x8x8xf32>
    %47 = vector.shape_cast %43 : vector<8x8xf32> to vector<1x8x8xf32>
    %48 = vector.shape_cast %44 : vector<8x8xf32> to vector<1x8x8xf32>
    %49 = vector.shape_cast %45 : vector<8x8xf32> to vector<1x8x8xf32>
    %50 = tpu.concatenate %46, %47, %48, %49 in 0 : vector<1x8x8xf32>, vector<1x8x8xf32>, vector<1x8x8xf32>, vector<1x8x8xf32> -> vector<4x8x8xf32>
    %51 = vector.extract_strided_slice %32 {offsets = [0, 64], sizes = [8, 8], strides = [1, 1]} : vector<8x96xf32> to vector<8x8xf32>
    %52 = vector.extract_strided_slice %32 {offsets = [0, 72], sizes = [8, 8], strides = [1, 1]} : vector<8x96xf32> to vector<8x8xf32>
    %53 = vector.extract_strided_slice %32 {offsets = [0, 80], sizes = [8, 8], strides = [1, 1]} : vector<8x96xf32> to vector<8x8xf32>
    %54 = vector.extract_strided_slice %32 {offsets = [0, 88], sizes = [8, 8], strides = [1, 1]} : vector<8x96xf32> to vector<8x8xf32>
    %55 = vector.shape_cast %51 : vector<8x8xf32> to vector<1x8x8xf32>
    %56 = vector.shape_cast %52 : vector<8x8xf32> to vector<1x8x8xf32>
    %57 = vector.shape_cast %53 : vector<8x8xf32> to vector<1x8x8xf32>
    %58 = vector.shape_cast %54 : vector<8x8xf32> to vector<1x8x8xf32>
    %59 = tpu.concatenate %55, %56, %57, %58 in 0 : vector<1x8x8xf32>, vector<1x8x8xf32>, vector<1x8x8xf32>, vector<1x8x8xf32> -> vector<4x8x8xf32>
    "tpu.trace_start"() <{level = 10 : i32, message = "htd,hsd->hts"}> : () -> ()
    %cst_23 = arith.constant dense<0.000000e+00> : vector<4x8x8xf32>
    %60 = tpu.matmul %41, %50, %cst_23 {dimension_numbers = #tpu.dot_dimension_numbers<[2], [2], [1], [1], [0, 0, 0, 1, 1, 1], [0], [0]>} : vector<4x8x8xf32>, vector<4x8x8xf32>, vector<4x8x8xf32> -> vector<4x8x8xf32>
    "tpu.trace_stop"() : () -> ()
    %cst_24 = arith.constant 0.353553385 : f32
    %61 = vector.broadcast %cst_24 : f32 to vector<4x8x8xf32>
    %62 = arith.mulf %60, %61 : vector<4x8x8xf32>
    %63 = vector.shape_cast %21 : vector<8x8xi1> to vector<1x8x8xi1>
    %cst_25 = arith.constant -1.000000e+10 : f32
    %64 = vector.shape_cast %63 : vector<1x8x8xi1> to vector<1x8x8xi1>
    %65 = vector.broadcast %64 : vector<1x8x8xi1> to vector<4x8x8xi1>
    %66 = vector.broadcast %cst_25 : f32 to vector<4x8x8xf32>
    %67 = arith.select %65, %62, %66 : vector<4x8x8xi1>, vector<4x8x8xf32>
    %cst_26 = arith.constant dense<0xFF800000> : vector<4x8xf32>
    %68 = vector.multi_reduction <maximumf>, %67, %cst_26 [2] : vector<4x8x8xf32> to vector<4x8xf32>
    %69 = vector.shape_cast %68 : vector<4x8xf32> to vector<4x8x1xf32>
    %70 = vector.broadcast %69 : vector<4x8x1xf32> to vector<4x8x8xf32>
    %71 = arith.subf %67, %70 : vector<4x8x8xf32>
    %72 = math.exp %71 : vector<4x8x8xf32>
    %cst_27 = arith.constant dense<0.000000e+00> : vector<4x8xf32>
    %73 = vector.multi_reduction <add>, %72, %cst_27 [2] : vector<4x8x8xf32> to vector<4x8xf32>
    %74 = vector.shape_cast %73 : vector<4x8xf32> to vector<4x8x1xf32>
    %75 = vector.broadcast %74 : vector<4x8x1xf32> to vector<4x8x8xf32>
    %76 = arith.divf %72, %75 : vector<4x8x8xf32>
    "tpu.trace_start"() <{level = 10 : i32, message = "hts,hsd->htd"}> : () -> ()
    %cst_28 = arith.constant dense<0.000000e+00> : vector<4x8x8xf32>
    %77 = tpu.matmul %76, %59, %cst_28 {dimension_numbers = #tpu.dot_dimension_numbers<[2], [1], [1], [2], [0, 0, 0, 1, 1, 2], [0], [0]>} : vector<4x8x8xf32>, vector<4x8x8xf32>, vector<4x8x8xf32> -> vector<4x8x8xf32>
    "tpu.trace_stop"() : () -> ()
    %c0_29 = arith.constant 0 : index
    %c0_30 = arith.constant 0 : index
    %c0_31 = arith.constant 0 : index
    %78 = vector.load %arg7[%c0_29, %c0_30, %c0_31] : memref<2x32x32xf32, #tpu.memory_space<vmem>>, vector<1x32x32xf32>
    %79 = vector.shape_cast %78 : vector<1x32x32xf32> to vector<32x32xf32>
    %c0_32 = arith.constant 0 : index
    %c0_33 = arith.constant 0 : index
    %c0_34 = arith.constant 0 : index
    %80 = vector.load %arg8[%c0_32, %c0_33, %c0_34] : memref<2x1x32xf32, #tpu.memory_space<vmem>>, vector<1x1x32xf32>
    %81 = vector.shape_cast %80 : vector<1x1x32xf32> to vector<1x32xf32>
    %82 = vector.extract_strided_slice %77 {offsets = [0, 0, 0], sizes = [1, 8, 8], strides = [1, 1, 1]} : vector<4x8x8xf32> to vector<1x8x8xf32>
    %83 = vector.shape_cast %82 : vector<1x8x8xf32> to vector<8x8xf32>
    %84 = vector.extract_strided_slice %79 {offsets = [0, 0], sizes = [8, 32], strides = [1, 1]} : vector<32x32xf32> to vector<8x32xf32>
    %cst_35 = arith.constant dense<0.000000e+00> : vector<8x32xf32>
    %85 = tpu.matmul %83, %84, %cst_35 {dimension_numbers = #tpu.dot_dimension_numbers<[1], [0], [0], [1], [0, 0, 1, 1], [], []>} : vector<8x8xf32>, vector<8x32xf32>, vector<8x32xf32> -> vector<8x32xf32>
    %86 = vector.extract_strided_slice %77 {offsets = [1, 0, 0], sizes = [1, 8, 8], strides = [1, 1, 1]} : vector<4x8x8xf32> to vector<1x8x8xf32>
    %87 = vector.shape_cast %86 : vector<1x8x8xf32> to vector<8x8xf32>
    %88 = vector.extract_strided_slice %79 {offsets = [8, 0], sizes = [8, 32], strides = [1, 1]} : vector<32x32xf32> to vector<8x32xf32>
    %cst_36 = arith.constant dense<0.000000e+00> : vector<8x32xf32>
    %89 = tpu.matmul %87, %88, %cst_36 {dimension_numbers = #tpu.dot_dimension_numbers<[1], [0], [0], [1], [0, 0, 1, 1], [], []>} : vector<8x8xf32>, vector<8x32xf32>, vector<8x32xf32> -> vector<8x32xf32>
    %90 = arith.addf %85, %89 : vector<8x32xf32>
    %91 = vector.extract_strided_slice %77 {offsets = [2, 0, 0], sizes = [1, 8, 8], strides = [1, 1, 1]} : vector<4x8x8xf32> to vector<1x8x8xf32>
    %92 = vector.shape_cast %91 : vector<1x8x8xf32> to vector<8x8xf32>
    %93 = vector.extract_strided_slice %79 {offsets = [16, 0], sizes = [8, 32], strides = [1, 1]} : vector<32x32xf32> to vector<8x32xf32>
    %cst_37 = arith.constant dense<0.000000e+00> : vector<8x32xf32>
    %94 = tpu.matmul %92, %93, %cst_37 {dimension_numbers = #tpu.dot_dimension_numbers<[1], [0], [0], [1], [0, 0, 1, 1], [], []>} : vector<8x8xf32>, vector<8x32xf32>, vector<8x32xf32> -> vector<8x32xf32>
    %95 = arith.addf %90, %94 : vector<8x32xf32>
    %96 = vector.extract_strided_slice %77 {offsets = [3, 0, 0], sizes = [1, 8, 8], strides = [1, 1, 1]} : vector<4x8x8xf32> to vector<1x8x8xf32>
    %97 = vector.shape_cast %96 : vector<1x8x8xf32> to vector<8x8xf32>
    %98 = vector.extract_strided_slice %79 {offsets = [24, 0], sizes = [8, 32], strides = [1, 1]} : vector<32x32xf32> to vector<8x32xf32>
    %cst_38 = arith.constant dense<0.000000e+00> : vector<8x32xf32>
    %99 = tpu.matmul %97, %98, %cst_38 {dimension_numbers = #tpu.dot_dimension_numbers<[1], [0], [0], [1], [0, 0, 1, 1], [], []>} : vector<8x8xf32>, vector<8x32xf32>, vector<8x32xf32> -> vector<8x32xf32>
    %100 = arith.addf %95, %99 : vector<8x32xf32>
    %101 = vector.broadcast %81 : vector<1x32xf32> to vector<8x32xf32>
    %102 = arith.addf %100, %101 : vector<8x32xf32>
    %103 = arith.addf %12, %102 : vector<8x32xf32>
    %cst_39 = arith.constant dense<0.000000e+00> : vector<8xf32>
    %104 = vector.multi_reduction <add>, %103, %cst_39 [1] : vector<8x32xf32> to vector<8xf32>
    %105 = vector.shape_cast %104 : vector<8xf32> to vector<8x1xf32>
    %cst_40 = arith.constant 3.200000e+01 : f32
    %106 = vector.broadcast %cst_40 : f32 to vector<8x1xf32>
    %107 = arith.divf %105, %106 : vector<8x1xf32>
    %108 = arith.mulf %103, %103 : vector<8x32xf32>
    %cst_41 = arith.constant dense<0.000000e+00> : vector<8xf32>
    %109 = vector.multi_reduction <add>, %108, %cst_41 [1] : vector<8x32xf32> to vector<8xf32>
    %110 = vector.shape_cast %109 : vector<8xf32> to vector<8x1xf32>
    %cst_42 = arith.constant 3.200000e+01 : f32
    %111 = vector.broadcast %cst_42 : f32 to vector<8x1xf32>
    %112 = arith.divf %110, %111 : vector<8x1xf32>
    %113 = arith.mulf %107, %107 : vector<8x1xf32>
    %114 = arith.subf %112, %113 : vector<8x1xf32>
    %cst_43 = arith.constant 0.000000e+00 : f32
    %115 = vector.broadcast %cst_43 : f32 to vector<8x1xf32>
    %116 = arith.maximumf %114, %115 : vector<8x1xf32>
    %117 = vector.broadcast %107 : vector<8x1xf32> to vector<8x32xf32>
    %118 = arith.subf %103, %117 : vector<8x32xf32>
    %cst_44 = arith.constant 9.99999974E-6 : f32
    %119 = vector.broadcast %cst_44 : f32 to vector<8x1xf32>
    %120 = arith.addf %116, %119 : vector<8x1xf32>
    %121 = math.rsqrt %120 : vector<8x1xf32>
    %122 = vector.broadcast %121 : vector<8x1xf32> to vector<8x32xf32>
    %123 = arith.mulf %118, %122 : vector<8x32xf32>
    %124 = vector.broadcast %23 : vector<1x32xf32> to vector<8x32xf32>
    %125 = arith.mulf %123, %124 : vector<8x32xf32>
    %126 = vector.broadcast %25 : vector<1x32xf32> to vector<8x32xf32>
    %127 = arith.addf %125, %126 : vector<8x32xf32>
    %c0_45 = arith.constant 0 : index
    %c0_46 = arith.constant 0 : index
    %c0_47 = arith.constant 0 : index
    %128 = vector.load %arg9[%c0_45, %c0_46, %c0_47] : memref<2x32x32xf32, #tpu.memory_space<vmem>>, vector<1x32x32xf32>
    %129 = vector.shape_cast %128 : vector<1x32x32xf32> to vector<32x32xf32>
    %cst_48 = arith.constant dense<0.000000e+00> : vector<8x32xf32>
    %130 = tpu.matmul %127, %129, %cst_48 {dimension_numbers = #tpu.dot_dimension_numbers<[1], [0], [0], [1], [0, 0, 1, 1], [], []>} : vector<8x32xf32>, vector<32x32xf32>, vector<8x32xf32> -> vector<8x32xf32>
    %c0_49 = arith.constant 0 : index
    %c0_50 = arith.constant 0 : index
    %c0_51 = arith.constant 0 : index
    %131 = vector.load %arg10[%c0_49, %c0_50, %c0_51] : memref<2x1x32xf32, #tpu.memory_space<vmem>>, vector<1x1x32xf32>
    %132 = vector.shape_cast %131 : vector<1x1x32xf32> to vector<1x32xf32>
    %133 = vector.broadcast %132 : vector<1x32xf32> to vector<8x32xf32>
    %134 = arith.addf %130, %133 : vector<8x32xf32>
    %c0_52 = arith.constant 0 : index
    %c0_53 = arith.constant 0 : index
    %c0_54 = arith.constant 0 : index
    %135 = vector.load %arg11[%c0_52, %c0_53, %c0_54] : memref<2x32x64xf32, #tpu.memory_space<vmem>>, vector<1x32x64xf32>
    %136 = vector.shape_cast %135 : vector<1x32x64xf32> to vector<32x64xf32>
    %cst_55 = arith.constant dense<0.000000e+00> : vector<10x64xf32>
    %137 = tpu.matmul %14, %136, %cst_55 {dimension_numbers = #tpu.dot_dimension_numbers<[1], [0], [0], [1], [0, 0, 1, 1], [], []>} : vector<10x32xf32>, vector<32x64xf32>, vector<10x64xf32> -> vector<10x64xf32>
    %c0_56 = arith.constant 0 : index
    %c0_57 = arith.constant 0 : index
    %c0_58 = arith.constant 0 : index
    %138 = vector.load %arg12[%c0_56, %c0_57, %c0_58] : memref<2x1x64xf32, #tpu.memory_space<vmem>>, vector<1x1x64xf32>
    %139 = vector.shape_cast %138 : vector<1x1x64xf32> to vector<1x64xf32>
    %140 = vector.broadcast %139 : vector<1x64xf32> to vector<10x64xf32>
    %141 = arith.addf %137, %140 : vector<10x64xf32>
    %142 = vector.extract_strided_slice %134 {offsets = [0, 0], sizes = [8, 8], strides = [1, 1]} : vector<8x32xf32> to vector<8x8xf32>
    %143 = vector.extract_strided_slice %134 {offsets = [0, 8], sizes = [8, 8], strides = [1, 1]} : vector<8x32xf32> to vector<8x8xf32>
    %144 = vector.extract_strided_slice %134 {offsets = [0, 16], sizes = [8, 8], strides = [1, 1]} : vector<8x32xf32> to vector<8x8xf32>
    %145 = vector.extract_strided_slice %134 {offsets = [0, 24], sizes = [8, 8], strides = [1, 1]} : vector<8x32xf32> to vector<8x8xf32>
    %146 = vector.shape_cast %142 : vector<8x8xf32> to vector<1x8x8xf32>
    %147 = vector.shape_cast %143 : vector<8x8xf32> to vector<1x8x8xf32>
    %148 = vector.shape_cast %144 : vector<8x8xf32> to vector<1x8x8xf32>
    %149 = vector.shape_cast %145 : vector<8x8xf32> to vector<1x8x8xf32>
    %150 = tpu.concatenate %146, %147, %148, %149 in 0 : vector<1x8x8xf32>, vector<1x8x8xf32>, vector<1x8x8xf32>, vector<1x8x8xf32> -> vector<4x8x8xf32>
    %151 = vector.extract_strided_slice %141 {offsets = [0, 0], sizes = [10, 8], strides = [1, 1]} : vector<10x64xf32> to vector<10x8xf32>
    %152 = vector.extract_strided_slice %141 {offsets = [0, 8], sizes = [10, 8], strides = [1, 1]} : vector<10x64xf32> to vector<10x8xf32>
    %153 = vector.extract_strided_slice %141 {offsets = [0, 16], sizes = [10, 8], strides = [1, 1]} : vector<10x64xf32> to vector<10x8xf32>
    %154 = vector.extract_strided_slice %141 {offsets = [0, 24], sizes = [10, 8], strides = [1, 1]} : vector<10x64xf32> to vector<10x8xf32>
    %155 = vector.shape_cast %151 : vector<10x8xf32> to vector<1x10x8xf32>
    %156 = vector.shape_cast %152 : vector<10x8xf32> to vector<1x10x8xf32>
    %157 = vector.shape_cast %153 : vector<10x8xf32> to vector<1x10x8xf32>
    %158 = vector.shape_cast %154 : vector<10x8xf32> to vector<1x10x8xf32>
    %159 = tpu.concatenate %155, %156, %157, %158 in 0 : vector<1x10x8xf32>, vector<1x10x8xf32>, vector<1x10x8xf32>, vector<1x10x8xf32> -> vector<4x10x8xf32>
    %160 = vector.extract_strided_slice %141 {offsets = [0, 32], sizes = [10, 8], strides = [1, 1]} : vector<10x64xf32> to vector<10x8xf32>
    %161 = vector.extract_strided_slice %141 {offsets = [0, 40], sizes = [10, 8], strides = [1, 1]} : vector<10x64xf32> to vector<10x8xf32>
    %162 = vector.extract_strided_slice %141 {offsets = [0, 48], sizes = [10, 8], strides = [1, 1]} : vector<10x64xf32> to vector<10x8xf32>
    %163 = vector.extract_strided_slice %141 {offsets = [0, 56], sizes = [10, 8], strides = [1, 1]} : vector<10x64xf32> to vector<10x8xf32>
    %164 = vector.shape_cast %160 : vector<10x8xf32> to vector<1x10x8xf32>
    %165 = vector.shape_cast %161 : vector<10x8xf32> to vector<1x10x8xf32>
    %166 = vector.shape_cast %162 : vector<10x8xf32> to vector<1x10x8xf32>
    %167 = vector.shape_cast %163 : vector<10x8xf32> to vector<1x10x8xf32>
    %168 = tpu.concatenate %164, %165, %166, %167 in 0 : vector<1x10x8xf32>, vector<1x10x8xf32>, vector<1x10x8xf32>, vector<1x10x8xf32> -> vector<4x10x8xf32>
    "tpu.trace_start"() <{level = 10 : i32, message = "htd,hsd->hts"}> : () -> ()
    %cst_59 = arith.constant dense<0.000000e+00> : vector<4x8x10xf32>
    %169 = tpu.matmul %150, %159, %cst_59 {dimension_numbers = #tpu.dot_dimension_numbers<[2], [2], [1], [1], [0, 0, 0, 1, 1, 1], [0], [0]>} : vector<4x8x8xf32>, vector<4x10x8xf32>, vector<4x8x10xf32> -> vector<4x8x10xf32>
    "tpu.trace_stop"() : () -> ()
    %cst_60 = arith.constant 0.353553385 : f32
    %170 = vector.broadcast %cst_60 : f32 to vector<4x8x10xf32>
    %171 = arith.mulf %169, %170 : vector<4x8x10xf32>
    %cst_61 = arith.constant dense<0xFF800000> : vector<4x8xf32>
    %172 = vector.multi_reduction <maximumf>, %171, %cst_61 [2] : vector<4x8x10xf32> to vector<4x8xf32>
    %173 = vector.shape_cast %172 : vector<4x8xf32> to vector<4x8x1xf32>
    %174 = vector.broadcast %173 : vector<4x8x1xf32> to vector<4x8x10xf32>
    %175 = arith.subf %171, %174 : vector<4x8x10xf32>
    %176 = math.exp %175 : vector<4x8x10xf32>
    %cst_62 = arith.constant dense<0.000000e+00> : vector<4x8xf32>
    %177 = vector.multi_reduction <add>, %176, %cst_62 [2] : vector<4x8x10xf32> to vector<4x8xf32>
    %178 = vector.shape_cast %177 : vector<4x8xf32> to vector<4x8x1xf32>
    %179 = vector.broadcast %178 : vector<4x8x1xf32> to vector<4x8x10xf32>
    %180 = arith.divf %176, %179 : vector<4x8x10xf32>
    "tpu.trace_start"() <{level = 10 : i32, message = "hts,hsd->htd"}> : () -> ()
    %cst_63 = arith.constant dense<0.000000e+00> : vector<4x8x8xf32>
    %181 = tpu.matmul %180, %168, %cst_63 {dimension_numbers = #tpu.dot_dimension_numbers<[2], [1], [1], [2], [0, 0, 0, 1, 1, 2], [0], [0]>} : vector<4x8x10xf32>, vector<4x10x8xf32>, vector<4x8x8xf32> -> vector<4x8x8xf32>
    "tpu.trace_stop"() : () -> ()
    %c0_64 = arith.constant 0 : index
    %c0_65 = arith.constant 0 : index
    %c0_66 = arith.constant 0 : index
    %182 = vector.load %arg13[%c0_64, %c0_65, %c0_66] : memref<2x32x32xf32, #tpu.memory_space<vmem>>, vector<1x32x32xf32>
    %183 = vector.shape_cast %182 : vector<1x32x32xf32> to vector<32x32xf32>
    %c0_67 = arith.constant 0 : index
    %c0_68 = arith.constant 0 : index
    %c0_69 = arith.constant 0 : index
    %184 = vector.load %arg14[%c0_67, %c0_68, %c0_69] : memref<2x1x32xf32, #tpu.memory_space<vmem>>, vector<1x1x32xf32>
    %185 = vector.shape_cast %184 : vector<1x1x32xf32> to vector<1x32xf32>
    %186 = vector.extract_strided_slice %181 {offsets = [0, 0, 0], sizes = [1, 8, 8], strides = [1, 1, 1]} : vector<4x8x8xf32> to vector<1x8x8xf32>
    %187 = vector.shape_cast %186 : vector<1x8x8xf32> to vector<8x8xf32>
    %188 = vector.extract_strided_slice %183 {offsets = [0, 0], sizes = [8, 32], strides = [1, 1]} : vector<32x32xf32> to vector<8x32xf32>
    %cst_70 = arith.constant dense<0.000000e+00> : vector<8x32xf32>
    %189 = tpu.matmul %187, %188, %cst_70 {dimension_numbers = #tpu.dot_dimension_numbers<[1], [0], [0], [1], [0, 0, 1, 1], [], []>} : vector<8x8xf32>, vector<8x32xf32>, vector<8x32xf32> -> vector<8x32xf32>
    %190 = vector.extract_strided_slice %181 {offsets = [1, 0, 0], sizes = [1, 8, 8], strides = [1, 1, 1]} : vector<4x8x8xf32> to vector<1x8x8xf32>
    %191 = vector.shape_cast %190 : vector<1x8x8xf32> to vector<8x8xf32>
    %192 = vector.extract_strided_slice %183 {offsets = [8, 0], sizes = [8, 32], strides = [1, 1]} : vector<32x32xf32> to vector<8x32xf32>
    %cst_71 = arith.constant dense<0.000000e+00> : vector<8x32xf32>
    %193 = tpu.matmul %191, %192, %cst_71 {dimension_numbers = #tpu.dot_dimension_numbers<[1], [0], [0], [1], [0, 0, 1, 1], [], []>} : vector<8x8xf32>, vector<8x32xf32>, vector<8x32xf32> -> vector<8x32xf32>
    %194 = arith.addf %189, %193 : vector<8x32xf32>
    %195 = vector.extract_strided_slice %181 {offsets = [2, 0, 0], sizes = [1, 8, 8], strides = [1, 1, 1]} : vector<4x8x8xf32> to vector<1x8x8xf32>
    %196 = vector.shape_cast %195 : vector<1x8x8xf32> to vector<8x8xf32>
    %197 = vector.extract_strided_slice %183 {offsets = [16, 0], sizes = [8, 32], strides = [1, 1]} : vector<32x32xf32> to vector<8x32xf32>
    %cst_72 = arith.constant dense<0.000000e+00> : vector<8x32xf32>
    %198 = tpu.matmul %196, %197, %cst_72 {dimension_numbers = #tpu.dot_dimension_numbers<[1], [0], [0], [1], [0, 0, 1, 1], [], []>} : vector<8x8xf32>, vector<8x32xf32>, vector<8x32xf32> -> vector<8x32xf32>
    %199 = arith.addf %194, %198 : vector<8x32xf32>
    %200 = vector.extract_strided_slice %181 {offsets = [3, 0, 0], sizes = [1, 8, 8], strides = [1, 1, 1]} : vector<4x8x8xf32> to vector<1x8x8xf32>
    %201 = vector.shape_cast %200 : vector<1x8x8xf32> to vector<8x8xf32>
    %202 = vector.extract_strided_slice %183 {offsets = [24, 0], sizes = [8, 32], strides = [1, 1]} : vector<32x32xf32> to vector<8x32xf32>
    %cst_73 = arith.constant dense<0.000000e+00> : vector<8x32xf32>
    %203 = tpu.matmul %201, %202, %cst_73 {dimension_numbers = #tpu.dot_dimension_numbers<[1], [0], [0], [1], [0, 0, 1, 1], [], []>} : vector<8x8xf32>, vector<8x32xf32>, vector<8x32xf32> -> vector<8x32xf32>
    %204 = arith.addf %199, %203 : vector<8x32xf32>
    %205 = vector.broadcast %185 : vector<1x32xf32> to vector<8x32xf32>
    %206 = arith.addf %204, %205 : vector<8x32xf32>
    %207 = arith.addf %127, %206 : vector<8x32xf32>
    %cst_74 = arith.constant dense<0.000000e+00> : vector<8xf32>
    %208 = vector.multi_reduction <add>, %207, %cst_74 [1] : vector<8x32xf32> to vector<8xf32>
    %209 = vector.shape_cast %208 : vector<8xf32> to vector<8x1xf32>
    %cst_75 = arith.constant 3.200000e+01 : f32
    %210 = vector.broadcast %cst_75 : f32 to vector<8x1xf32>
    %211 = arith.divf %209, %210 : vector<8x1xf32>
    %212 = arith.mulf %207, %207 : vector<8x32xf32>
    %cst_76 = arith.constant dense<0.000000e+00> : vector<8xf32>
    %213 = vector.multi_reduction <add>, %212, %cst_76 [1] : vector<8x32xf32> to vector<8xf32>
    %214 = vector.shape_cast %213 : vector<8xf32> to vector<8x1xf32>
    %cst_77 = arith.constant 3.200000e+01 : f32
    %215 = vector.broadcast %cst_77 : f32 to vector<8x1xf32>
    %216 = arith.divf %214, %215 : vector<8x1xf32>
    %217 = arith.mulf %211, %211 : vector<8x1xf32>
    %218 = arith.subf %216, %217 : vector<8x1xf32>
    %cst_78 = arith.constant 0.000000e+00 : f32
    %219 = vector.broadcast %cst_78 : f32 to vector<8x1xf32>
    %220 = arith.maximumf %218, %219 : vector<8x1xf32>
    %221 = vector.broadcast %211 : vector<8x1xf32> to vector<8x32xf32>
    %222 = arith.subf %207, %221 : vector<8x32xf32>
    %cst_79 = arith.constant 9.99999974E-6 : f32
    %223 = vector.broadcast %cst_79 : f32 to vector<8x1xf32>
    %224 = arith.addf %220, %223 : vector<8x1xf32>
    %225 = math.rsqrt %224 : vector<8x1xf32>
    %226 = vector.broadcast %225 : vector<8x1xf32> to vector<8x32xf32>
    %227 = arith.mulf %222, %226 : vector<8x32xf32>
    %228 = vector.broadcast %23 : vector<1x32xf32> to vector<8x32xf32>
    %229 = arith.mulf %227, %228 : vector<8x32xf32>
    %230 = vector.broadcast %25 : vector<1x32xf32> to vector<8x32xf32>
    %231 = arith.addf %229, %230 : vector<8x32xf32>
    %c0_80 = arith.constant 0 : index
    %c0_81 = arith.constant 0 : index
    %c0_82 = arith.constant 0 : index
    %232 = vector.load %arg17[%c0_80, %c0_81, %c0_82] : memref<2x32x64xf32, #tpu.memory_space<vmem>>, vector<1x32x64xf32>
    %233 = vector.shape_cast %232 : vector<1x32x64xf32> to vector<32x64xf32>
    %cst_83 = arith.constant dense<0.000000e+00> : vector<8x64xf32>
    %234 = tpu.matmul %231, %233, %cst_83 {dimension_numbers = #tpu.dot_dimension_numbers<[1], [0], [0], [1], [0, 0, 1, 1], [], []>} : vector<8x32xf32>, vector<32x64xf32>, vector<8x64xf32> -> vector<8x64xf32>
    %c0_84 = arith.constant 0 : index
    %c0_85 = arith.constant 0 : index
    %c0_86 = arith.constant 0 : index
    %235 = vector.load %arg18[%c0_84, %c0_85, %c0_86] : memref<2x1x64xf32, #tpu.memory_space<vmem>>, vector<1x1x64xf32>
    %236 = vector.shape_cast %235 : vector<1x1x64xf32> to vector<1x64xf32>
    %237 = vector.broadcast %236 : vector<1x64xf32> to vector<8x64xf32>
    %238 = arith.addf %234, %237 : vector<8x64xf32>
    %cst_87 = arith.constant 0.000000e+00 : f32
    %239 = vector.broadcast %cst_87 : f32 to vector<8x64xf32>
    %240 = arith.maximumf %238, %239 : vector<8x64xf32>
    %c0_88 = arith.constant 0 : index
    %c0_89 = arith.constant 0 : index
    %c0_90 = arith.constant 0 : index
    %241 = vector.load %arg19[%c0_88, %c0_89, %c0_90] : memref<2x64x32xf32, #tpu.memory_space<vmem>>, vector<1x64x32xf32>
    %242 = vector.shape_cast %241 : vector<1x64x32xf32> to vector<64x32xf32>
    %cst_91 = arith.constant dense<0.000000e+00> : vector<8x32xf32>
    %243 = tpu.matmul %240, %242, %cst_91 {dimension_numbers = #tpu.dot_dimension_numbers<[1], [0], [0], [1], [0, 0, 1, 1], [], []>} : vector<8x64xf32>, vector<64x32xf32>, vector<8x32xf32> -> vector<8x32xf32>
    %c0_92 = arith.constant 0 : index
    %c0_93 = arith.constant 0 : index
    %c0_94 = arith.constant 0 : index
    %244 = vector.load %arg20[%c0_92, %c0_93, %c0_94] : memref<2x1x32xf32, #tpu.memory_space<vmem>>, vector<1x1x32xf32>
    %245 = vector.shape_cast %244 : vector<1x1x32xf32> to vector<1x32xf32>
    %246 = vector.broadcast %245 : vector<1x32xf32> to vector<8x32xf32>
    %247 = arith.addf %243, %246 : vector<8x32xf32>
    %248 = arith.addf %231, %247 : vector<8x32xf32>
    %cst_95 = arith.constant dense<0.000000e+00> : vector<8xf32>
    %249 = vector.multi_reduction <add>, %248, %cst_95 [1] : vector<8x32xf32> to vector<8xf32>
    %250 = vector.shape_cast %249 : vector<8xf32> to vector<8x1xf32>
    %cst_96 = arith.constant 3.200000e+01 : f32
    %251 = vector.broadcast %cst_96 : f32 to vector<8x1xf32>
    %252 = arith.divf %250, %251 : vector<8x1xf32>
    %253 = arith.mulf %248, %248 : vector<8x32xf32>
    %cst_97 = arith.constant dense<0.000000e+00> : vector<8xf32>
    %254 = vector.multi_reduction <add>, %253, %cst_97 [1] : vector<8x32xf32> to vector<8xf32>
    %255 = vector.shape_cast %254 : vector<8xf32> to vector<8x1xf32>
    %cst_98 = arith.constant 3.200000e+01 : f32
    %256 = vector.broadcast %cst_98 : f32 to vector<8x1xf32>
    %257 = arith.divf %255, %256 : vector<8x1xf32>
    %258 = arith.mulf %252, %252 : vector<8x1xf32>
    %259 = arith.subf %257, %258 : vector<8x1xf32>
    %cst_99 = arith.constant 0.000000e+00 : f32
    %260 = vector.broadcast %cst_99 : f32 to vector<8x1xf32>
    %261 = arith.maximumf %259, %260 : vector<8x1xf32>
    %262 = vector.broadcast %252 : vector<8x1xf32> to vector<8x32xf32>
    %263 = arith.subf %248, %262 : vector<8x32xf32>
    %cst_100 = arith.constant 9.99999974E-6 : f32
    %264 = vector.broadcast %cst_100 : f32 to vector<8x1xf32>
    %265 = arith.addf %261, %264 : vector<8x1xf32>
    %266 = math.rsqrt %265 : vector<8x1xf32>
    %267 = vector.broadcast %266 : vector<8x1xf32> to vector<8x32xf32>
    %268 = arith.mulf %263, %267 : vector<8x32xf32>
    %269 = vector.broadcast %23 : vector<1x32xf32> to vector<8x32xf32>
    %270 = arith.mulf %268, %269 : vector<8x32xf32>
    %271 = vector.broadcast %25 : vector<1x32xf32> to vector<8x32xf32>
    %272 = arith.addf %270, %271 : vector<8x32xf32>
    %c1 = arith.constant 1 : index
    %c0_101 = arith.constant 0 : index
    %c0_102 = arith.constant 0 : index
    %273 = vector.load %arg15[%c1, %c0_101, %c0_102] : memref<2x1x32xf32, #tpu.memory_space<vmem>>, vector<1x1x32xf32>
    %274 = vector.shape_cast %273 : vector<1x1x32xf32> to vector<1x32xf32>
    %c1_103 = arith.constant 1 : index
    %c0_104 = arith.constant 0 : index
    %c0_105 = arith.constant 0 : index
    %275 = vector.load %arg16[%c1_103, %c0_104, %c0_105] : memref<2x1x32xf32, #tpu.memory_space<vmem>>, vector<1x1x32xf32>
    %276 = vector.shape_cast %275 : vector<1x1x32xf32> to vector<1x32xf32>
    %c1_106 = arith.constant 1 : index
    %c0_107 = arith.constant 0 : index
    %c0_108 = arith.constant 0 : index
    %277 = vector.load %arg5[%c1_106, %c0_107, %c0_108] : memref<2x32x96xf32, #tpu.memory_space<vmem>>, vector<1x32x96xf32>
    %278 = vector.shape_cast %277 : vector<1x32x96xf32> to vector<32x96xf32>
    %cst_109 = arith.constant dense<0.000000e+00> : vector<8x96xf32>
    %279 = tpu.matmul %272, %278, %cst_109 {dimension_numbers = #tpu.dot_dimension_numbers<[1], [0], [0], [1], [0, 0, 1, 1], [], []>} : vector<8x32xf32>, vector<32x96xf32>, vector<8x96xf32> -> vector<8x96xf32>
    %c1_110 = arith.constant 1 : index
    %c0_111 = arith.constant 0 : index
    %c0_112 = arith.constant 0 : index
    %280 = vector.load %arg6[%c1_110, %c0_111, %c0_112] : memref<2x1x96xf32, #tpu.memory_space<vmem>>, vector<1x1x96xf32>
    %281 = vector.shape_cast %280 : vector<1x1x96xf32> to vector<1x96xf32>
    %282 = vector.broadcast %281 : vector<1x96xf32> to vector<8x96xf32>
    %283 = arith.addf %279, %282 : vector<8x96xf32>
    %284 = vector.extract_strided_slice %283 {offsets = [0, 0], sizes = [8, 8], strides = [1, 1]} : vector<8x96xf32> to vector<8x8xf32>
    %285 = vector.extract_strided_slice %283 {offsets = [0, 8], sizes = [8, 8], strides = [1, 1]} : vector<8x96xf32> to vector<8x8xf32>
    %286 = vector.extract_strided_slice %283 {offsets = [0, 16], sizes = [8, 8], strides = [1, 1]} : vector<8x96xf32> to vector<8x8xf32>
    %287 = vector.extract_strided_slice %283 {offsets = [0, 24], sizes = [8, 8], strides = [1, 1]} : vector<8x96xf32> to vector<8x8xf32>
    %288 = vector.shape_cast %284 : vector<8x8xf32> to vector<1x8x8xf32>
    %289 = vector.shape_cast %285 : vector<8x8xf32> to vector<1x8x8xf32>
    %290 = vector.shape_cast %286 : vector<8x8xf32> to vector<1x8x8xf32>
    %291 = vector.shape_cast %287 : vector<8x8xf32> to vector<1x8x8xf32>
    %292 = tpu.concatenate %288, %289, %290, %291 in 0 : vector<1x8x8xf32>, vector<1x8x8xf32>, vector<1x8x8xf32>, vector<1x8x8xf32> -> vector<4x8x8xf32>
    %293 = vector.extract_strided_slice %283 {offsets = [0, 32], sizes = [8, 8], strides = [1, 1]} : vector<8x96xf32> to vector<8x8xf32>
    %294 = vector.extract_strided_slice %283 {offsets = [0, 40], sizes = [8, 8], strides = [1, 1]} : vector<8x96xf32> to vector<8x8xf32>
    %295 = vector.extract_strided_slice %283 {offsets = [0, 48], sizes = [8, 8], strides = [1, 1]} : vector<8x96xf32> to vector<8x8xf32>
    %296 = vector.extract_strided_slice %283 {offsets = [0, 56], sizes = [8, 8], strides = [1, 1]} : vector<8x96xf32> to vector<8x8xf32>
    %297 = vector.shape_cast %293 : vector<8x8xf32> to vector<1x8x8xf32>
    %298 = vector.shape_cast %294 : vector<8x8xf32> to vector<1x8x8xf32>
    %299 = vector.shape_cast %295 : vector<8x8xf32> to vector<1x8x8xf32>
    %300 = vector.shape_cast %296 : vector<8x8xf32> to vector<1x8x8xf32>
    %301 = tpu.concatenate %297, %298, %299, %300 in 0 : vector<1x8x8xf32>, vector<1x8x8xf32>, vector<1x8x8xf32>, vector<1x8x8xf32> -> vector<4x8x8xf32>
    %302 = vector.extract_strided_slice %283 {offsets = [0, 64], sizes = [8, 8], strides = [1, 1]} : vector<8x96xf32> to vector<8x8xf32>
    %303 = vector.extract_strided_slice %283 {offsets = [0, 72], sizes = [8, 8], strides = [1, 1]} : vector<8x96xf32> to vector<8x8xf32>
    %304 = vector.extract_strided_slice %283 {offsets = [0, 80], sizes = [8, 8], strides = [1, 1]} : vector<8x96xf32> to vector<8x8xf32>
    %305 = vector.extract_strided_slice %283 {offsets = [0, 88], sizes = [8, 8], strides = [1, 1]} : vector<8x96xf32> to vector<8x8xf32>
    %306 = vector.shape_cast %302 : vector<8x8xf32> to vector<1x8x8xf32>
    %307 = vector.shape_cast %303 : vector<8x8xf32> to vector<1x8x8xf32>
    %308 = vector.shape_cast %304 : vector<8x8xf32> to vector<1x8x8xf32>
    %309 = vector.shape_cast %305 : vector<8x8xf32> to vector<1x8x8xf32>
    %310 = tpu.concatenate %306, %307, %308, %309 in 0 : vector<1x8x8xf32>, vector<1x8x8xf32>, vector<1x8x8xf32>, vector<1x8x8xf32> -> vector<4x8x8xf32>
    "tpu.trace_start"() <{level = 10 : i32, message = "htd,hsd->hts"}> : () -> ()
    %cst_113 = arith.constant dense<0.000000e+00> : vector<4x8x8xf32>
    %311 = tpu.matmul %292, %301, %cst_113 {dimension_numbers = #tpu.dot_dimension_numbers<[2], [2], [1], [1], [0, 0, 0, 1, 1, 1], [0], [0]>} : vector<4x8x8xf32>, vector<4x8x8xf32>, vector<4x8x8xf32> -> vector<4x8x8xf32>
    "tpu.trace_stop"() : () -> ()
    %cst_114 = arith.constant 0.353553385 : f32
    %312 = vector.broadcast %cst_114 : f32 to vector<4x8x8xf32>
    %313 = arith.mulf %311, %312 : vector<4x8x8xf32>
    %314 = vector.shape_cast %21 : vector<8x8xi1> to vector<1x8x8xi1>
    %cst_115 = arith.constant -1.000000e+10 : f32
    %315 = vector.shape_cast %314 : vector<1x8x8xi1> to vector<1x8x8xi1>
    %316 = vector.broadcast %315 : vector<1x8x8xi1> to vector<4x8x8xi1>
    %317 = vector.broadcast %cst_115 : f32 to vector<4x8x8xf32>
    %318 = arith.select %316, %313, %317 : vector<4x8x8xi1>, vector<4x8x8xf32>
    %cst_116 = arith.constant dense<0xFF800000> : vector<4x8xf32>
    %319 = vector.multi_reduction <maximumf>, %318, %cst_116 [2] : vector<4x8x8xf32> to vector<4x8xf32>
    %320 = vector.shape_cast %319 : vector<4x8xf32> to vector<4x8x1xf32>
    %321 = vector.broadcast %320 : vector<4x8x1xf32> to vector<4x8x8xf32>
    %322 = arith.subf %318, %321 : vector<4x8x8xf32>
    %323 = math.exp %322 : vector<4x8x8xf32>
    %cst_117 = arith.constant dense<0.000000e+00> : vector<4x8xf32>
    %324 = vector.multi_reduction <add>, %323, %cst_117 [2] : vector<4x8x8xf32> to vector<4x8xf32>
    %325 = vector.shape_cast %324 : vector<4x8xf32> to vector<4x8x1xf32>
    %326 = vector.broadcast %325 : vector<4x8x1xf32> to vector<4x8x8xf32>
    %327 = arith.divf %323, %326 : vector<4x8x8xf32>
    "tpu.trace_start"() <{level = 10 : i32, message = "hts,hsd->htd"}> : () -> ()
    %cst_118 = arith.constant dense<0.000000e+00> : vector<4x8x8xf32>
    %328 = tpu.matmul %327, %310, %cst_118 {dimension_numbers = #tpu.dot_dimension_numbers<[2], [1], [1], [2], [0, 0, 0, 1, 1, 2], [0], [0]>} : vector<4x8x8xf32>, vector<4x8x8xf32>, vector<4x8x8xf32> -> vector<4x8x8xf32>
    "tpu.trace_stop"() : () -> ()
    %c1_119 = arith.constant 1 : index
    %c0_120 = arith.constant 0 : index
    %c0_121 = arith.constant 0 : index
    %329 = vector.load %arg7[%c1_119, %c0_120, %c0_121] : memref<2x32x32xf32, #tpu.memory_space<vmem>>, vector<1x32x32xf32>
    %330 = vector.shape_cast %329 : vector<1x32x32xf32> to vector<32x32xf32>
    %c1_122 = arith.constant 1 : index
    %c0_123 = arith.constant 0 : index
    %c0_124 = arith.constant 0 : index
    %331 = vector.load %arg8[%c1_122, %c0_123, %c0_124] : memref<2x1x32xf32, #tpu.memory_space<vmem>>, vector<1x1x32xf32>
    %332 = vector.shape_cast %331 : vector<1x1x32xf32> to vector<1x32xf32>
    %333 = vector.extract_strided_slice %328 {offsets = [0, 0, 0], sizes = [1, 8, 8], strides = [1, 1, 1]} : vector<4x8x8xf32> to vector<1x8x8xf32>
    %334 = vector.shape_cast %333 : vector<1x8x8xf32> to vector<8x8xf32>
    %335 = vector.extract_strided_slice %330 {offsets = [0, 0], sizes = [8, 32], strides = [1, 1]} : vector<32x32xf32> to vector<8x32xf32>
    %cst_125 = arith.constant dense<0.000000e+00> : vector<8x32xf32>
    %336 = tpu.matmul %334, %335, %cst_125 {dimension_numbers = #tpu.dot_dimension_numbers<[1], [0], [0], [1], [0, 0, 1, 1], [], []>} : vector<8x8xf32>, vector<8x32xf32>, vector<8x32xf32> -> vector<8x32xf32>
    %337 = vector.extract_strided_slice %328 {offsets = [1, 0, 0], sizes = [1, 8, 8], strides = [1, 1, 1]} : vector<4x8x8xf32> to vector<1x8x8xf32>
    %338 = vector.shape_cast %337 : vector<1x8x8xf32> to vector<8x8xf32>
    %339 = vector.extract_strided_slice %330 {offsets = [8, 0], sizes = [8, 32], strides = [1, 1]} : vector<32x32xf32> to vector<8x32xf32>
    %cst_126 = arith.constant dense<0.000000e+00> : vector<8x32xf32>
    %340 = tpu.matmul %338, %339, %cst_126 {dimension_numbers = #tpu.dot_dimension_numbers<[1], [0], [0], [1], [0, 0, 1, 1], [], []>} : vector<8x8xf32>, vector<8x32xf32>, vector<8x32xf32> -> vector<8x32xf32>
    %341 = arith.addf %336, %340 : vector<8x32xf32>
    %342 = vector.extract_strided_slice %328 {offsets = [2, 0, 0], sizes = [1, 8, 8], strides = [1, 1, 1]} : vector<4x8x8xf32> to vector<1x8x8xf32>
    %343 = vector.shape_cast %342 : vector<1x8x8xf32> to vector<8x8xf32>
    %344 = vector.extract_strided_slice %330 {offsets = [16, 0], sizes = [8, 32], strides = [1, 1]} : vector<32x32xf32> to vector<8x32xf32>
    %cst_127 = arith.constant dense<0.000000e+00> : vector<8x32xf32>
    %345 = tpu.matmul %343, %344, %cst_127 {dimension_numbers = #tpu.dot_dimension_numbers<[1], [0], [0], [1], [0, 0, 1, 1], [], []>} : vector<8x8xf32>, vector<8x32xf32>, vector<8x32xf32> -> vector<8x32xf32>
    %346 = arith.addf %341, %345 : vector<8x32xf32>
    %347 = vector.extract_strided_slice %328 {offsets = [3, 0, 0], sizes = [1, 8, 8], strides = [1, 1, 1]} : vector<4x8x8xf32> to vector<1x8x8xf32>
    %348 = vector.shape_cast %347 : vector<1x8x8xf32> to vector<8x8xf32>
    %349 = vector.extract_strided_slice %330 {offsets = [24, 0], sizes = [8, 32], strides = [1, 1]} : vector<32x32xf32> to vector<8x32xf32>
    %cst_128 = arith.constant dense<0.000000e+00> : vector<8x32xf32>
    %350 = tpu.matmul %348, %349, %cst_128 {dimension_numbers = #tpu.dot_dimension_numbers<[1], [0], [0], [1], [0, 0, 1, 1], [], []>} : vector<8x8xf32>, vector<8x32xf32>, vector<8x32xf32> -> vector<8x32xf32>
    %351 = arith.addf %346, %350 : vector<8x32xf32>
    %352 = vector.broadcast %332 : vector<1x32xf32> to vector<8x32xf32>
    %353 = arith.addf %351, %352 : vector<8x32xf32>
    %354 = arith.addf %272, %353 : vector<8x32xf32>
    %cst_129 = arith.constant dense<0.000000e+00> : vector<8xf32>
    %355 = vector.multi_reduction <add>, %354, %cst_129 [1] : vector<8x32xf32> to vector<8xf32>
    %356 = vector.shape_cast %355 : vector<8xf32> to vector<8x1xf32>
    %cst_130 = arith.constant 3.200000e+01 : f32
    %357 = vector.broadcast %cst_130 : f32 to vector<8x1xf32>
    %358 = arith.divf %356, %357 : vector<8x1xf32>
    %359 = arith.mulf %354, %354 : vector<8x32xf32>
    %cst_131 = arith.constant dense<0.000000e+00> : vector<8xf32>
    %360 = vector.multi_reduction <add>, %359, %cst_131 [1] : vector<8x32xf32> to vector<8xf32>
    %361 = vector.shape_cast %360 : vector<8xf32> to vector<8x1xf32>
    %cst_132 = arith.constant 3.200000e+01 : f32
    %362 = vector.broadcast %cst_132 : f32 to vector<8x1xf32>
    %363 = arith.divf %361, %362 : vector<8x1xf32>
    %364 = arith.mulf %358, %358 : vector<8x1xf32>
    %365 = arith.subf %363, %364 : vector<8x1xf32>
    %cst_133 = arith.constant 0.000000e+00 : f32
    %366 = vector.broadcast %cst_133 : f32 to vector<8x1xf32>
    %367 = arith.maximumf %365, %366 : vector<8x1xf32>
    %368 = vector.broadcast %358 : vector<8x1xf32> to vector<8x32xf32>
    %369 = arith.subf %354, %368 : vector<8x32xf32>
    %cst_134 = arith.constant 9.99999974E-6 : f32
    %370 = vector.broadcast %cst_134 : f32 to vector<8x1xf32>
    %371 = arith.addf %367, %370 : vector<8x1xf32>
    %372 = math.rsqrt %371 : vector<8x1xf32>
    %373 = vector.broadcast %372 : vector<8x1xf32> to vector<8x32xf32>
    %374 = arith.mulf %369, %373 : vector<8x32xf32>
    %375 = vector.broadcast %274 : vector<1x32xf32> to vector<8x32xf32>
    %376 = arith.mulf %374, %375 : vector<8x32xf32>
    %377 = vector.broadcast %276 : vector<1x32xf32> to vector<8x32xf32>
    %378 = arith.addf %376, %377 : vector<8x32xf32>
    %c1_135 = arith.constant 1 : index
    %c0_136 = arith.constant 0 : index
    %c0_137 = arith.constant 0 : index
    %379 = vector.load %arg9[%c1_135, %c0_136, %c0_137] : memref<2x32x32xf32, #tpu.memory_space<vmem>>, vector<1x32x32xf32>
    %380 = vector.shape_cast %379 : vector<1x32x32xf32> to vector<32x32xf32>
    %cst_138 = arith.constant dense<0.000000e+00> : vector<8x32xf32>
    %381 = tpu.matmul %378, %380, %cst_138 {dimension_numbers = #tpu.dot_dimension_numbers<[1], [0], [0], [1], [0, 0, 1, 1], [], []>} : vector<8x32xf32>, vector<32x32xf32>, vector<8x32xf32> -> vector<8x32xf32>
    %c1_139 = arith.constant 1 : index
    %c0_140 = arith.constant 0 : index
    %c0_141 = arith.constant 0 : index
    %382 = vector.load %arg10[%c1_139, %c0_140, %c0_141] : memref<2x1x32xf32, #tpu.memory_space<vmem>>, vector<1x1x32xf32>
    %383 = vector.shape_cast %382 : vector<1x1x32xf32> to vector<1x32xf32>
    %384 = vector.broadcast %383 : vector<1x32xf32> to vector<8x32xf32>
    %385 = arith.addf %381, %384 : vector<8x32xf32>
    %c1_142 = arith.constant 1 : index
    %c0_143 = arith.constant 0 : index
    %c0_144 = arith.constant 0 : index
    %386 = vector.load %arg11[%c1_142, %c0_143, %c0_144] : memref<2x32x64xf32, #tpu.memory_space<vmem>>, vector<1x32x64xf32>
    %387 = vector.shape_cast %386 : vector<1x32x64xf32> to vector<32x64xf32>
    %cst_145 = arith.constant dense<0.000000e+00> : vector<10x64xf32>
    %388 = tpu.matmul %14, %387, %cst_145 {dimension_numbers = #tpu.dot_dimension_numbers<[1], [0], [0], [1], [0, 0, 1, 1], [], []>} : vector<10x32xf32>, vector<32x64xf32>, vector<10x64xf32> -> vector<10x64xf32>
    %c1_146 = arith.constant 1 : index
    %c0_147 = arith.constant 0 : index
    %c0_148 = arith.constant 0 : index
    %389 = vector.load %arg12[%c1_146, %c0_147, %c0_148] : memref<2x1x64xf32, #tpu.memory_space<vmem>>, vector<1x1x64xf32>
    %390 = vector.shape_cast %389 : vector<1x1x64xf32> to vector<1x64xf32>
    %391 = vector.broadcast %390 : vector<1x64xf32> to vector<10x64xf32>
    %392 = arith.addf %388, %391 : vector<10x64xf32>
    %393 = vector.extract_strided_slice %385 {offsets = [0, 0], sizes = [8, 8], strides = [1, 1]} : vector<8x32xf32> to vector<8x8xf32>
    %394 = vector.extract_strided_slice %385 {offsets = [0, 8], sizes = [8, 8], strides = [1, 1]} : vector<8x32xf32> to vector<8x8xf32>
    %395 = vector.extract_strided_slice %385 {offsets = [0, 16], sizes = [8, 8], strides = [1, 1]} : vector<8x32xf32> to vector<8x8xf32>
    %396 = vector.extract_strided_slice %385 {offsets = [0, 24], sizes = [8, 8], strides = [1, 1]} : vector<8x32xf32> to vector<8x8xf32>
    %397 = vector.shape_cast %393 : vector<8x8xf32> to vector<1x8x8xf32>
    %398 = vector.shape_cast %394 : vector<8x8xf32> to vector<1x8x8xf32>
    %399 = vector.shape_cast %395 : vector<8x8xf32> to vector<1x8x8xf32>
    %400 = vector.shape_cast %396 : vector<8x8xf32> to vector<1x8x8xf32>
    %401 = tpu.concatenate %397, %398, %399, %400 in 0 : vector<1x8x8xf32>, vector<1x8x8xf32>, vector<1x8x8xf32>, vector<1x8x8xf32> -> vector<4x8x8xf32>
    %402 = vector.extract_strided_slice %392 {offsets = [0, 0], sizes = [10, 8], strides = [1, 1]} : vector<10x64xf32> to vector<10x8xf32>
    %403 = vector.extract_strided_slice %392 {offsets = [0, 8], sizes = [10, 8], strides = [1, 1]} : vector<10x64xf32> to vector<10x8xf32>
    %404 = vector.extract_strided_slice %392 {offsets = [0, 16], sizes = [10, 8], strides = [1, 1]} : vector<10x64xf32> to vector<10x8xf32>
    %405 = vector.extract_strided_slice %392 {offsets = [0, 24], sizes = [10, 8], strides = [1, 1]} : vector<10x64xf32> to vector<10x8xf32>
    %406 = vector.shape_cast %402 : vector<10x8xf32> to vector<1x10x8xf32>
    %407 = vector.shape_cast %403 : vector<10x8xf32> to vector<1x10x8xf32>
    %408 = vector.shape_cast %404 : vector<10x8xf32> to vector<1x10x8xf32>
    %409 = vector.shape_cast %405 : vector<10x8xf32> to vector<1x10x8xf32>
    %410 = tpu.concatenate %406, %407, %408, %409 in 0 : vector<1x10x8xf32>, vector<1x10x8xf32>, vector<1x10x8xf32>, vector<1x10x8xf32> -> vector<4x10x8xf32>
    %411 = vector.extract_strided_slice %392 {offsets = [0, 32], sizes = [10, 8], strides = [1, 1]} : vector<10x64xf32> to vector<10x8xf32>
    %412 = vector.extract_strided_slice %392 {offsets = [0, 40], sizes = [10, 8], strides = [1, 1]} : vector<10x64xf32> to vector<10x8xf32>
    %413 = vector.extract_strided_slice %392 {offsets = [0, 48], sizes = [10, 8], strides = [1, 1]} : vector<10x64xf32> to vector<10x8xf32>
    %414 = vector.extract_strided_slice %392 {offsets = [0, 56], sizes = [10, 8], strides = [1, 1]} : vector<10x64xf32> to vector<10x8xf32>
    %415 = vector.shape_cast %411 : vector<10x8xf32> to vector<1x10x8xf32>
    %416 = vector.shape_cast %412 : vector<10x8xf32> to vector<1x10x8xf32>
    %417 = vector.shape_cast %413 : vector<10x8xf32> to vector<1x10x8xf32>
    %418 = vector.shape_cast %414 : vector<10x8xf32> to vector<1x10x8xf32>
    %419 = tpu.concatenate %415, %416, %417, %418 in 0 : vector<1x10x8xf32>, vector<1x10x8xf32>, vector<1x10x8xf32>, vector<1x10x8xf32> -> vector<4x10x8xf32>
    "tpu.trace_start"() <{level = 10 : i32, message = "htd,hsd->hts"}> : () -> ()
    %cst_149 = arith.constant dense<0.000000e+00> : vector<4x8x10xf32>
    %420 = tpu.matmul %401, %410, %cst_149 {dimension_numbers = #tpu.dot_dimension_numbers<[2], [2], [1], [1], [0, 0, 0, 1, 1, 1], [0], [0]>} : vector<4x8x8xf32>, vector<4x10x8xf32>, vector<4x8x10xf32> -> vector<4x8x10xf32>
    "tpu.trace_stop"() : () -> ()
    %cst_150 = arith.constant 0.353553385 : f32
    %421 = vector.broadcast %cst_150 : f32 to vector<4x8x10xf32>
    %422 = arith.mulf %420, %421 : vector<4x8x10xf32>
    %cst_151 = arith.constant dense<0xFF800000> : vector<4x8xf32>
    %423 = vector.multi_reduction <maximumf>, %422, %cst_151 [2] : vector<4x8x10xf32> to vector<4x8xf32>
    %424 = vector.shape_cast %423 : vector<4x8xf32> to vector<4x8x1xf32>
    %425 = vector.broadcast %424 : vector<4x8x1xf32> to vector<4x8x10xf32>
    %426 = arith.subf %422, %425 : vector<4x8x10xf32>
    %427 = math.exp %426 : vector<4x8x10xf32>
    %cst_152 = arith.constant dense<0.000000e+00> : vector<4x8xf32>
    %428 = vector.multi_reduction <add>, %427, %cst_152 [2] : vector<4x8x10xf32> to vector<4x8xf32>
    %429 = vector.shape_cast %428 : vector<4x8xf32> to vector<4x8x1xf32>
    %430 = vector.broadcast %429 : vector<4x8x1xf32> to vector<4x8x10xf32>
    %431 = arith.divf %427, %430 : vector<4x8x10xf32>
    %cst_153 = arith.constant 0.000000e+00 : f32
    %432 = vector.broadcast %cst_153 : f32 to vector<4x8x128xf32>
    %c0_154 = arith.constant 0 : index
    %c0_155 = arith.constant 0 : index
    %c0_156 = arith.constant 0 : index
    %c0_157 = arith.constant 0 : index
    %433 = vector.load %arg24[%c0_154, %c0_155, %c0_156, %c0_157] : memref<1x4x8x128xf32, #tpu.memory_space<vmem>>, vector<1x4x8x128xf32>
    %434 = vector.shape_cast %433 : vector<1x4x8x128xf32> to vector<4x8x128xf32>
    %435 = vector.shape_cast %432 : vector<4x8x128xf32> to vector<1x4x8x128xf32>
    tpu.vector_store %arg24[%c0_154, %c0_155, %c0_156, %c0_157], %435 {strides = array<i32>} : memref<1x4x8x128xf32, #tpu.memory_space<vmem>>, vector<1x4x8x128xf32>,
    %c0_158 = arith.constant 0 : index
    %c0_159 = arith.constant 0 : index
    %c0_160 = arith.constant 0 : index
    %c0_161 = arith.constant 0 : index
    %436 = vector.load %arg24[%c0_158, %c0_159, %c0_160, %c0_161] : memref<1x4x8x128xf32, #tpu.memory_space<vmem>>, vector<1x4x8x10xf32>
    %437 = vector.shape_cast %436 : vector<1x4x8x10xf32> to vector<4x8x10xf32>
    %438 = vector.shape_cast %431 : vector<4x8x10xf32> to vector<1x4x8x10xf32>
    tpu.vector_store %arg24[%c0_158, %c0_159, %c0_160, %c0_161], %438 {strides = array<i32>} : memref<1x4x8x128xf32, #tpu.memory_space<vmem>>, vector<1x4x8x10xf32>,
    "tpu.trace_start"() <{level = 10 : i32, message = "hts,hsd->htd"}> : () -> ()
    %cst_162 = arith.constant dense<0.000000e+00> : vector<4x8x8xf32>
    %439 = tpu.matmul %431, %419, %cst_162 {dimension_numbers = #tpu.dot_dimension_numbers<[2], [1], [1], [2], [0, 0, 0, 1, 1, 2], [0], [0]>} : vector<4x8x10xf32>, vector<4x10x8xf32>, vector<4x8x8xf32> -> vector<4x8x8xf32>
    "tpu.trace_stop"() : () -> ()
    %c1_163 = arith.constant 1 : index
    %c0_164 = arith.constant 0 : index
    %c0_165 = arith.constant 0 : index
    %440 = vector.load %arg13[%c1_163, %c0_164, %c0_165] : memref<2x32x32xf32, #tpu.memory_space<vmem>>, vector<1x32x32xf32>
    %441 = vector.shape_cast %440 : vector<1x32x32xf32> to vector<32x32xf32>
    %c1_166 = arith.constant 1 : index
    %c0_167 = arith.constant 0 : index
    %c0_168 = arith.constant 0 : index
    %442 = vector.load %arg14[%c1_166, %c0_167, %c0_168] : memref<2x1x32xf32, #tpu.memory_space<vmem>>, vector<1x1x32xf32>
    %443 = vector.shape_cast %442 : vector<1x1x32xf32> to vector<1x32xf32>
    %444 = vector.extract_strided_slice %439 {offsets = [0, 0, 0], sizes = [1, 8, 8], strides = [1, 1, 1]} : vector<4x8x8xf32> to vector<1x8x8xf32>
    %445 = vector.shape_cast %444 : vector<1x8x8xf32> to vector<8x8xf32>
    %446 = vector.extract_strided_slice %441 {offsets = [0, 0], sizes = [8, 32], strides = [1, 1]} : vector<32x32xf32> to vector<8x32xf32>
    %cst_169 = arith.constant dense<0.000000e+00> : vector<8x32xf32>
    %447 = tpu.matmul %445, %446, %cst_169 {dimension_numbers = #tpu.dot_dimension_numbers<[1], [0], [0], [1], [0, 0, 1, 1], [], []>} : vector<8x8xf32>, vector<8x32xf32>, vector<8x32xf32> -> vector<8x32xf32>
    %448 = vector.extract_strided_slice %439 {offsets = [1, 0, 0], sizes = [1, 8, 8], strides = [1, 1, 1]} : vector<4x8x8xf32> to vector<1x8x8xf32>
    %449 = vector.shape_cast %448 : vector<1x8x8xf32> to vector<8x8xf32>
    %450 = vector.extract_strided_slice %441 {offsets = [8, 0], sizes = [8, 32], strides = [1, 1]} : vector<32x32xf32> to vector<8x32xf32>
    %cst_170 = arith.constant dense<0.000000e+00> : vector<8x32xf32>
    %451 = tpu.matmul %449, %450, %cst_170 {dimension_numbers = #tpu.dot_dimension_numbers<[1], [0], [0], [1], [0, 0, 1, 1], [], []>} : vector<8x8xf32>, vector<8x32xf32>, vector<8x32xf32> -> vector<8x32xf32>
    %452 = arith.addf %447, %451 : vector<8x32xf32>
    %453 = vector.extract_strided_slice %439 {offsets = [2, 0, 0], sizes = [1, 8, 8], strides = [1, 1, 1]} : vector<4x8x8xf32> to vector<1x8x8xf32>
    %454 = vector.shape_cast %453 : vector<1x8x8xf32> to vector<8x8xf32>
    %455 = vector.extract_strided_slice %441 {offsets = [16, 0], sizes = [8, 32], strides = [1, 1]} : vector<32x32xf32> to vector<8x32xf32>
    %cst_171 = arith.constant dense<0.000000e+00> : vector<8x32xf32>
    %456 = tpu.matmul %454, %455, %cst_171 {dimension_numbers = #tpu.dot_dimension_numbers<[1], [0], [0], [1], [0, 0, 1, 1], [], []>} : vector<8x8xf32>, vector<8x32xf32>, vector<8x32xf32> -> vector<8x32xf32>
    %457 = arith.addf %452, %456 : vector<8x32xf32>
    %458 = vector.extract_strided_slice %439 {offsets = [3, 0, 0], sizes = [1, 8, 8], strides = [1, 1, 1]} : vector<4x8x8xf32> to vector<1x8x8xf32>
    %459 = vector.shape_cast %458 : vector<1x8x8xf32> to vector<8x8xf32>
    %460 = vector.extract_strided_slice %441 {offsets = [24, 0], sizes = [8, 32], strides = [1, 1]} : vector<32x32xf32> to vector<8x32xf32>
    %cst_172 = arith.constant dense<0.000000e+00> : vector<8x32xf32>
    %461 = tpu.matmul %459, %460, %cst_172 {dimension_numbers = #tpu.dot_dimension_numbers<[1], [0], [0], [1], [0, 0, 1, 1], [], []>} : vector<8x8xf32>, vector<8x32xf32>, vector<8x32xf32> -> vector<8x32xf32>
    %462 = arith.addf %457, %461 : vector<8x32xf32>
    %463 = vector.broadcast %443 : vector<1x32xf32> to vector<8x32xf32>
    %464 = arith.addf %462, %463 : vector<8x32xf32>
    %465 = arith.addf %378, %464 : vector<8x32xf32>
    %cst_173 = arith.constant dense<0.000000e+00> : vector<8xf32>
    %466 = vector.multi_reduction <add>, %465, %cst_173 [1] : vector<8x32xf32> to vector<8xf32>
    %467 = vector.shape_cast %466 : vector<8xf32> to vector<8x1xf32>
    %cst_174 = arith.constant 3.200000e+01 : f32
    %468 = vector.broadcast %cst_174 : f32 to vector<8x1xf32>
    %469 = arith.divf %467, %468 : vector<8x1xf32>
    %470 = arith.mulf %465, %465 : vector<8x32xf32>
    %cst_175 = arith.constant dense<0.000000e+00> : vector<8xf32>
    %471 = vector.multi_reduction <add>, %470, %cst_175 [1] : vector<8x32xf32> to vector<8xf32>
    %472 = vector.shape_cast %471 : vector<8xf32> to vector<8x1xf32>
    %cst_176 = arith.constant 3.200000e+01 : f32
    %473 = vector.broadcast %cst_176 : f32 to vector<8x1xf32>
    %474 = arith.divf %472, %473 : vector<8x1xf32>
    %475 = arith.mulf %469, %469 : vector<8x1xf32>
    %476 = arith.subf %474, %475 : vector<8x1xf32>
    %cst_177 = arith.constant 0.000000e+00 : f32
    %477 = vector.broadcast %cst_177 : f32 to vector<8x1xf32>
    %478 = arith.maximumf %476, %477 : vector<8x1xf32>
    %479 = vector.broadcast %469 : vector<8x1xf32> to vector<8x32xf32>
    %480 = arith.subf %465, %479 : vector<8x32xf32>
    %cst_178 = arith.constant 9.99999974E-6 : f32
    %481 = vector.broadcast %cst_178 : f32 to vector<8x1xf32>
    %482 = arith.addf %478, %481 : vector<8x1xf32>
    %483 = math.rsqrt %482 : vector<8x1xf32>
    %484 = vector.broadcast %483 : vector<8x1xf32> to vector<8x32xf32>
    %485 = arith.mulf %480, %484 : vector<8x32xf32>
    %486 = vector.broadcast %274 : vector<1x32xf32> to vector<8x32xf32>
    %487 = arith.mulf %485, %486 : vector<8x32xf32>
    %488 = vector.broadcast %276 : vector<1x32xf32> to vector<8x32xf32>
    %489 = arith.addf %487, %488 : vector<8x32xf32>
    %c1_179 = arith.constant 1 : index
    %c0_180 = arith.constant 0 : index
    %c0_181 = arith.constant 0 : index
    %490 = vector.load %arg17[%c1_179, %c0_180, %c0_181] : memref<2x32x64xf32, #tpu.memory_space<vmem>>, vector<1x32x64xf32>
    %491 = vector.shape_cast %490 : vector<1x32x64xf32> to vector<32x64xf32>
    %cst_182 = arith.constant dense<0.000000e+00> : vector<8x64xf32>
    %492 = tpu.matmul %489, %491, %cst_182 {dimension_numbers = #tpu.dot_dimension_numbers<[1], [0], [0], [1], [0, 0, 1, 1], [], []>} : vector<8x32xf32>, vector<32x64xf32>, vector<8x64xf32> -> vector<8x64xf32>
    %c1_183 = arith.constant 1 : index
    %c0_184 = arith.constant 0 : index
    %c0_185 = arith.constant 0 : index
    %493 = vector.load %arg18[%c1_183, %c0_184, %c0_185] : memref<2x1x64xf32, #tpu.memory_space<vmem>>, vector<1x1x64xf32>
    %494 = vector.shape_cast %493 : vector<1x1x64xf32> to vector<1x64xf32>
    %495 = vector.broadcast %494 : vector<1x64xf32> to vector<8x64xf32>
    %496 = arith.addf %492, %495 : vector<8x64xf32>
    %cst_186 = arith.constant 0.000000e+00 : f32
    %497 = vector.broadcast %cst_186 : f32 to vector<8x64xf32>
    %498 = arith.maximumf %496, %497 : vector<8x64xf32>
    %c1_187 = arith.constant 1 : index
    %c0_188 = arith.constant 0 : index
    %c0_189 = arith.constant 0 : index
    %499 = vector.load %arg19[%c1_187, %c0_188, %c0_189] : memref<2x64x32xf32, #tpu.memory_space<vmem>>, vector<1x64x32xf32>
    %500 = vector.shape_cast %499 : vector<1x64x32xf32> to vector<64x32xf32>
    %cst_190 = arith.constant dense<0.000000e+00> : vector<8x32xf32>
    %501 = tpu.matmul %498, %500, %cst_190 {dimension_numbers = #tpu.dot_dimension_numbers<[1], [0], [0], [1], [0, 0, 1, 1], [], []>} : vector<8x64xf32>, vector<64x32xf32>, vector<8x32xf32> -> vector<8x32xf32>
    %c1_191 = arith.constant 1 : index
    %c0_192 = arith.constant 0 : index
    %c0_193 = arith.constant 0 : index
    %502 = vector.load %arg20[%c1_191, %c0_192, %c0_193] : memref<2x1x32xf32, #tpu.memory_space<vmem>>, vector<1x1x32xf32>
    %503 = vector.shape_cast %502 : vector<1x1x32xf32> to vector<1x32xf32>
    %504 = vector.broadcast %503 : vector<1x32xf32> to vector<8x32xf32>
    %505 = arith.addf %501, %504 : vector<8x32xf32>
    %506 = arith.addf %489, %505 : vector<8x32xf32>
    %cst_194 = arith.constant dense<0.000000e+00> : vector<8xf32>
    %507 = vector.multi_reduction <add>, %506, %cst_194 [1] : vector<8x32xf32> to vector<8xf32>
    %508 = vector.shape_cast %507 : vector<8xf32> to vector<8x1xf32>
    %cst_195 = arith.constant 3.200000e+01 : f32
    %509 = vector.broadcast %cst_195 : f32 to vector<8x1xf32>
    %510 = arith.divf %508, %509 : vector<8x1xf32>
    %511 = arith.mulf %506, %506 : vector<8x32xf32>
    %cst_196 = arith.constant dense<0.000000e+00> : vector<8xf32>
    %512 = vector.multi_reduction <add>, %511, %cst_196 [1] : vector<8x32xf32> to vector<8xf32>
    %513 = vector.shape_cast %512 : vector<8xf32> to vector<8x1xf32>
    %cst_197 = arith.constant 3.200000e+01 : f32
    %514 = vector.broadcast %cst_197 : f32 to vector<8x1xf32>
    %515 = arith.divf %513, %514 : vector<8x1xf32>
    %516 = arith.mulf %510, %510 : vector<8x1xf32>
    %517 = arith.subf %515, %516 : vector<8x1xf32>
    %cst_198 = arith.constant 0.000000e+00 : f32
    %518 = vector.broadcast %cst_198 : f32 to vector<8x1xf32>
    %519 = arith.maximumf %517, %518 : vector<8x1xf32>
    %520 = vector.broadcast %510 : vector<8x1xf32> to vector<8x32xf32>
    %521 = arith.subf %506, %520 : vector<8x32xf32>
    %cst_199 = arith.constant 9.99999974E-6 : f32
    %522 = vector.broadcast %cst_199 : f32 to vector<8x1xf32>
    %523 = arith.addf %519, %522 : vector<8x1xf32>
    %524 = math.rsqrt %523 : vector<8x1xf32>
    %525 = vector.broadcast %524 : vector<8x1xf32> to vector<8x32xf32>
    %526 = arith.mulf %521, %525 : vector<8x32xf32>
    %527 = vector.broadcast %274 : vector<1x32xf32> to vector<8x32xf32>
    %528 = arith.mulf %526, %527 : vector<8x32xf32>
    %529 = vector.broadcast %276 : vector<1x32xf32> to vector<8x32xf32>
    %530 = arith.addf %528, %529 : vector<8x32xf32>
    %c0_200 = arith.constant 0 : index
    %c0_201 = arith.constant 0 : index
    %531 = vector.load %arg21[%c0_200, %c0_201] : memref<32x128xf32, #tpu.memory_space<vmem>>, vector<32x128xf32>
    %cst_202 = arith.constant dense<0.000000e+00> : vector<8x128xf32>
    %532 = tpu.matmul %530, %531, %cst_202 {dimension_numbers = #tpu.dot_dimension_numbers<[1], [0], [0], [1], [0, 0, 1, 1], [], []>} : vector<8x32xf32>, vector<32x128xf32>, vector<8x128xf32> -> vector<8x128xf32>
    %c0_203 = arith.constant 0 : index
    %c0_204 = arith.constant 0 : index
    %533 = vector.load %arg22[%c0_203, %c0_204] : memref<1x128xf32, #tpu.memory_space<vmem>>, vector<1x128xf32>
    %534 = vector.broadcast %533 : vector<1x128xf32> to vector<8x128xf32>
    %535 = arith.addf %532, %534 : vector<8x128xf32>
    %c0_205 = arith.constant 0 : index
    %c0_206 = arith.constant 0 : index
    %c0_207 = arith.constant 0 : index
    %536 = vector.load %arg23[%c0_205, %c0_206, %c0_207] : memref<1x8x128xf32, #tpu.memory_space<vmem>>, vector<1x8x128xf32>
    %537 = vector.shape_cast %536 : vector<1x8x128xf32> to vector<8x128xf32>
    %538 = vector.shape_cast %535 : vector<8x128xf32> to vector<1x8x128xf32>
    tpu.vector_store %arg23[%c0_205, %c0_206, %c0_207], %538 {strides = array<i32>} : memref<1x8x128xf32, #tpu.memory_space<vmem>>, vector<1x8x128xf32>,
    return
  }
  func.func @transform_0(%arg0: i32) -> (i32, i32, i32) {
    %c0_i32 = arith.constant 0 : i32
    %c0_i32_0 = arith.constant 0 : i32
    %c0_i32_1 = arith.constant 0 : i32
    return %arg0, %c0_i32, %c0_i32_0 : i32, i32, i32
  }
  func.func @transform_1(%arg0: i32) -> (i32, i32) {
    %c0_i32 = arith.constant 0 : i32
    %c0_i32_0 = arith.constant 0 : i32
    %c0_i32_1 = arith.constant 0 : i32
    return %c0_i32, %c0_i32_0 : i32, i32
  }
  func.func @transform_2(%arg0: i32) -> (i32, i32, i32) {
    %c0_i32 = arith.constant 0 : i32
    %c0_i32_0 = arith.constant 0 : i32
    %c0_i32_1 = arith.constant 0 : i32
    return %arg0, %c0_i32, %c0_i32_0 : i32, i32, i32
  }
  func.func @transform_3(%arg0: i32) -> (i32, i32) {
    %c0_i32 = arith.constant 0 : i32
    %c0_i32_0 = arith.constant 0 : i32
    %c0_i32_1 = arith.constant 0 : i32
    return %c0_i32, %c0_i32_0 : i32, i32
  }
  func.func @transform_4(%arg0: i32) -> (i32, i32, i32) {
    %c0_i32 = arith.constant 0 : i32
    %c0_i32_0 = arith.constant 0 : i32
    %c0_i32_1 = arith.constant 0 : i32
    %c0_i32_2 = arith.constant 0 : i32
    return %c0_i32, %c0_i32_0, %c0_i32_1 : i32, i32, i32
  }
  func.func @transform_5(%arg0: i32) -> (i32, i32, i32) {
    %c0_i32 = arith.constant 0 : i32
    %c0_i32_0 = arith.constant 0 : i32
    %c0_i32_1 = arith.constant 0 : i32
    %c0_i32_2 = arith.constant 0 : i32
    return %c0_i32, %c0_i32_0, %c0_i32_1 : i32, i32, i32
  }
  func.func @transform_6(%arg0: i32) -> (i32, i32, i32) {
    %c0_i32 = arith.constant 0 : i32
    %c0_i32_0 = arith.constant 0 : i32
    %c0_i32_1 = arith.constant 0 : i32
    %c0_i32_2 = arith.constant 0 : i32
    return %c0_i32, %c0_i32_0, %c0_i32_1 : i32, i32, i32
  }
  func.func @transform_7(%arg0: i32) -> (i32, i32, i32) {
    %c0_i32 = arith.constant 0 : i32
    %c0_i32_0 = arith.constant 0 : i32
    %c0_i32_1 = arith.constant 0 : i32
    %c0_i32_2 = arith.constant 0 : i32
    return %c0_i32, %c0_i32_0, %c0_i32_1 : i32, i32, i32
  }
  func.func @transform_8(%arg0: i32) -> (i32, i32, i32) {
    %c0_i32 = arith.constant 0 : i32
    %c0_i32_0 = arith.constant 0 : i32
    %c0_i32_1 = arith.constant 0 : i32
    %c0_i32_2 = arith.constant 0 : i32
    return %c0_i32, %c0_i32_0, %c0_i32_1 : i32, i32, i32
  }
  func.func @transform_9(%arg0: i32) -> (i32, i32, i32) {
    %c0_i32 = arith.constant 0 : i32
    %c0_i32_0 = arith.constant 0 : i32
    %c0_i32_1 = arith.constant 0 : i32
    %c0_i32_2 = arith.constant 0 : i32
    return %c0_i32, %c0_i32_0, %c0_i32_1 : i32, i32, i32
  }
  func.func @transform_10(%arg0: i32) -> (i32, i32, i32) {
    %c0_i32 = arith.constant 0 : i32
    %c0_i32_0 = arith.constant 0 : i32
    %c0_i32_1 = arith.constant 0 : i32
    %c0_i32_2 = arith.constant 0 : i32
    return %c0_i32, %c0_i32_0, %c0_i32_1 : i32, i32, i32
  }
  func.func @transform_11(%arg0: i32) -> (i32, i32, i32) {
    %c0_i32 = arith.constant 0 : i32
    %c0_i32_0 = arith.constant 0 : i32
    %c0_i32_1 = arith.constant 0 : i32
    %c0_i32_2 = arith.constant 0 : i32
    return %c0_i32, %c0_i32_0, %c0_i32_1 : i32, i32, i32
  }
  func.func @transform_12(%arg0: i32) -> (i32, i32, i32) {
    %c0_i32 = arith.constant 0 : i32
    %c0_i32_0 = arith.constant 0 : i32
    %c0_i32_1 = arith.constant 0 : i32
    %c0_i32_2 = arith.constant 0 : i32
    return %c0_i32, %c0_i32_0, %c0_i32_1 : i32, i32, i32
  }
  func.func @transform_13(%arg0: i32) -> (i32, i32, i32) {
    %c0_i32 = arith.constant 0 : i32
    %c0_i32_0 = arith.constant 0 : i32
    %c0_i32_1 = arith.constant 0 : i32
    %c0_i32_2 = arith.constant 0 : i32
    return %c0_i32, %c0_i32_0, %c0_i32_1 : i32, i32, i32
  }
  func.func @transform_14(%arg0: i32) -> (i32, i32, i32) {
    %c0_i32 = arith.constant 0 : i32
    %c0_i32_0 = arith.constant 0 : i32
    %c0_i32_1 = arith.constant 0 : i32
    %c0_i32_2 = arith.constant 0 : i32
    return %c0_i32, %c0_i32_0, %c0_i32_1 : i32, i32, i32
  }
  func.func @transform_15(%arg0: i32) -> (i32, i32, i32) {
    %c0_i32 = arith.constant 0 : i32
    %c0_i32_0 = arith.constant 0 : i32
    %c0_i32_1 = arith.constant 0 : i32
    %c0_i32_2 = arith.constant 0 : i32
    return %c0_i32, %c0_i32_0, %c0_i32_1 : i32, i32, i32
  }
  func.func @transform_16(%arg0: i32) -> (i32, i32, i32) {
    %c0_i32 = arith.constant 0 : i32
    %c0_i32_0 = arith.constant 0 : i32
    %c0_i32_1 = arith.constant 0 : i32
    %c0_i32_2 = arith.constant 0 : i32
    return %c0_i32, %c0_i32_0, %c0_i32_1 : i32, i32, i32
  }
  func.func @transform_17(%arg0: i32) -> (i32, i32, i32) {
    %c0_i32 = arith.constant 0 : i32
    %c0_i32_0 = arith.constant 0 : i32
    %c0_i32_1 = arith.constant 0 : i32
    %c0_i32_2 = arith.constant 0 : i32
    return %c0_i32, %c0_i32_0, %c0_i32_1 : i32, i32, i32
  }
  func.func @transform_18(%arg0: i32) -> (i32, i32, i32) {
    %c0_i32 = arith.constant 0 : i32
    %c0_i32_0 = arith.constant 0 : i32
    %c0_i32_1 = arith.constant 0 : i32
    %c0_i32_2 = arith.constant 0 : i32
    return %c0_i32, %c0_i32_0, %c0_i32_1 : i32, i32, i32
  }
  func.func @transform_19(%arg0: i32) -> (i32, i32, i32) {
    %c0_i32 = arith.constant 0 : i32
    %c0_i32_0 = arith.constant 0 : i32
    %c0_i32_1 = arith.constant 0 : i32
    %c0_i32_2 = arith.constant 0 : i32
    return %c0_i32, %c0_i32_0, %c0_i32_1 : i32, i32, i32
  }
  func.func @transform_20(%arg0: i32) -> (i32, i32) {
    %c0_i32 = arith.constant 0 : i32
    %c0_i32_0 = arith.constant 0 : i32
    %c0_i32_1 = arith.constant 0 : i32
    return %c0_i32, %c0_i32_0 : i32, i32
  }
  func.func @transform_21(%arg0: i32) -> (i32, i32) {
    %c0_i32 = arith.constant 0 : i32
    %c0_i32_0 = arith.constant 0 : i32
    %c0_i32_1 = arith.constant 0 : i32
    return %c0_i32, %c0_i32_0 : i32, i32
  }
  func.func @transform_22(%arg0: i32) -> (i32, i32, i32) {
    %c0_i32 = arith.constant 0 : i32
    %c0_i32_0 = arith.constant 0 : i32
    %c0_i32_1 = arith.constant 0 : i32
    return %arg0, %c0_i32, %c0_i32_0 : i32, i32, i32
  }
  func.func @transform_23(%arg0: i32) -> (i32, i32, i32, i32) {
    %c0_i32 = arith.constant 0 : i32
    %c0_i32_0 = arith.constant 0 : i32
    %c0_i32_1 = arith.constant 0 : i32
    %c0_i32_2 = arith.constant 0 : i32
    return %arg0, %c0_i32, %c0_i32_0, %c0_i32_1 : i32, i32, i32, i32
  }
}

</mosaic_0001>

<llo_original>
// kernel: decoder_forward.1
$region0: #{decoder_forward.1}
  #allocation0 [shape = 'u32[]', space=smem, size = 0x4, offset = 0x4, fixed_abs, tag = 'smem constant byte address 0x4 - core index']
  #allocation1 [shape = 'u32[72,128]{1,0:T(1,128)}', space=vmem, size = 0x9000, scoped, tag = 'internal scratch']
  %s0 = inlined_call_operand.vmem [shape: s32[2,8,1], index: 0, kind: input, shape index: {}]
  %s1 = inlined_call_operand.vmem [shape: f32[8,32], index: 1, kind: input, shape index: {}]
  %s2 = inlined_call_operand.vmem [shape: f32[2,10,32], index: 2, kind: input, shape index: {}]
  %s3 = inlined_call_operand.vmem [shape: f32[50,32], index: 3, kind: input, shape index: {}]
  %s4 = inlined_call_operand.vmem [shape: f32[2,32,96], index: 4, kind: input, shape index: {}]
  %s5 = inlined_call_operand.hbm [shape: f32[2,1,96], index: 5, kind: input, shape index: {}]
  %s6 = inlined_call_operand.vmem [shape: f32[2,32,32], index: 6, kind: input, shape index: {}]
  %s7 = inlined_call_operand.hbm [shape: f32[2,1,32], index: 7, kind: input, shape index: {}]
  %s8 = inlined_call_operand.vmem [shape: f32[2,32,32], index: 8, kind: input, shape index: {}]
  %s9 = inlined_call_operand.hbm [shape: f32[2,1,32], index: 9, kind: input, shape index: {}]
  %s10 = inlined_call_operand.vmem [shape: f32[2,32,64], index: 10, kind: input, shape index: {}]
  %s11 = inlined_call_operand.hbm [shape: f32[2,1,64], index: 11, kind: input, shape index: {}]
  %s12 = inlined_call_operand.vmem [shape: f32[2,32,32], index: 12, kind: input, shape index: {}]
  %s13 = inlined_call_operand.hbm [shape: f32[2,1,32], index: 13, kind: input, shape index: {}]
  %s14 = inlined_call_operand.hbm [shape: f32[2,1,32], index: 14, kind: input, shape index: {}]
  %s15 = inlined_call_operand.hbm [shape: f32[2,1,32], index: 15, kind: input, shape index: {}]
  %s16 = inlined_call_operand.vmem [shape: f32[2,32,64], index: 16, kind: input, shape index: {}]
  %s17 = inlined_call_operand.hbm [shape: f32[2,1,64], index: 17, kind: input, shape index: {}]
  %s18 = inlined_call_operand.vmem [shape: f32[2,64,32], index: 18, kind: input, shape index: {}]
  %s19 = inlined_call_operand.hbm [shape: f32[2,1,32], index: 19, kind: input, shape index: {}]
  %s20 = inlined_call_operand.hbm [shape: f32[32,128], index: 20, kind: input, shape index: {}]
  %s21 = inlined_call_operand.hbm [shape: f32[1,128], index: 21, kind: input, shape index: {}]
  %s22 = inlined_call_operand.hbm [shape: f32[2,8,128], index: 22, kind: output, shape index: {0}]
  %s23 = inlined_call_operand.hbm [shape: f32[2,4,8,128], index: 23, kind: output, shape index: {1}]
  %24 = xla_tuple %s22, %s23
  %s25 = sld [smem:[#allocation0]]
  $region173: #{decoder_forward.1} parent=0
    _
  %s27 = ssub.s32 1, %s25
  %s28 = scalar_select 0, %s27, %s25
  $region1: #{decoder_forward.1} parent=0
    #allocation2 [shape = 'u8[1024]{0}', space=vmem, size = 0x400, scoped, tag = 'input window, operand 5, single buffered']
    #allocation3 [shape = 's32[2]{0}', space=sflag, size = 0x8, scoped, tag = 'scoped memory for decoder_forward.1']
    #allocation4 [shape = 's32[2]{0}', space=sflag, size = 0x8, scoped, tag = 'scoped memory for decoder_forward.1']
    #allocation5 [shape = 'u8[1024]{0}', space=vmem, size = 0x400, scoped, tag = 'input window, operand 7, single buffered']
    #allocation6 [shape = 's32[1]{0}', space=sflag, size = 0x4, scoped, tag = 'scoped memory for decoder_forward.1']
    #allocation7 [shape = 'u8[1024]{0}', space=vmem, size = 0x400, scoped, tag = 'input window, operand 9, single buffered']
    #allocation8 [shape = 'u8[1024]{0}', space=vmem, size = 0x400, scoped, tag = 'input window, operand 11, single buffered']
    #allocation9 [shape = 's32[1]{0}', space=sflag, size = 0x4, scoped, tag = 'scoped memory for decoder_forward.1']
    #allocation10 [shape = 'u8[1024]{0}', space=vmem, size = 0x400, scoped, tag = 'input window, operand 13, single buffered']
    #allocation11 [shape = 'u8[1024]{0}', space=vmem, size = 0x400, scoped, tag = 'input window, operand 14, single buffered']
    #allocation12 [shape = 's32[1]{0}', space=sflag, size = 0x4, scoped, tag = 'scoped memory for decoder_forward.1']
    #allocation13 [shape = 'u8[1024]{0}', space=vmem, size = 0x400, scoped, tag = 'input window, operand 15, single buffered']
    #allocation14 [shape = 'u8[1024]{0}', space=vmem, size = 0x400, scoped, tag = 'input window, operand 17, single buffered']
    #allocation15 [shape = 's32[1]{0}', space=sflag, size = 0x4, scoped, tag = 'scoped memory for decoder_forward.1']
    #allocation16 [shape = 'u8[1024]{0}', space=vmem, size = 0x400, scoped, tag = 'input window, operand 19, single buffered']
    #allocation17 [shape = 'u8[16384]{0}', space=vmem, size = 0x4000, scoped, tag = 'input window, operand 20, single buffered']
    #allocation18 [shape = 's32[1]{0}', space=sflag, size = 0x4, scoped, tag = 'scoped memory for decoder_forward.1']
    #allocation19 [shape = 'u8[512]{0}', space=vmem, size = 0x400, scoped, tag = 'input window, operand 21, single buffered']
    #allocation20 [shape = 'u8[8192]{0}', space=vmem, size = 0x2000, scoped, tag = 'output window, operand 0']
    #allocation21 [shape = 'u8[32768]{0}', space=vmem, size = 0x8000, scoped, tag = 'output window, operand 1']
    #allocation22 [shape = 's32[2]{0}', space=sflag, size = 0x8, scoped, tag = 'scoped memory for decoder_forward.1']
    %29 = vsyncpa [#allocation3], 0
    %30 = vsyncpa [#allocation6], 0
    %31 = vsyncpa [#allocation9], 0
    %32 = vsyncpa [#allocation12], 0
    %33 = vsyncpa [#allocation15], 0
    %34 = vsyncpa [#allocation18], 0
    %35 = vsyncpa [#allocation4], 0
    %s36 = scalar_lea.sflag [#allocation4], 1
    %37 = vsyncpa %s36, 0
    %38 = vsyncpa [#allocation22], 0
    %s39 = scalar_lea.sflag [#allocation22], 1
    %40 = vsyncpa %s39, 0
    loop: start=0, step=1, limit=4
    $region2: #{decoder_forward.1} parent=1 // loop_pre_header
      _
    $region3: #{decoder_forward.1} parent=1 // loop_header
      %s42 = sphi 0, %s46
      %p43 = scmp.ge.s32.totalorder %s42, 4
      %s52 = sphi 0, %s54
      %s55 = sphi 0, %s52
      %s56 = sphi 0, %s55
      %s72 = sphi 0, %s56
      %s76 = sphi 0, %s76
      %s78 = sphi 0, %s76
      %s79 = sphi 0, %s78
      %s93 = sphi 0, %s79
      %s99 = sphi 0, %s101
      %s102 = sphi 0, %s99
      %s103 = sphi 0, %s102
      %s119 = sphi 0, %s103
      %s123 = sphi 0, %s123
      %s125 = sphi 0, %s123
      %s126 = sphi 0, %s125
      %s140 = sphi 0, %s126
      %s144 = sphi 0, %s144
      %s146 = sphi 0, %s144
      %s147 = sphi 0, %s146
      %s161 = sphi 0, %s147
      %s165 = sphi 0, %s165
      %s167 = sphi 0, %s165
      %s168 = sphi 0, %s167
      %s182 = sphi 0, %s168
      %s186 = sphi 0, %s186
      %s188 = sphi 0, %s186
      %s189 = sphi 0, %s188
      %s203 = sphi 0, %s189
      %s207 = sphi 0, %s207
      %s209 = sphi 0, %s207
      %s210 = sphi 0, %s209
      %s224 = sphi 0, %s210
      %s228 = sphi 0, %s228
      %s230 = sphi 0, %s228
      %s231 = sphi 0, %s230
      %s245 = sphi 0, %s231
      %s249 = sphi 0, %s249
      %s251 = sphi 0, %s249
      %s252 = sphi 0, %s251
      %s266 = sphi 0, %s252
      %s270 = sphi 0, %s270
      %s272 = sphi 0, %s270
      %s273 = sphi 0, %s272
      %s287 = sphi 0, %s273
      %s291 = sphi 0, %s291
      %s293 = sphi 0, %s291
      %s294 = sphi 0, %s293
      %s308 = sphi 0, %s294
      %s312 = sphi 0, %s312
      %s314 = sphi 0, %s312
      %s315 = sphi 0, %s314
      %s329 = sphi 0, %s315
      %s333 = sphi 0, %s333
      %s335 = sphi 0, %s333
      %s336 = sphi 0, %s335
      %s350 = sphi 0, %s336
      %s354 = sphi 0, %s354
      %s356 = sphi 0, %s354
      %s357 = sphi 0, %s356
      %s371 = sphi 0, %s357
      %s375 = sphi 0, %s375
      %s377 = sphi 0, %s375
      %s378 = sphi 0, %s377
      %s392 = sphi 0, %s378
      %s396 = sphi 0, %s396
      %s398 = sphi 0, %s396
      %s399 = sphi 0, %s398
      %s413 = sphi 0, %s399
      %s417 = sphi 0, %s417
      %s419 = sphi 0, %s417
      %s420 = sphi 0, %s419
      %s434 = sphi 0, %s420
      %s438 = sphi 0, %s438
      %s440 = sphi 0, %s438
      %s441 = sphi 0, %s440
      %s455 = sphi 0, %s441
      %s459 = sphi 0, %s459
      %s461 = sphi 0, %s459
      %s462 = sphi 0, %s461
      %s476 = sphi 0, %s462
      %s480 = sphi 0, %s480
      %s482 = sphi 0, %s480
      %s483 = sphi 0, %s482
      %s497 = sphi 0, %s483
      %s501 = sphi 0, %s501
      %s503 = sphi 0, %s501
      %s504 = sphi 0, %s503
      %s518 = sphi 0, %s504
      %s524 = sphi 0, %s526
      %s527 = sphi 0, %s524
      %s528 = sphi 0, %s527
      %s544 = sphi 0, %s528
      %s550 = sphi 0, %s552
      %s553 = sphi 0, %s550
      %s554 = sphi 0, %s553
      %s570 = sphi 0, %s554
    $region4: #{decoder_forward.1} parent=1 // loop_header_branch
      %45 = sbr.rel (%p43) target = $region8
    $region5: #{decoder_forward.1} parent=1 // loop_body
      %s47 = ssub.s32 %s42, 1
      %s48 = ssub.s32 %s42, 2
      %s49 = sadd.s32 %s42, 1
      %s50 = ssub.s32 %s42, %s49
      %p51 = scmp.eq.s32.totalorder %s50, 0
      %s53 = sadd.s32 %s52, 1
      %s54 = scalar_select %p51, %s52, %s53
      %p57 = pneg %p51
      %p58 = scmp.eq.s32.totalorder %s42, 1
      %p59 = por %p57, %p58
      %p60 = scmp.ne.s32.totalorder %s52, %s55
      %p61 = scmp.eq.s32.totalorder %s42, 0
      %p62 = por %p60, %p61
      %p63 = scmp.ne.s32.totalorder %s52, %s55
      %p64 = scmp.eq.s32.totalorder %s47, 1
      %p65 = por %p63, %p64
      %p66 = scmp.ne.s32.totalorder %s55, %s56
      %p67 = scmp.eq.s32.totalorder %s47, 0
      %p68 = por %p66, %p67
      %p69 = scmp.ne.s32.totalorder %s55, %s56
      %p70 = scmp.eq.s32.totalorder %s48, 1
      %p71 = por %p69, %p70
      %p73 = scmp.ne.s32.totalorder %s56, %s72
      %p74 = scmp.eq.s32.totalorder %s48, 0
      %p75 = por %p73, %p74
      %s77 = sadd.s32 %s76, 1
      %p80 = scmp.eq.s32.totalorder %s42, 1
      %p81 = scmp.ne.s32.totalorder %s76, %s78
      %p82 = scmp.eq.s32.totalorder %s42, 0
      %p83 = por %p81, %p82
      %p84 = scmp.ne.s32.totalorder %s76, %s78
      %p85 = scmp.eq.s32.totalorder %s47, 1
      %p86 = por %p84, %p85
      %p87 = scmp.ne.s32.totalorder %s78, %s79
      %p88 = scmp.eq.s32.totalorder %s47, 0
      %p89 = por %p87, %p88
      %p90 = scmp.ne.s32.totalorder %s78, %s79
      %p91 = scmp.eq.s32.totalorder %s48, 1
      %p92 = por %p90, %p91
      %p94 = scmp.ne.s32.totalorder %s79, %s93
      %p95 = scmp.eq.s32.totalorder %s48, 0
      %p96 = por %p94, %p95
      %s97 = ssub.s32 %s42, %s49
      %p98 = scmp.eq.s32.totalorder %s97, 0
      %s100 = sadd.s32 %s99, 1
      %s101 = scalar_select %p98, %s99, %s100
      %p104 = pneg %p98
      %p105 = scmp.eq.s32.totalorder %s42, 1
      %p106 = por %p104, %p105
      %p107 = scmp.ne.s32.totalorder %s99, %s102
      %p108 = scmp.eq.s32.totalorder %s42, 0
      %p109 = por %p107, %p108
      %p110 = scmp.ne.s32.totalorder %s99, %s102
      %p111 = scmp.eq.s32.totalorder %s47, 1
      %p112 = por %p110, %p111
      %p113 = scmp.ne.s32.totalorder %s102, %s103
      %p114 = scmp.eq.s32.totalorder %s47, 0
      %p115 = por %p113, %p114
      %p116 = scmp.ne.s32.totalorder %s102, %s103
      %p117 = scmp.eq.s32.totalorder %s48, 1
      %p118 = por %p116, %p117
      %p120 = scmp.ne.s32.totalorder %s103, %s119
      %p121 = scmp.eq.s32.totalorder %s48, 0
      %p122 = por %p120, %p121
      %s124 = sadd.s32 %s123, 1
      %p127 = scmp.eq.s32.totalorder %s42, 1
      %p128 = scmp.ne.s32.totalorder %s123, %s125
      %p129 = scmp.eq.s32.totalorder %s42, 0
      %p130 = por %p128, %p129
      %p131 = scmp.ne.s32.totalorder %s123, %s125
      %p132 = scmp.eq.s32.totalorder %s47, 1
      %p133 = por %p131, %p132
      %p134 = scmp.ne.s32.totalorder %s125, %s126
      %p135 = scmp.eq.s32.totalorder %s47, 0
      %p136 = por %p134, %p135
      %p137 = scmp.ne.s32.totalorder %s125, %s126
      %p138 = scmp.eq.s32.totalorder %s48, 1
      %p139 = por %p137, %p138
      %p141 = scmp.ne.s32.totalorder %s126, %s140
      %p142 = scmp.eq.s32.totalorder %s48, 0
      %p143 = por %p141, %p142
      %s145 = sadd.s32 %s144, 1
      %p148 = scmp.eq.s32.totalorder %s42, 1
      %p149 = scmp.ne.s32.totalorder %s144, %s146
      %p150 = scmp.eq.s32.totalorder %s42, 0
      %p151 = por %p149, %p150
      %p152 = scmp.ne.s32.totalorder %s144, %s146
      %p153 = scmp.eq.s32.totalorder %s47, 1
      %p154 = por %p152, %p153
      %p155 = scmp.ne.s32.totalorder %s146, %s147
      %p156 = scmp.eq.s32.totalorder %s47, 0
      %p157 = por %p155, %p156
      %p158 = scmp.ne.s32.totalorder %s146, %s147
      %p159 = scmp.eq.s32.totalorder %s48, 1
      %p160 = por %p158, %p159
      %p162 = scmp.ne.s32.totalorder %s147, %s161
      %p163 = scmp.eq.s32.totalorder %s48, 0
      %p164 = por %p162, %p163
      %s166 = sadd.s32 %s165, 1
      %p169 = scmp.eq.s32.totalorder %s42, 1
      %p170 = scmp.ne.s32.totalorder %s165, %s167
      %p171 = scmp.eq.s32.totalorder %s42, 0
      %p172 = por %p170, %p171
      %p173 = scmp.ne.s32.totalorder %s165, %s167
      %p174 = scmp.eq.s32.totalorder %s47, 1
      %p175 = por %p173, %p174
      %p176 = scmp.ne.s32.totalorder %s167, %s168
      %p177 = scmp.eq.s32.totalorder %s47, 0
      %p178 = por %p176, %p177
      %p179 = scmp.ne.s32.totalorder %s167, %s168
      %p180 = scmp.eq.s32.totalorder %s48, 1
      %p181 = por %p179, %p180
      %p183 = scmp.ne.s32.totalorder %s168, %s182
      %p184 = scmp.eq.s32.totalorder %s48, 0
      %p185 = por %p183, %p184
      %s187 = sadd.s32 %s186, 1
      %p190 = scmp.eq.s32.totalorder %s42, 1
      %p191 = scmp.ne.s32.totalorder %s186, %s188
      %p192 = scmp.eq.s32.totalorder %s42, 0
      %p193 = por %p191, %p192
      %p194 = scmp.ne.s32.totalorder %s186, %s188
      %p195 = scmp.eq.s32.totalorder %s47, 1
      %p196 = por %p194, %p195
      %p197 = scmp.ne.s32.totalorder %s188, %s189
      %p198 = scmp.eq.s32.totalorder %s47, 0
      %p199 = por %p197, %p198
      %p200 = scmp.ne.s32.totalorder %s188, %s189
      %p201 = scmp.eq.s32.totalorder %s48, 1
      %p202 = por %p200, %p201
      %p204 = scmp.ne.s32.totalorder %s189, %s203
      %p205 = scmp.eq.s32.totalorder %s48, 0
      %p206 = por %p204, %p205
      %s208 = sadd.s32 %s207, 1
      %p211 = scmp.eq.s32.totalorder %s42, 1
      %p212 = scmp.ne.s32.totalorder %s207, %s209
      %p213 = scmp.eq.s32.totalorder %s42, 0
      %p214 = por %p212, %p213
      %p215 = scmp.ne.s32.totalorder %s207, %s209
      %p216 = scmp.eq.s32.totalorder %s47, 1
      %p217 = por %p215, %p216
      %p218 = scmp.ne.s32.totalorder %s209, %s210
      %p219 = scmp.eq.s32.totalorder %s47, 0
      %p220 = por %p218, %p219
      %p221 = scmp.ne.s32.totalorder %s209, %s210
      %p222 = scmp.eq.s32.totalorder %s48, 1
      %p223 = por %p221, %p222
      %p225 = scmp.ne.s32.totalorder %s210, %s224
      %p226 = scmp.eq.s32.totalorder %s48, 0
      %p227 = por %p225, %p226
      %s229 = sadd.s32 %s228, 1
      %p232 = scmp.eq.s32.totalorder %s42, 1
      %p233 = scmp.ne.s32.totalorder %s228, %s230
      %p234 = scmp.eq.s32.totalorder %s42, 0
      %p235 = por %p233, %p234
      %p236 = scmp.ne.s32.totalorder %s228, %s230
      %p237 = scmp.eq.s32.totalorder %s47, 1
      %p238 = por %p236, %p237
      %p239 = scmp.ne.s32.totalorder %s230, %s231
      %p240 = scmp.eq.s32.totalorder %s47, 0
      %p241 = por %p239, %p240
      %p242 = scmp.ne.s32.totalorder %s230, %s231
      %p243 = scmp.eq.s32.totalorder %s48, 1
      %p244 = por %p242, %p243
      %p246 = scmp.ne.s32.totalorder %s231, %s245
      %p247 = scmp.eq.s32.totalorder %s48, 0
      %p248 = por %p246, %p247
      %s250 = sadd.s32 %s249, 1
      %p253 = scmp.eq.s32.totalorder %s42, 1
      %p254 = scmp.ne.s32.totalorder %s249, %s251
      %p255 = scmp.eq.s32.totalorder %s42, 0
      %p256 = por %p254, %p255
      %p257 = scmp.ne.s32.totalorder %s249, %s251
      %p258 = scmp.eq.s32.totalorder %s47, 1
      %p259 = por %p257, %p258
      %p260 = scmp.ne.s32.totalorder %s251, %s252
      %p261 = scmp.eq.s32.totalorder %s47, 0
      %p262 = por %p260, %p261
      %p263 = scmp.ne.s32.totalorder %s251, %s252
      %p264 = scmp.eq.s32.totalorder %s48, 1
      %p265 = por %p263, %p264
      %p267 = scmp.ne.s32.totalorder %s252, %s266
      %p268 = scmp.eq.s32.totalorder %s48, 0
      %p269 = por %p267, %p268
      %s271 = sadd.s32 %s270, 1
      %p274 = scmp.eq.s32.totalorder %s42, 1
      %p275 = scmp.ne.s32.totalorder %s270, %s272
      %p276 = scmp.eq.s32.totalorder %s42, 0
      %p277 = por %p275, %p276
      %p278 = scmp.ne.s32.totalorder %s270, %s272
      %p279 = scmp.eq.s32.totalorder %s47, 1
      %p280 = por %p278, %p279
      %p281 = scmp.ne.s32.totalorder %s272, %s273
      %p282 = scmp.eq.s32.totalorder %s47, 0
      %p283 = por %p281, %p282
      %p284 = scmp.ne.s32.totalorder %s272, %s273
      %p285 = scmp.eq.s32.totalorder %s48, 1
      %p286 = por %p284, %p285
      %p288 = scmp.ne.s32.totalorder %s273, %s287
      %p289 = scmp.eq.s32.totalorder %s48, 0
      %p290 = por %p288, %p289
      %s292 = sadd.s32 %s291, 1
      %p295 = scmp.eq.s32.totalorder %s42, 1
      %p296 = scmp.ne.s32.totalorder %s291, %s293
      %p297 = scmp.eq.s32.totalorder %s42, 0
      %p298 = por %p296, %p297
      %p299 = scmp.ne.s32.totalorder %s291, %s293
      %p300 = scmp.eq.s32.totalorder %s47, 1
      %p301 = por %p299, %p300
      %p302 = scmp.ne.s32.totalorder %s293, %s294
      %p303 = scmp.eq.s32.totalorder %s47, 0
      %p304 = por %p302, %p303
      %p305 = scmp.ne.s32.totalorder %s293, %s294
      %p306 = scmp.eq.s32.totalorder %s48, 1
      %p307 = por %p305, %p306
      %p309 = scmp.ne.s32.totalorder %s294, %s308
      %p310 = scmp.eq.s32.totalorder %s48, 0
      %p311 = por %p309, %p310
      %s313 = sadd.s32 %s312, 1
      %p316 = scmp.eq.s32.totalorder %s42, 1
      %p317 = scmp.ne.s32.totalorder %s312, %s314
      %p318 = scmp.eq.s32.totalorder %s42, 0
      %p319 = por %p317, %p318
      %p320 = scmp.ne.s32.totalorder %s312, %s314
      %p321 = scmp.eq.s32.totalorder %s47, 1
      %p322 = por %p320, %p321
      %p323 = scmp.ne.s32.totalorder %s314, %s315
      %p324 = scmp.eq.s32.totalorder %s47, 0
      %p325 = por %p323, %p324
      %p326 = scmp.ne.s32.totalorder %s314, %s315
      %p327 = scmp.eq.s32.totalorder %s48, 1
      %p328 = por %p326, %p327
      %p330 = scmp.ne.s32.totalorder %s315, %s329
      %p331 = scmp.eq.s32.totalorder %s48, 0
      %p332 = por %p330, %p331
      %s334 = sadd.s32 %s333, 1
      %p337 = scmp.eq.s32.totalorder %s42, 1
      %p338 = scmp.ne.s32.totalorder %s333, %s335
      %p339 = scmp.eq.s32.totalorder %s42, 0
      %p340 = por %p338, %p339
      %p341 = scmp.ne.s32.totalorder %s333, %s335
      %p342 = scmp.eq.s32.totalorder %s47, 1
      %p343 = por %p341, %p342
      %p344 = scmp.ne.s32.totalorder %s335, %s336
      %p345 = scmp.eq.s32.totalorder %s47, 0
      %p346 = por %p344, %p345
      %p347 = scmp.ne.s32.totalorder %s335, %s336
      %p348 = scmp.eq.s32.totalorder %s48, 1
      %p349 = por %p347, %p348
      %p351 = scmp.ne.s32.totalorder %s336, %s350
      %p352 = scmp.eq.s32.totalorder %s48, 0
      %p353 = por %p351, %p352
      %s355 = sadd.s32 %s354, 1
      %p358 = scmp.eq.s32.totalorder %s42, 1
      %p359 = scmp.ne.s32.totalorder %s354, %s356
      %p360 = scmp.eq.s32.totalorder %s42, 0
      %p361 = por %p359, %p360
      %p362 = scmp.ne.s32.totalorder %s354, %s356
      %p363 = scmp.eq.s32.totalorder %s47, 1
      %p364 = por %p362, %p363
      %p365 = scmp.ne.s32.totalorder %s356, %s357
      %p366 = scmp.eq.s32.totalorder %s47, 0
      %p367 = por %p365, %p366
      %p368 = scmp.ne.s32.totalorder %s356, %s357
      %p369 = scmp.eq.s32.totalorder %s48, 1
      %p370 = por %p368, %p369
      %p372 = scmp.ne.s32.totalorder %s357, %s371
      %p373 = scmp.eq.s32.totalorder %s48, 0
      %p374 = por %p372, %p373
      %s376 = sadd.s32 %s375, 1
      %p379 = scmp.eq.s32.totalorder %s42, 1
      %p380 = scmp.ne.s32.totalorder %s375, %s377
      %p381 = scmp.eq.s32.totalorder %s42, 0
      %p382 = por %p380, %p381
      %p383 = scmp.ne.s32.totalorder %s375, %s377
      %p384 = scmp.eq.s32.totalorder %s47, 1
      %p385 = por %p383, %p384
      %p386 = scmp.ne.s32.totalorder %s377, %s378
      %p387 = scmp.eq.s32.totalorder %s47, 0
      %p388 = por %p386, %p387
      %p389 = scmp.ne.s32.totalorder %s377, %s378
      %p390 = scmp.eq.s32.totalorder %s48, 1
      %p391 = por %p389, %p390
      %p393 = scmp.ne.s32.totalorder %s378, %s392
      %p394 = scmp.eq.s32.totalorder %s48, 0
      %p395 = por %p393, %p394
      %s397 = sadd.s32 %s396, 1
      %p400 = scmp.eq.s32.totalorder %s42, 1
      %p401 = scmp.ne.s32.totalorder %s396, %s398
      %p402 = scmp.eq.s32.totalorder %s42, 0
      %p403 = por %p401, %p402
      %p404 = scmp.ne.s32.totalorder %s396, %s398
      %p405 = scmp.eq.s32.totalorder %s47, 1
      %p406 = por %p404, %p405
      %p407 = scmp.ne.s32.totalorder %s398, %s399
      %p408 = scmp.eq.s32.totalorder %s47, 0
      %p409 = por %p407, %p408
      %p410 = scmp.ne.s32.totalorder %s398, %s399
      %p411 = scmp.eq.s32.totalorder %s48, 1
      %p412 = por %p410, %p411
      %p414 = scmp.ne.s32.totalorder %s399, %s413
      %p415 = scmp.eq.s32.totalorder %s48, 0
      %p416 = por %p414, %p415
      %s418 = sadd.s32 %s417, 1
      %p421 = scmp.eq.s32.totalorder %s42, 1
      %p422 = scmp.ne.s32.totalorder %s417, %s419
      %p423 = scmp.eq.s32.totalorder %s42, 0
      %p424 = por %p422, %p423
      %p425 = scmp.ne.s32.totalorder %s417, %s419
      %p426 = scmp.eq.s32.totalorder %s47, 1
      %p427 = por %p425, %p426
      %p428 = scmp.ne.s32.totalorder %s419, %s420
      %p429 = scmp.eq.s32.totalorder %s47, 0
      %p430 = por %p428, %p429
      %p431 = scmp.ne.s32.totalorder %s419, %s420
      %p432 = scmp.eq.s32.totalorder %s48, 1
      %p433 = por %p431, %p432
      %p435 = scmp.ne.s32.totalorder %s420, %s434
      %p436 = scmp.eq.s32.totalorder %s48, 0
      %p437 = por %p435, %p436
      %s439 = sadd.s32 %s438, 1
      %p442 = scmp.eq.s32.totalorder %s42, 1
      %p443 = scmp.ne.s32.totalorder %s438, %s440
      %p444 = scmp.eq.s32.totalorder %s42, 0
      %p445 = por %p443, %p444
      %p446 = scmp.ne.s32.totalorder %s438, %s440
      %p447 = scmp.eq.s32.totalorder %s47, 1
      %p448 = por %p446, %p447
      %p449 = scmp.ne.s32.totalorder %s440, %s441
      %p450 = scmp.eq.s32.totalorder %s47, 0
      %p451 = por %p449, %p450
      %p452 = scmp.ne.s32.totalorder %s440, %s441
      %p453 = scmp.eq.s32.totalorder %s48, 1
      %p454 = por %p452, %p453
      %p456 = scmp.ne.s32.totalorder %s441, %s455
      %p457 = scmp.eq.s32.totalorder %s48, 0
      %p458 = por %p456, %p457
      %s460 = sadd.s32 %s459, 1
      %p463 = scmp.eq.s32.totalorder %s42, 1
      %p464 = scmp.ne.s32.totalorder %s459, %s461
      %p465 = scmp.eq.s32.totalorder %s42, 0
      %p466 = por %p464, %p465
      %p467 = scmp.ne.s32.totalorder %s459, %s461
      %p468 = scmp.eq.s32.totalorder %s47, 1
      %p469 = por %p467, %p468
      %p470 = scmp.ne.s32.totalorder %s461, %s462
      %p471 = scmp.eq.s32.totalorder %s47, 0
      %p472 = por %p470, %p471
      %p473 = scmp.ne.s32.totalorder %s461, %s462
      %p474 = scmp.eq.s32.totalorder %s48, 1
      %p475 = por %p473, %p474
      %p477 = scmp.ne.s32.totalorder %s462, %s476
      %p478 = scmp.eq.s32.totalorder %s48, 0
      %p479 = por %p477, %p478
      %s481 = sadd.s32 %s480, 1
      %p484 = scmp.eq.s32.totalorder %s42, 1
      %p485 = scmp.ne.s32.totalorder %s480, %s482
      %p486 = scmp.eq.s32.totalorder %s42, 0
      %p487 = por %p485, %p486
      %p488 = scmp.ne.s32.totalorder %s480, %s482
      %p489 = scmp.eq.s32.totalorder %s47, 1
      %p490 = por %p488, %p489
      %p491 = scmp.ne.s32.totalorder %s482, %s483
      %p492 = scmp.eq.s32.totalorder %s47, 0
      %p493 = por %p491, %p492
      %p494 = scmp.ne.s32.totalorder %s482, %s483
      %p495 = scmp.eq.s32.totalorder %s48, 1
      %p496 = por %p494, %p495
      %p498 = scmp.ne.s32.totalorder %s483, %s497
      %p499 = scmp.eq.s32.totalorder %s48, 0
      %p500 = por %p498, %p499
      %s502 = sadd.s32 %s501, 1
      %p505 = scmp.eq.s32.totalorder %s42, 1
      %p506 = scmp.ne.s32.totalorder %s501, %s503
      %p507 = scmp.eq.s32.totalorder %s42, 0
      %p508 = por %p506, %p507
      %p509 = scmp.ne.s32.totalorder %s501, %s503
      %p510 = scmp.eq.s32.totalorder %s47, 1
      %p511 = por %p509, %p510
      %p512 = scmp.ne.s32.totalorder %s503, %s504
      %p513 = scmp.eq.s32.totalorder %s47, 0
      %p514 = por %p512, %p513
      %p515 = scmp.ne.s32.totalorder %s503, %s504
      %p516 = scmp.eq.s32.totalorder %s48, 1
      %p517 = por %p515, %p516
      %p519 = scmp.ne.s32.totalorder %s504, %s518
      %p520 = scmp.eq.s32.totalorder %s48, 0
      %p521 = por %p519, %p520
      %s522 = ssub.s32 %s42, %s49
      %p523 = scmp.eq.s32.totalorder %s522, 0
      %s525 = sadd.s32 %s524, 1
      %s526 = scalar_select %p523, %s524, %s525
      %p529 = pneg %p523
      %p530 = scmp.eq.s32.totalorder %s42, 1
      %p531 = por %p529, %p530
      %p532 = scmp.ne.s32.totalorder %s524, %s527
      %p533 = scmp.eq.s32.totalorder %s42, 0
      %p534 = por %p532, %p533
      %p535 = scmp.ne.s32.totalorder %s524, %s527
      %p536 = scmp.eq.s32.totalorder %s47, 1
      %p537 = por %p535, %p536
      %p538 = scmp.ne.s32.totalorder %s527, %s528
      %p539 = scmp.eq.s32.totalorder %s47, 0
      %p540 = por %p538, %p539
      %p541 = scmp.ne.s32.totalorder %s527, %s528
      %p542 = scmp.eq.s32.totalorder %s48, 1
      %p543 = por %p541, %p542
      %p545 = scmp.ne.s32.totalorder %s528, %s544
      %p546 = scmp.eq.s32.totalorder %s48, 0
      %p547 = por %p545, %p546
      %s548 = ssub.s32 %s42, %s49
      %p549 = scmp.eq.s32.totalorder %s548, 0
      %s551 = sadd.s32 %s550, 1
      %s552 = scalar_select %p549, %s550, %s551
      %p555 = pneg %p549
      %p556 = scmp.eq.s32.totalorder %s42, 1
      %p557 = por %p555, %p556
      %p558 = scmp.ne.s32.totalorder %s550, %s553
      %p559 = scmp.eq.s32.totalorder %s42, 0
      %p560 = por %p558, %p559
      %p561 = scmp.ne.s32.totalorder %s550, %s553
      %p562 = scmp.eq.s32.totalorder %s47, 1
      %p563 = por %p561, %p562
      %p564 = scmp.ne.s32.totalorder %s553, %s554
      %p565 = scmp.eq.s32.totalorder %s47, 0
      %p566 = por %p564, %p565
      %p567 = scmp.ne.s32.totalorder %s553, %s554
      %p568 = scmp.eq.s32.totalorder %s48, 1
      %p569 = por %p567, %p568
      %p571 = scmp.ne.s32.totalorder %s554, %s570
      %p572 = scmp.eq.s32.totalorder %s48, 0
      %p573 = por %p571, %p572
      %p574 = scmp.le.s32.totalorder 1, %s42
      %p575 = scmp.lt.s32.totalorder %s42, 3
      %p576 = pnand %p574, %p575
      %p577 = pneg %p576
      // Predicated region
      $region9: #{decoder_forward.1} parent=5 // pred_check
        _
      $region10: #{decoder_forward.1} parent=5 // pred_check_branch
        %579 = sbr.rel (%p576) target = $region12
      $region11: #{decoder_forward.1} parent=5 // pred_region
        %s580 = ssub.s32 %s42, 1
        // Predicated region
        $region13: #{decoder_forward.1} parent=11 // pred_check
          %p581 = pneg %p89
        $region14: #{decoder_forward.1} parent=11 // pred_check_branch
          %583 = sbr.rel (%p581) target = $region16
        $region15: #{decoder_forward.1} parent=11 // pred_region
          _
        $region16: #{decoder_forward.1} parent=11 // pred_fallthru
          _
        // Predicated region
        $region17: #{decoder_forward.1} parent=11 // pred_check
          %p584 = pneg %p136
        $region18: #{decoder_forward.1} parent=11 // pred_check_branch
          %586 = sbr.rel (%p584) target = $region20
        $region19: #{decoder_forward.1} parent=11 // pred_region
          _
        $region20: #{decoder_forward.1} parent=11 // pred_fallthru
          _
        // Predicated region
        $region21: #{decoder_forward.1} parent=11 // pred_check
          %p587 = pneg %p157
        $region22: #{decoder_forward.1} parent=11 // pred_check_branch
          %589 = sbr.rel (%p587) target = $region24
        $region23: #{decoder_forward.1} parent=11 // pred_region
          _
        $region24: #{decoder_forward.1} parent=11 // pred_fallthru
          _
        // Predicated region
        $region25: #{decoder_forward.1} parent=11 // pred_check
          %p590 = pneg %p178
        $region26: #{decoder_forward.1} parent=11 // pred_check_branch
          %592 = sbr.rel (%p590) target = $region28
        $region27: #{decoder_forward.1} parent=11 // pred_region
          %594 = vsyncadd [#allocation3], 0
          %s595 = sshll.u32 %s5, 4
          %s596 = int_to_ptr.hbm [resolvable:$true] %s595
          %s597 = sshll.u32 [#allocation2], 4
          %s598 = int_to_ptr.vmem [resolvable:$true] %s597
          %603 = dma.hbm_to_vmem [thread:$0]  %s596, 32, %s598, [#allocation3], 16, 16, 1
        $region28: #{decoder_forward.1} parent=11 // pred_fallthru
          _
        // Predicated region
        $region29: #{decoder_forward.1} parent=11 // pred_check
          %p604 = pneg %p199
        $region30: #{decoder_forward.1} parent=11 // pred_check_branch
          %606 = sbr.rel (%p604) target = $region32
        $region31: #{decoder_forward.1} parent=11 // pred_region
          _
        $region32: #{decoder_forward.1} parent=11 // pred_fallthru
          _
        // Predicated region
        $region33: #{decoder_forward.1} parent=11 // pred_check
          %p607 = pneg %p220
        $region34: #{decoder_forward.1} parent=11 // pred_check_branch
          %609 = sbr.rel (%p607) target = $region36
        $region35: #{decoder_forward.1} parent=11 // pred_region
          %611 = vsyncadd [#allocation6], 0
          %s612 = sshll.u32 %s7, 4
          %s613 = int_to_ptr.hbm [resolvable:$true] %s612
          %s614 = sshll.u32 [#allocation5], 4
          %s615 = int_to_ptr.vmem [resolvable:$true] %s614
          %620 = dma.hbm_to_vmem [thread:$0]  %s613, 32, %s615, [#allocation6], 16, 16, 1
        $region36: #{decoder_forward.1} parent=11 // pred_fallthru
          _
        // Predicated region
        $region37: #{decoder_forward.1} parent=11 // pred_check
          %p621 = pneg %p241
        $region38: #{decoder_forward.1} parent=11 // pred_check_branch
          %623 = sbr.rel (%p621) target = $region40
        $region39: #{decoder_forward.1} parent=11 // pred_region
          _
        $region40: #{decoder_forward.1} parent=11 // pred_fallthru
          _
        // Predicated region
        $region41: #{decoder_forward.1} parent=11 // pred_check
          %p624 = pneg %p262
        $region42: #{decoder_forward.1} parent=11 // pred_check_branch
          %626 = sbr.rel (%p624) target = $region44
        $region43: #{decoder_forward.1} parent=11 // pred_region
          %628 = vsyncadd [#allocation6], 0
          %s629 = sshll.u32 %s9, 4
          %s630 = int_to_ptr.hbm [resolvable:$true] %s629
          %s631 = sshll.u32 [#allocation7], 4
          %s632 = int_to_ptr.vmem [resolvable:$true] %s631
          %637 = dma.hbm_to_vmem [thread:$0]  %s630, 32, %s632, [#allocation6], 16, 16, 1
        $region44: #{decoder_forward.1} parent=11 // pred_fallthru
          _
        // Predicated region
        $region45: #{decoder_forward.1} parent=11 // pred_check
          %p638 = pneg %p283
        $region46: #{decoder_forward.1} parent=11 // pred_check_branch
          %640 = sbr.rel (%p638) target = $region48
        $region47: #{decoder_forward.1} parent=11 // pred_region
          _
        $region48: #{decoder_forward.1} parent=11 // pred_fallthru
          _
        // Predicated region
        $region49: #{decoder_forward.1} parent=11 // pred_check
          %p641 = pneg %p304
        $region50: #{decoder_forward.1} parent=11 // pred_check_branch
          %643 = sbr.rel (%p641) target = $region52
        $region51: #{decoder_forward.1} parent=11 // pred_region
          %645 = vsyncadd [#allocation9], 0
          %s646 = sshll.u32 %s11, 4
          %s647 = int_to_ptr.hbm [resolvable:$true] %s646
          %s648 = sshll.u32 [#allocation8], 4
          %s649 = int_to_ptr.vmem [resolvable:$true] %s648
          %654 = dma.hbm_to_vmem [thread:$0]  %s647, 32, %s649, [#allocation9], 16, 16, 1
        $region52: #{decoder_forward.1} parent=11 // pred_fallthru
          _
        // Predicated region
        $region53: #{decoder_forward.1} parent=11 // pred_check
          %p655 = pneg %p325
        $region54: #{decoder_forward.1} parent=11 // pred_check_branch
          %657 = sbr.rel (%p655) target = $region56
        $region55: #{decoder_forward.1} parent=11 // pred_region
          _
        $region56: #{decoder_forward.1} parent=11 // pred_fallthru
          _
        // Predicated region
        $region57: #{decoder_forward.1} parent=11 // pred_check
          %p658 = pneg %p346
        $region58: #{decoder_forward.1} parent=11 // pred_check_branch
          %660 = sbr.rel (%p658) target = $region60
        $region59: #{decoder_forward.1} parent=11 // pred_region
          %662 = vsyncadd [#allocation9], 0
          %s663 = sshll.u32 %s13, 4
          %s664 = int_to_ptr.hbm [resolvable:$true] %s663
          %s665 = sshll.u32 [#allocation10], 4
          %s666 = int_to_ptr.vmem [resolvable:$true] %s665
          %671 = dma.hbm_to_vmem [thread:$0]  %s664, 32, %s666, [#allocation9], 16, 16, 1
        $region60: #{decoder_forward.1} parent=11 // pred_fallthru
          _
        // Predicated region
        $region61: #{decoder_forward.1} parent=11 // pred_check
          %p672 = pneg %p367
        $region62: #{decoder_forward.1} parent=11 // pred_check_branch
          %674 = sbr.rel (%p672) target = $region64
        $region63: #{decoder_forward.1} parent=11 // pred_region
          %676 = vsyncadd [#allocation12], 0
          %s677 = sshll.u32 %s14, 4
          %s678 = int_to_ptr.hbm [resolvable:$true] %s677
          %s679 = sshll.u32 [#allocation11], 4
          %s680 = int_to_ptr.vmem [resolvable:$true] %s679
          %685 = dma.hbm_to_vmem [thread:$0]  %s678, 32, %s680, [#allocation12], 16, 16, 1
        $region64: #{decoder_forward.1} parent=11 // pred_fallthru
          _
        // Predicated region
        $region65: #{decoder_forward.1} parent=11 // pred_check
          %p686 = pneg %p388
        $region66: #{decoder_forward.1} parent=11 // pred_check_branch
          %688 = sbr.rel (%p686) target = $region68
        $region67: #{decoder_forward.1} parent=11 // pred_region
          %690 = vsyncadd [#allocation12], 0
          %s691 = sshll.u32 %s15, 4
          %s692 = int_to_ptr.hbm [resolvable:$true] %s691
          %s693 = sshll.u32 [#allocation13], 4
          %s694 = int_to_ptr.vmem [resolvable:$true] %s693
          %699 = dma.hbm_to_vmem [thread:$0]  %s692, 32, %s694, [#allocation12], 16, 16, 1
        $region68: #{decoder_forward.1} parent=11 // pred_fallthru
          _
        // Predicated region
        $region69: #{decoder_forward.1} parent=11 // pred_check
          %p700 = pneg %p409
        $region70: #{decoder_forward.1} parent=11 // pred_check_branch
          %702 = sbr.rel (%p700) target = $region72
        $region71: #{decoder_forward.1} parent=11 // pred_region
          _
        $region72: #{decoder_forward.1} parent=11 // pred_fallthru
          _
        // Predicated region
        $region73: #{decoder_forward.1} parent=11 // pred_check
          %p703 = pneg %p430
        $region74: #{decoder_forward.1} parent=11 // pred_check_branch
          %705 = sbr.rel (%p703) target = $region76
        $region75: #{decoder_forward.1} parent=11 // pred_region
          %707 = vsyncadd [#allocation15], 0
          %s708 = sshll.u32 %s17, 4
          %s709 = int_to_ptr.hbm [resolvable:$true] %s708
          %s710 = sshll.u32 [#allocation14], 4
          %s711 = int_to_ptr.vmem [resolvable:$true] %s710
          %716 = dma.hbm_to_vmem [thread:$0]  %s709, 32, %s711, [#allocation15], 16, 16, 1
        $region76: #{decoder_forward.1} parent=11 // pred_fallthru
          _
        // Predicated region
        $region77: #{decoder_forward.1} parent=11 // pred_check
          %p717 = pneg %p451
        $region78: #{decoder_forward.1} parent=11 // pred_check_branch
          %719 = sbr.rel (%p717) target = $region80
        $region79: #{decoder_forward.1} parent=11 // pred_region
          _
        $region80: #{decoder_forward.1} parent=11 // pred_fallthru
          _
        // Predicated region
        $region81: #{decoder_forward.1} parent=11 // pred_check
          %p720 = pneg %p472
        $region82: #{decoder_forward.1} parent=11 // pred_check_branch
          %722 = sbr.rel (%p720) target = $region84
        $region83: #{decoder_forward.1} parent=11 // pred_region
          %724 = vsyncadd [#allocation15], 0
          %s725 = sshll.u32 %s19, 4
          %s726 = int_to_ptr.hbm [resolvable:$true] %s725
          %s727 = sshll.u32 [#allocation16], 4
          %s728 = int_to_ptr.vmem [resolvable:$true] %s727
          %733 = dma.hbm_to_vmem [thread:$0]  %s726, 32, %s728, [#allocation15], 16, 16, 1
        $region84: #{decoder_forward.1} parent=11 // pred_fallthru
          _
        // Predicated region
        $region85: #{decoder_forward.1} parent=11 // pred_check
          %p734 = pneg %p493
        $region86: #{decoder_forward.1} parent=11 // pred_check_branch
          %736 = sbr.rel (%p734) target = $region88
        $region87: #{decoder_forward.1} parent=11 // pred_region
          %738 = vsyncadd [#allocation18], 0
          %s739 = sshll.u32 %s20, 4
          %s740 = int_to_ptr.hbm [resolvable:$true] %s739
          %s741 = sshll.u32 [#allocation17], 4
          %s742 = int_to_ptr.vmem [resolvable:$true] %s741
          %747 = dma.hbm_to_vmem [thread:$0]  %s740, 512, %s742, [#allocation18], 128, 128, 8
        $region88: #{decoder_forward.1} parent=11 // pred_fallthru
          _
        // Predicated region
        $region89: #{decoder_forward.1} parent=11 // pred_check
          %p748 = pneg %p514
        $region90: #{decoder_forward.1} parent=11 // pred_check_branch
          %750 = sbr.rel (%p748) target = $region92
        $region91: #{decoder_forward.1} parent=11 // pred_region
          %752 = vsyncadd [#allocation18], 0
          %s754 = sshll.u32 %s21, 4
          %s755 = int_to_ptr.hbm [resolvable:$true] %s754
          %s756 = sshll.u32 [#allocation19], 4
          %s757 = int_to_ptr.vmem [resolvable:$true] %s756
          %759 = dma.hbm_to_vmem [thread:$0]  %s755, 16, %s757, [#allocation18]
        $region92: #{decoder_forward.1} parent=11 // pred_fallthru
          _
      $region12: #{decoder_forward.1} parent=5 // pred_fallthru
        _
      %p760 = scmp.lt.s32.totalorder %s42, 2
      // Predicated region
      $region93: #{decoder_forward.1} parent=5 // pred_check
        %p761 = pneg %p760
      $region94: #{decoder_forward.1} parent=5 // pred_check_branch
        %763 = sbr.rel (%p761) target = $region96
      $region95: #{decoder_forward.1} parent=5 // pred_region
        // Predicated region
        $region97: #{decoder_forward.1} parent=95 // pred_check
          %p764 = pneg %p62
        $region98: #{decoder_forward.1} parent=95 // pred_check_branch
          %766 = sbr.rel (%p764) target = $region100
        $region99: #{decoder_forward.1} parent=95 // pred_region
          %p767 = scmp.lt.s32.totalorder %s42, 1
          %s768 = scalar_select %p767, %s42, 1
          %s769 = smul.addr %s768, 8
          %s770 = scalar_lea.vmem %s0, %s769
        $region100: #{decoder_forward.1} parent=95 // pred_fallthru
          _
        // Predicated region
        $region101: #{decoder_forward.1} parent=95 // pred_check
          %p771 = pneg %p109
        $region102: #{decoder_forward.1} parent=95 // pred_check_branch
          %773 = sbr.rel (%p771) target = $region104
        $region103: #{decoder_forward.1} parent=95 // pred_region
          %p774 = scmp.lt.s32.totalorder %s42, 1
          %s775 = scalar_select %p774, %s42, 1
          %s776 = smul.addr %s775, 2
          %s777 = smul.addr %s776, 8
          %s778 = scalar_lea.vmem %s2, %s777
        $region104: #{decoder_forward.1} parent=95 // pred_fallthru
          _
      $region96: #{decoder_forward.1} parent=5 // pred_fallthru
        _
      %p779 = scmp.le.s32.totalorder 1, %s42
      %p780 = scmp.lt.s32.totalorder %s42, 3
      %p781 = pnand %p779, %p780
      %p782 = pneg %p781
      // Predicated region
      $region105: #{decoder_forward.1} parent=5 // pred_check
        _
      $region106: #{decoder_forward.1} parent=5 // pred_check_branch
        %784 = sbr.rel (%p781) target = $region108
      $region107: #{decoder_forward.1} parent=5 // pred_region
        %s785 = ssub.s32 %s42, 1
        // Predicated region
        $region109: #{decoder_forward.1} parent=107 // pred_check
          %p786 = pneg %p178
        $region110: #{decoder_forward.1} parent=107 // pred_check_branch
          %788 = sbr.rel (%p786) target = $region112
        $region111: #{decoder_forward.1} parent=107 // pred_region
          %790 = dma.done [#allocation3], 32
        $region112: #{decoder_forward.1} parent=107 // pred_fallthru
          _
        // Predicated region
        $region113: #{decoder_forward.1} parent=107 // pred_check
          %p791 = pneg %p220
        $region114: #{decoder_forward.1} parent=107 // pred_check_branch
          %793 = sbr.rel (%p791) target = $region116
        $region115: #{decoder_forward.1} parent=107 // pred_region
          %795 = dma.done [#allocation6], 32
        $region116: #{decoder_forward.1} parent=107 // pred_fallthru
          _
        // Predicated region
        $region117: #{decoder_forward.1} parent=107 // pred_check
          %p796 = pneg %p262
        $region118: #{decoder_forward.1} parent=107 // pred_check_branch
          %798 = sbr.rel (%p796) target = $region120
        $region119: #{decoder_forward.1} parent=107 // pred_region
          %800 = dma.done [#allocation6], 32
        $region120: #{decoder_forward.1} parent=107 // pred_fallthru
          _
        // Predicated region
        $region121: #{decoder_forward.1} parent=107 // pred_check
          %p801 = pneg %p304
        $region122: #{decoder_forward.1} parent=107 // pred_check_branch
          %803 = sbr.rel (%p801) target = $region124
        $region123: #{decoder_forward.1} parent=107 // pred_region
          %805 = dma.done [#allocation9], 32
        $region124: #{decoder_forward.1} parent=107 // pred_fallthru
          _
        // Predicated region
        $region125: #{decoder_forward.1} parent=107 // pred_check
          %p806 = pneg %p346
        $region126: #{decoder_forward.1} parent=107 // pred_check_branch
          %808 = sbr.rel (%p806) target = $region128
        $region127: #{decoder_forward.1} parent=107 // pred_region
          %810 = dma.done [#allocation9], 32
        $region128: #{decoder_forward.1} parent=107 // pred_fallthru
          _
        // Predicated region
        $region129: #{decoder_forward.1} parent=107 // pred_check
          %p811 = pneg %p367
        $region130: #{decoder_forward.1} parent=107 // pred_check_branch
          %813 = sbr.rel (%p811) target = $region132
        $region131: #{decoder_forward.1} parent=107 // pred_region
          %815 = dma.done [#allocation12], 32
        $region132: #{decoder_forward.1} parent=107 // pred_fallthru
          _
        // Predicated region
        $region133: #{decoder_forward.1} parent=107 // pred_check
          %p816 = pneg %p388
        $region134: #{decoder_forward.1} parent=107 // pred_check_branch
          %818 = sbr.rel (%p816) target = $region136
        $region135: #{decoder_forward.1} parent=107 // pred_region
          %820 = dma.done [#allocation12], 32
        $region136: #{decoder_forward.1} parent=107 // pred_fallthru
          _
        // Predicated region
        $region137: #{decoder_forward.1} parent=107 // pred_check
          %p821 = pneg %p430
        $region138: #{decoder_forward.1} parent=107 // pred_check_branch
          %823 = sbr.rel (%p821) target = $region140
        $region139: #{decoder_forward.1} parent=107 // pred_region
          %825 = dma.done [#allocation15], 32
        $region140: #{decoder_forward.1} parent=107 // pred_fallthru
          _
        // Predicated region
        $region141: #{decoder_forward.1} parent=107 // pred_check
          %p826 = pneg %p472
        $region142: #{decoder_forward.1} parent=107 // pred_check_branch
          %828 = sbr.rel (%p826) target = $region144
        $region143: #{decoder_forward.1} parent=107 // pred_region
          %830 = dma.done [#allocation15], 32
        $region144: #{decoder_forward.1} parent=107 // pred_fallthru
          _
        // Predicated region
        $region145: #{decoder_forward.1} parent=107 // pred_check
          %p831 = pneg %p493
        $region146: #{decoder_forward.1} parent=107 // pred_check_branch
          %833 = sbr.rel (%p831) target = $region148
        $region147: #{decoder_forward.1} parent=107 // pred_region
          %835 = dma.done [#allocation18], 512
        $region148: #{decoder_forward.1} parent=107 // pred_fallthru
          _
        // Predicated region
        $region149: #{decoder_forward.1} parent=107 // pred_check
          %p836 = pneg %p514
        $region150: #{decoder_forward.1} parent=107 // pred_check_branch
          %838 = sbr.rel (%p836) target = $region152
        $region151: #{decoder_forward.1} parent=107 // pred_region
          %840 = dma.done [#allocation18], 16
        $region152: #{decoder_forward.1} parent=107 // pred_fallthru
          _
        %p841 = scmp.lt.s32.totalorder %s47, 1
        %s842 = scalar_select %p841, %s47, 1
        %s843 = smul.addr %s842, 8
        %s844 = scalar_lea.vmem %s0, %s843
        %p845 = pneg %p68
        %p846 = pneg %p65
        %p847 = pneg %p89
        %p848 = pneg %p86
        %p849 = scmp.lt.s32.totalorder %s47, 1
        %s850 = scalar_select %p849, %s47, 1
        %s851 = smul.addr %s850, 2
        %s852 = smul.addr %s851, 8
        %s853 = scalar_lea.vmem %s2, %s852
        %p854 = pneg %p115
        %p855 = pneg %p112
        %p856 = pneg %p136
        %p857 = pneg %p133
        %p858 = pneg %p157
        %p859 = pneg %p154
        %p860 = pneg %p178
        %p861 = pneg %p175
        %p862 = pneg %p199
        %p863 = pneg %p196
        %p864 = pneg %p220
        %p865 = pneg %p217
        %p866 = pneg %p241
        %p867 = pneg %p238
        %p868 = pneg %p262
        %p869 = pneg %p259
        %p870 = pneg %p283
        %p871 = pneg %p280
        %p872 = pneg %p304
        %p873 = pneg %p301
        %p874 = pneg %p325
        %p875 = pneg %p322
        %p876 = pneg %p346
        %p877 = pneg %p343
        %p878 = pneg %p367
        %p879 = pneg %p364
        %p880 = pneg %p388
        %p881 = pneg %p385
        %p882 = pneg %p409
        %p883 = pneg %p406
        %p884 = pneg %p430
        %p885 = pneg %p427
        %p886 = pneg %p451
        %p887 = pneg %p448
        %p888 = pneg %p472
        %p889 = pneg %p469
        %p890 = pneg %p493
        %p891 = pneg %p490
        %p892 = pneg %p514
        %p893 = pneg %p511
        %p894 = pneg %p540
        %p895 = pneg %p537
        %s896 = sand.u32 %s527, 1
        %s897 = scalar_lea.sflag [#allocation4], %s896
        %s898 = sand.u32 %s527, 1
        %s899 = smul.addr %s898, 8
        %s900 = scalar_lea.vmem [#allocation20], %s899
        %p901 = pneg %p566
        %p902 = pneg %p563
        %s903 = sand.u32 %s553, 1
        %s904 = scalar_lea.sflag [#allocation22], %s903
        %s905 = sand.u32 %s553, 1
        %s906 = smul.addr %s905, 32
        %s907 = scalar_lea.vmem [#allocation21], %s906
        %p908 = scmp.lt.s32.totalorder %s47, 1
        %s909 = scalar_select %p908, %s47, 1
        %s910 = smul.addr %s909, 8
        %s911 = scalar_lea.vmem %s0, %s910
        %p912 = scmp.lt.s32.totalorder %s47, 1
        %s913 = scalar_select %p912, %s47, 1
        %s914 = smul.addr %s913, 2
        %s915 = smul.addr %s914, 8
        %s916 = scalar_lea.vmem %s2, %s915
        %v917 = vld [vmem:[%s911] sm:$0xff]
        %v918 = vlaneseq
        %v919 = vand.u32 %v918, 127
        %920 = vset.pattern.permute.xlu0 0
        %921 = vperm.xlu0 %920, %v917
        %v922 = vpop.permute.xlu0 %921
        %vm923 = vcmp.eq.s32.totalorder %v919, %v922
        %v924 = vsel %vm923, 1, 0
        %v925 = vcvt.s32.f32 %v924
        %v926 = vld [vmem:[%s3] sm:$0xff]
        %v927 = vld [vmem:[%s3 + $0x8] sm:$0xff]
        %v928 = vld [vmem:[%s3 + $0x10] sm:$0xff]
        %v929 = vld [vmem:[%s3 + $0x18] sm:$0xff]
        %v930 = vld [vmem:[%s3 + $0x20] sm:$0xff]
        %v931 = vld [vmem:[%s3 + $0x28] sm:$0xff]
        %v932 = vld [vmem:[%s3 + $0x30] sm:$0x3]
        %vm933 = vcmask 408576
        %v935 = vsel %vm933, %v925, 0
        %vm937 = vcmask 1041408
        %v939 = vsel %vm937, %v932, 0
        %941 = vmatpush.msra.mxu0 0.0
        %942 = vmatpush.msra.mxu0 0.0
        %943 = vmatpush.msra.mxu0 0.0
        %944 = vmatpush.msra.mxu0 0.0
        %945 = vmatpush.msra.mxu0 0.0
        %946 = vmatpush.msra.mxu0 0.0
        %947 = vmatpush.msra.mxu0 0.0
        %948 = vmatpush.msra.mxu0 0.0
        %949 = vmatpush.msra.mxu0 0.0
        %950 = vmatpush.msra.mxu0 %v939
        %951 = vmatpush.msra.mxu0 %v931
        %952 = vmatpush.msra.mxu0 %v930
        %953 = vmatpush.msra.mxu0 %v929
        %954 = vmatpush.msra.mxu0 %v928
        %955 = vmatpush.msra.mxu0 %v927
        %956 = vmatpush.msra.mxu0 %v926
        %957 = vmatmul.f32.gmra.mxu0 %v935
        %v958 = vpop.f32.mrf.mxu0
        %v959 = vadd.f32 0.0, %v958
        %960 = vdwg.mxu0
        %v961 = vmul.f32 %v959, 5.656854
        %v962 = vld [vmem:[%s1] sm:$0xff]
        %v963 = vadd.f32 %v961, %v962
        %v964 = vld [vmem:[%s916] sm:$0xff]
        %v965 = vld [vmem:[%s916 + $0x8] sm:$0x3]
        %v966 = vlaneseq
        %v967 = vshrl.u32 %v966, 7
        %vm968 = vcmp.le.s32.totalorder %v919, %v967
        %vm969 = vcmp.ne.s32.totalorder %v917, 1
        %v970 = vsel %vm969, 1, 0
        %971 = vset.pattern.permute.xlu0 0
        %972 = vperm.xlu0 %971, %v970
        %v973 = vpop.permute.xlu0 %972
        %vm974 = vcmp.eq.s32.totalorder %v973, 1
        %vm975 = vmand %vm968, %vm974
        %v976 = vld [vmem:[#allocation11] sm:$0x1]
        %v977 = vld [vmem:[#allocation13] sm:$0x1]
        %v978 = vld [vmem:[%s4] sm:$0xff]
        %v979 = vld [vmem:[%s4 + $0x8] sm:$0xff]
        %v980 = vld [vmem:[%s4 + $0x10] sm:$0xff]
        %v981 = vld [vmem:[%s4 + $0x18] sm:$0xff]
        %v982 = vld [vmem:[#allocation2] sm:$0x1]
        %v984 = vperm.slane %v982, 0
        %vm986 = vcmask 261120
        %v988 = vsel %vm986, %v963, 0
        %990 = vmatpush.msra.mxu0 0.0
        %991 = vmatpush.msra.mxu0 0.0
        %992 = vmatpush.msra.mxu0 0.0
        %993 = vmatpush.msra.mxu0 0.0
        %994 = vmatpush.msra.mxu0 0.0
        %995 = vmatpush.msra.mxu0 0.0
        %996 = vmatpush.msra.mxu0 0.0
        %997 = vmatpush.msra.mxu0 0.0
        %998 = vmatpush.msra.mxu0 0.0
        %999 = vmatpush.msra.mxu0 0.0
        %1000 = vmatpush.msra.mxu0 0.0
        %1001 = vmatpush.msra.mxu0 0.0
        %1002 = vmatpush.msra.mxu0 %v981
        %1003 = vmatpush.msra.mxu0 %v980
        %1004 = vmatpush.msra.mxu0 %v979
        %1005 = vmatpush.msra.mxu0 %v978
        %1006 = vmatmul.f32.gmra.mxu0 %v988
        %v1007 = vpop.f32.mrf.mxu0
        %v1008 = vadd.f32 %v984, %v1007
        %1009 = vdwg.mxu0
        %1011 = vrot.lane.b32.xlu0 %v1008, 120
        %v1012 = vpop.permute.xlu0 %1011
        %1013 = vrot.lane.b32.xlu0 %v1008, 112
        %v1014 = vpop.permute.xlu0 %1013
        %1015 = vrot.lane.b32.xlu0 %v1008, 104
        %v1016 = vpop.permute.xlu0 %1015
        %1017 = vrot.lane.b32.xlu0 %v1008, 96
        %v1018 = vpop.permute.xlu0 %1017
        %vm1019 = vcmask 64512
        %v1020 = vsel %vm1019, %v1008, 0
        %v1022 = vsel %vm1019, %v1018, 0
        %1024 = vmatpush.xpose.msra.mxu0 0.0
        %1025 = vmatpush.xpose.msra.mxu0 0.0
        %1026 = vmatpush.xpose.msra.mxu0 0.0
        %1027 = vmatpush.xpose.msra.mxu0 0.0
        %1028 = vmatpush.xpose.msra.mxu0 0.0
        %1029 = vmatpush.xpose.msra.mxu0 0.0
        %1030 = vmatpush.xpose.msra.mxu0 0.0
        %1031 = vmatpush.xpose.msra.mxu0 0.0
        %1032 = vmatpush.xpose.msra.mxu0 0.0
        %1033 = vmatpush.xpose.msra.mxu0 0.0
        %1034 = vmatpush.xpose.msra.mxu0 0.0
        %1035 = vmatpush.xpose.msra.mxu0 0.0
        %1036 = vmatpush.xpose.msra.mxu0 0.0
        %1037 = vmatpush.xpose.msra.mxu0 0.0
        %1038 = vmatpush.xpose.msra.mxu0 0.0
        %1039 = vmatpush.xpose.msra.mxu0 %v1022
        %1040 = vmatmul.f32.gmra.mxu0 %v1020
        %v1041 = vpop.f32.mrf.mxu0
        %v1042 = vadd.f32 0.0, %v1041
        %1043 = vdwg.mxu0
        %1044 = vrot.lane.b32.xlu0 %v1012, 96
        %v1045 = vpop.permute.xlu0 %1044
        %v1046 = vsel %vm1019, %v1012, 0
        %v1048 = vsel %vm1019, %v1045, 0
        %1050 = vmatpush.xpose.msra.mxu0 0.0
        %1051 = vmatpush.xpose.msra.mxu0 0.0
        %1052 = vmatpush.xpose.msra.mxu0 0.0
        %1053 = vmatpush.xpose.msra.mxu0 0.0
        %1054 = vmatpush.xpose.msra.mxu0 0.0
        %1055 = vmatpush.xpose.msra.mxu0 0.0
        %1056 = vmatpush.xpose.msra.mxu0 0.0
        %1057 = vmatpush.xpose.msra.mxu0 0.0
        %1058 = vmatpush.xpose.msra.mxu0 0.0
        %1059 = vmatpush.xpose.msra.mxu0 0.0
        %1060 = vmatpush.xpose.msra.mxu0 0.0
        %1061 = vmatpush.xpose.msra.mxu0 0.0
        %1062 = vmatpush.xpose.msra.mxu0 0.0
        %1063 = vmatpush.xpose.msra.mxu0 0.0
        %1064 = vmatpush.xpose.msra.mxu0 0.0
        %1065 = vmatpush.xpose.msra.mxu0 %v1048
        %1066 = vmatmul.f32.gmra.mxu0 %v1046
        %v1067 = vpop.f32.mrf.mxu0
        %v1068 = vadd.f32 0.0, %v1067
        %1069 = vdwg.mxu0
        %1070 = vrot.lane.b32.xlu0 %v1014, 96
        %v1071 = vpop.permute.xlu0 %1070
        %v1072 = vsel %vm1019, %v1014, 0
        %v1074 = vsel %vm1019, %v1071, 0
        %1076 = vmatpush.xpose.msra.mxu0 0.0
        %1077 = vmatpush.xpose.msra.mxu0 0.0
        %1078 = vmatpush.xpose.msra.mxu0 0.0
        %1079 = vmatpush.xpose.msra.mxu0 0.0
        %1080 = vmatpush.xpose.msra.mxu0 0.0
        %1081 = vmatpush.xpose.msra.mxu0 0.0
        %1082 = vmatpush.xpose.msra.mxu0 0.0
        %1083 = vmatpush.xpose.msra.mxu0 0.0
        %1084 = vmatpush.xpose.msra.mxu0 0.0
        %1085 = vmatpush.xpose.msra.mxu0 0.0
        %1086 = vmatpush.xpose.msra.mxu0 0.0
        %1087 = vmatpush.xpose.msra.mxu0 0.0
        %1088 = vmatpush.xpose.msra.mxu0 0.0
        %1089 = vmatpush.xpose.msra.mxu0 0.0
        %1090 = vmatpush.xpose.msra.mxu0 0.0
        %1091 = vmatpush.xpose.msra.mxu0 %v1074
        %1092 = vmatmul.f32.gmra.mxu0 %v1072
        %v1093 = vpop.f32.mrf.mxu0
        %v1094 = vadd.f32 0.0, %v1093
        %1095 = vdwg.mxu0
        %1096 = vrot.lane.b32.xlu0 %v1016, 96
        %v1097 = vpop.permute.xlu0 %1096
        %v1098 = vsel %vm1019, %v1016, 0
        %v1100 = vsel %vm1019, %v1097, 0
        %1102 = vmatpush.xpose.msra.mxu0 0.0
        %1103 = vmatpush.xpose.msra.mxu0 0.0
        %1104 = vmatpush.xpose.msra.mxu0 0.0
        %1105 = vmatpush.xpose.msra.mxu0 0.0
        %1106 = vmatpush.xpose.msra.mxu0 0.0
        %1107 = vmatpush.xpose.msra.mxu0 0.0
        %1108 = vmatpush.xpose.msra.mxu0 0.0
        %1109 = vmatpush.xpose.msra.mxu0 0.0
        %1110 = vmatpush.xpose.msra.mxu0 0.0
        %1111 = vmatpush.xpose.msra.mxu0 0.0
        %1112 = vmatpush.xpose.msra.mxu0 0.0
        %1113 = vmatpush.xpose.msra.mxu0 0.0
        %1114 = vmatpush.xpose.msra.mxu0 0.0
        %1115 = vmatpush.xpose.msra.mxu0 0.0
        %1116 = vmatpush.xpose.msra.mxu0 0.0
        %1117 = vmatpush.xpose.msra.mxu0 %v1100
        %1118 = vmatmul.f32.gmra.mxu0 %v1098
        %v1119 = vpop.f32.mrf.mxu0
        %v1120 = vadd.f32 0.0, %v1119
        %1121 = vdwg.mxu0
        %v1122 = vmul.f32 %v1042, 0.35355338
        %v1123 = vmul.f32 %v1068, 0.35355338
        %v1124 = vmul.f32 %v1094, 0.35355338
        %v1125 = vmul.f32 %v1120, 0.35355338
        %v1126 = vsel %vm975, 1, 0
        %vm1127 = vcmp.eq.s32.totalorder %v1126, 1
        %v1128 = vsel %vm1127, %v1122, -1e+10
        %v1129 = vsel %vm1127, %v1123, -1e+10
        %v1130 = vsel %vm1127, %v1124, -1e+10
        %v1131 = vsel %vm1127, %v1125, -1e+10
        %v1132 = vsel %vm1019, %v1128, -inf
        %1133 = vmax.xlane.f32.xlu0 %v1132
        %v1134 = vpop.xlane.xlu0 %1133
        %v1135 = vsel %vm1019, %v1129, -inf
        %1136 = vmax.xlane.f32.xlu0 %v1135
        %v1137 = vpop.xlane.xlu0 %1136
        %v1138 = vsel %vm1019, %v1130, -inf
        %1139 = vmax.xlane.f32.xlu0 %v1138
        %v1140 = vpop.xlane.xlu0 %1139
        %v1141 = vsel %vm1019, %v1131, -inf
        %1142 = vmax.xlane.f32.xlu0 %v1141
        %v1143 = vpop.xlane.xlu0 %1142
        %v1144 = vsub.f32 %v1128, %v1134
        %v1145 = vsub.f32 %v1129, %v1137
        %v1146 = vsub.f32 %v1130, %v1140
        %v1147 = vsub.f32 %v1131, %v1143
        %v1148 = vmul.f32 %v1144, 1.442695
        %v1149 = vpow.pop %v1148
        %v1150 = vmul.f32 %v1145, 1.442695
        %v1151 = vpow.pop %v1150
        %v1152 = vmul.f32 %v1146, 1.442695
        %v1153 = vpow.pop %v1152
        %v1154 = vmul.f32 %v1147, 1.442695
        %v1155 = vpow.pop %v1154
        %v1156 = vsel %vm1019, %v1149, 0.0
        %1157 = vadd.xlane.f32.xlu0 %v1156
        %v1158 = vpop.xlane.xlu0 %1157
        %v1159 = vsel %vm1019, %v1151, 0.0
        %1160 = vadd.xlane.f32.xlu0 %v1159
        %v1161 = vpop.xlane.xlu0 %1160
        %v1162 = vsel %vm1019, %v1153, 0.0
        %1163 = vadd.xlane.f32.xlu0 %v1162
        %v1164 = vpop.xlane.xlu0 %1163
        %v1165 = vsel %vm1019, %v1155, 0.0
        %1166 = vadd.xlane.f32.xlu0 %v1165
        %v1167 = vpop.xlane.xlu0 %1166
        %v1168 = vrcp.pop %v1158
        %v1169 = vmul.f32 %v1158, %v1168
        %v1170 = vsub.f32 1.0, %v1169
        %v1171 = vmul.f32 %v1168, %v1170
        %v1172 = vadd.f32 %v1168, %v1171
        %vm1173 = vweird.f32 %v1158
        %vm1174 = vweird.f32 %v1168
        %vm1175 = vmor %vm1173, %vm1174
        %v1176 = vsel %vm1175, %v1168, %v1172
        %v1177 = vand.u32 2147483647, %v1158
        %vm1178 = vcmp.eq.f32.partialorder %v1177, 8.507059e+37
        %v1179 = vand.u32 %v1158, 2147483648
        %v1180 = vor.u32 1.1754944e-38, %v1179
        %v1181 = vsel %vm1178, %v1180, %v1176
        %v1182 = vmul.f32 %v1149, %v1181
        %v1183 = vrcp.pop %v1161
        %v1184 = vmul.f32 %v1161, %v1183
        %v1185 = vsub.f32 1.0, %v1184
        %v1186 = vmul.f32 %v1183, %v1185
        %v1187 = vadd.f32 %v1183, %v1186
        %vm1188 = vweird.f32 %v1161
        %vm1189 = vweird.f32 %v1183
        %vm1190 = vmor %vm1188, %vm1189
        %v1191 = vsel %vm1190, %v1183, %v1187
        %v1192 = vand.u32 2147483647, %v1161
        %vm1193 = vcmp.eq.f32.partialorder %v1192, 8.507059e+37
        %v1194 = vand.u32 %v1161, 2147483648
        %v1195 = vor.u32 1.1754944e-38, %v1194
        %v1196 = vsel %vm1193, %v1195, %v1191
        %v1197 = vmul.f32 %v1151, %v1196
        %v1198 = vrcp.pop %v1164
        %v1199 = vmul.f32 %v1164, %v1198
        %v1200 = vsub.f32 1.0, %v1199
        %v1201 = vmul.f32 %v1198, %v1200
        %v1202 = vadd.f32 %v1198, %v1201
        %vm1203 = vweird.f32 %v1164
        %vm1204 = vweird.f32 %v1198
        %vm1205 = vmor %vm1203, %vm1204
        %v1206 = vsel %vm1205, %v1198, %v1202
        %v1207 = vand.u32 2147483647, %v1164
        %vm1208 = vcmp.eq.f32.partialorder %v1207, 8.507059e+37
        %v1209 = vand.u32 %v1164, 2147483648
        %v1210 = vor.u32 1.1754944e-38, %v1209
        %v1211 = vsel %vm1208, %v1210, %v1206
        %v1212 = vmul.f32 %v1153, %v1211
        %v1213 = vrcp.pop %v1167
        %v1214 = vmul.f32 %v1167, %v1213
        %v1215 = vsub.f32 1.0, %v1214
        %v1216 = vmul.f32 %v1213, %v1215
        %v1217 = vadd.f32 %v1213, %v1216
        %vm1218 = vweird.f32 %v1167
        %vm1219 = vweird.f32 %v1213
        %vm1220 = vmor %vm1218, %vm1219
        %v1221 = vsel %vm1220, %v1213, %v1217
        %v1222 = vand.u32 2147483647, %v1167
        %vm1223 = vcmp.eq.f32.partialorder %v1222, 8.507059e+37
        %v1224 = vand.u32 %v1167, 2147483648
        %v1225 = vor.u32 1.1754944e-38, %v1224
        %v1226 = vsel %vm1223, %v1225, %v1221
        %v1227 = vmul.f32 %v1155, %v1226
        %1228 = vrot.lane.b32.xlu0 %v1008, 64
        %v1229 = vpop.permute.xlu0 %1228
        %v1232 = vsel %vm1019, %v1182, 0
        %1234 = vmatpush.msra.mxu0 0.0
        %1235 = vmatpush.msra.mxu0 0.0
        %1236 = vmatpush.msra.mxu0 0.0
        %1237 = vmatpush.msra.mxu0 0.0
        %1238 = vmatpush.msra.mxu0 0.0
        %1239 = vmatpush.msra.mxu0 0.0
        %1240 = vmatpush.msra.mxu0 0.0
        %1241 = vmatpush.msra.mxu0 0.0
        %1242 = vmatpush.msra.mxu0 0.0
        %1243 = vmatpush.msra.mxu0 0.0
        %1244 = vmatpush.msra.mxu0 0.0
        %1245 = vmatpush.msra.mxu0 0.0
        %1246 = vmatpush.msra.mxu0 0.0
        %1247 = vmatpush.msra.mxu0 0.0
        %1248 = vmatpush.msra.mxu0 0.0
        %1249 = vmatpush.msra.mxu0 %v1229
        %1250 = vmatmul.f32.gmra.mxu0 %v1232
        %v1251 = vpop.f32.mrf.mxu0
        %v1252 = vadd.f32 0.0, %v1251
        %1253 = vdwg.mxu0
        %1254 = vrot.lane.b32.xlu0 %v1012, 64
        %v1255 = vpop.permute.xlu0 %1254
        %v1258 = vsel %vm1019, %v1197, 0
        %1260 = vmatpush.msra.mxu0 0.0
        %1261 = vmatpush.msra.mxu0 0.0
        %1262 = vmatpush.msra.mxu0 0.0
        %1263 = vmatpush.msra.mxu0 0.0
        %1264 = vmatpush.msra.mxu0 0.0
        %1265 = vmatpush.msra.mxu0 0.0
        %1266 = vmatpush.msra.mxu0 0.0
        %1267 = vmatpush.msra.mxu0 0.0
        %1268 = vmatpush.msra.mxu0 0.0
        %1269 = vmatpush.msra.mxu0 0.0
        %1270 = vmatpush.msra.mxu0 0.0
        %1271 = vmatpush.msra.mxu0 0.0
        %1272 = vmatpush.msra.mxu0 0.0
        %1273 = vmatpush.msra.mxu0 0.0
        %1274 = vmatpush.msra.mxu0 0.0
        %1275 = vmatpush.msra.mxu0 %v1255
        %1276 = vmatmul.f32.gmra.mxu0 %v1258
        %v1277 = vpop.f32.mrf.mxu0
        %v1278 = vadd.f32 0.0, %v1277
        %1279 = vdwg.mxu0
        %1280 = vrot.lane.b32.xlu0 %v1014, 64
        %v1281 = vpop.permute.xlu0 %1280
        %v1284 = vsel %vm1019, %v1212, 0
        %1286 = vmatpush.msra.mxu0 0.0
        %1287 = vmatpush.msra.mxu0 0.0
        %1288 = vmatpush.msra.mxu0 0.0
        %1289 = vmatpush.msra.mxu0 0.0
        %1290 = vmatpush.msra.mxu0 0.0
        %1291 = vmatpush.msra.mxu0 0.0
        %1292 = vmatpush.msra.mxu0 0.0
        %1293 = vmatpush.msra.mxu0 0.0
        %1294 = vmatpush.msra.mxu0 0.0
        %1295 = vmatpush.msra.mxu0 0.0
        %1296 = vmatpush.msra.mxu0 0.0
        %1297 = vmatpush.msra.mxu0 0.0
        %1298 = vmatpush.msra.mxu0 0.0
        %1299 = vmatpush.msra.mxu0 0.0
        %1300 = vmatpush.msra.mxu0 0.0
        %1301 = vmatpush.msra.mxu0 %v1281
        %1302 = vmatmul.f32.gmra.mxu0 %v1284
        %v1303 = vpop.f32.mrf.mxu0
        %v1304 = vadd.f32 0.0, %v1303
        %1305 = vdwg.mxu0
        %1306 = vrot.lane.b32.xlu0 %v1016, 64
        %v1307 = vpop.permute.xlu0 %1306
        %v1310 = vsel %vm1019, %v1227, 0
        %1312 = vmatpush.msra.mxu0 0.0
        %1313 = vmatpush.msra.mxu0 0.0
        %1314 = vmatpush.msra.mxu0 0.0
        %1315 = vmatpush.msra.mxu0 0.0
        %1316 = vmatpush.msra.mxu0 0.0
        %1317 = vmatpush.msra.mxu0 0.0
        %1318 = vmatpush.msra.mxu0 0.0
        %1319 = vmatpush.msra.mxu0 0.0
        %1320 = vmatpush.msra.mxu0 0.0
        %1321 = vmatpush.msra.mxu0 0.0
        %1322 = vmatpush.msra.mxu0 0.0
        %1323 = vmatpush.msra.mxu0 0.0
        %1324 = vmatpush.msra.mxu0 0.0
        %1325 = vmatpush.msra.mxu0 0.0
        %1326 = vmatpush.msra.mxu0 0.0
        %1327 = vmatpush.msra.mxu0 %v1307
        %1328 = vmatmul.f32.gmra.mxu0 %v1310
        %v1329 = vpop.f32.mrf.mxu0
        %v1330 = vadd.f32 0.0, %v1329
        %1331 = vdwg.mxu0
        %v1332 = vld [vmem:[%s6] sm:$0xff]
        %v1333 = vld [vmem:[%s6 + $0x8] sm:$0xff]
        %v1334 = vld [vmem:[%s6 + $0x10] sm:$0xff]
        %v1335 = vld [vmem:[%s6 + $0x18] sm:$0xff]
        %v1336 = vld [vmem:[#allocation5] sm:$0x1]
        %v1338 = vsel %vm1019, %v1278, 0
        %1340 = vmatpush.msra.mxu0 0.0
        %1341 = vmatpush.msra.mxu0 0.0
        %1342 = vmatpush.msra.mxu0 0.0
        %1343 = vmatpush.msra.mxu0 0.0
        %1344 = vmatpush.msra.mxu0 0.0
        %1345 = vmatpush.msra.mxu0 0.0
        %1346 = vmatpush.msra.mxu0 0.0
        %1347 = vmatpush.msra.mxu0 0.0
        %1348 = vmatpush.msra.mxu0 0.0
        %1349 = vmatpush.msra.mxu0 0.0
        %1350 = vmatpush.msra.mxu0 0.0
        %1351 = vmatpush.msra.mxu0 0.0
        %1352 = vmatpush.msra.mxu0 0.0
        %1353 = vmatpush.msra.mxu0 0.0
        %1354 = vmatpush.msra.mxu0 0.0
        %1355 = vmatpush.msra.mxu0 %v1333
        %1356 = vmatmul.f32.gmra.mxu0 %v1338
        %v1357 = vpop.f32.mrf.mxu0
        %v1358 = vadd.f32 0.0, %v1357
        %1359 = vdwg.mxu0
        %v1361 = vsel %vm1019, %v1252, 0
        %1363 = vmatpush.msra.mxu0 0.0
        %1364 = vmatpush.msra.mxu0 0.0
        %1365 = vmatpush.msra.mxu0 0.0
        %1366 = vmatpush.msra.mxu0 0.0
        %1367 = vmatpush.msra.mxu0 0.0
        %1368 = vmatpush.msra.mxu0 0.0
        %1369 = vmatpush.msra.mxu0 0.0
        %1370 = vmatpush.msra.mxu0 0.0
        %1371 = vmatpush.msra.mxu0 0.0
        %1372 = vmatpush.msra.mxu0 0.0
        %1373 = vmatpush.msra.mxu0 0.0
        %1374 = vmatpush.msra.mxu0 0.0
        %1375 = vmatpush.msra.mxu0 0.0
        %1376 = vmatpush.msra.mxu0 0.0
        %1377 = vmatpush.msra.mxu0 0.0
        %1378 = vmatpush.msra.mxu0 %v1332
        %1379 = vmatmul.f32.gmra.mxu0 %v1361
        %v1380 = vpop.f32.mrf.mxu0
        %v1381 = vadd.f32 %v1358, %v1380
        %1382 = vdwg.mxu0
        %v1384 = vsel %vm1019, %v1304, 0
        %1386 = vmatpush.msra.mxu0 0.0
        %1387 = vmatpush.msra.mxu0 0.0
        %1388 = vmatpush.msra.mxu0 0.0
        %1389 = vmatpush.msra.mxu0 0.0
        %1390 = vmatpush.msra.mxu0 0.0
        %1391 = vmatpush.msra.mxu0 0.0
        %1392 = vmatpush.msra.mxu0 0.0
        %1393 = vmatpush.msra.mxu0 0.0
        %1394 = vmatpush.msra.mxu0 0.0
        %1395 = vmatpush.msra.mxu0 0.0
        %1396 = vmatpush.msra.mxu0 0.0
        %1397 = vmatpush.msra.mxu0 0.0
        %1398 = vmatpush.msra.mxu0 0.0
        %1399 = vmatpush.msra.mxu0 0.0
        %1400 = vmatpush.msra.mxu0 0.0
        %1401 = vmatpush.msra.mxu0 %v1334
        %1402 = vmatmul.f32.gmra.mxu0 %v1384
        %v1403 = vpop.f32.mrf.mxu0
        %v1404 = vadd.f32 0.0, %v1403
        %1405 = vdwg.mxu0
        %v1406 = vadd.f32 %v1381, %v1404
        %v1408 = vsel %vm1019, %v1330, 0
        %1410 = vmatpush.msra.mxu0 0.0
        %1411 = vmatpush.msra.mxu0 0.0
        %1412 = vmatpush.msra.mxu0 0.0
        %1413 = vmatpush.msra.mxu0 0.0
        %1414 = vmatpush.msra.mxu0 0.0
        %1415 = vmatpush.msra.mxu0 0.0
        %1416 = vmatpush.msra.mxu0 0.0
        %1417 = vmatpush.msra.mxu0 0.0
        %1418 = vmatpush.msra.mxu0 0.0
        %1419 = vmatpush.msra.mxu0 0.0
        %1420 = vmatpush.msra.mxu0 0.0
        %1421 = vmatpush.msra.mxu0 0.0
        %1422 = vmatpush.msra.mxu0 0.0
        %1423 = vmatpush.msra.mxu0 0.0
        %1424 = vmatpush.msra.mxu0 0.0
        %1425 = vmatpush.msra.mxu0 %v1335
        %1426 = vmatmul.f32.gmra.mxu0 %v1408
        %v1427 = vpop.f32.mrf.mxu0
        %v1428 = vadd.f32 0.0, %v1427
        %1429 = vdwg.mxu0
        %v1430 = vadd.f32 %v1406, %v1428
        %v1432 = vperm.slane %v1336, 0
        %v1434 = vadd.f32 %v1430, %v1432
        %v1435 = vadd.f32 %v963, %v1434
        %v1436 = vsel %vm986, %v1435, 0.0
        %1437 = vadd.xlane.f32.xlu0 %v1436
        %v1438 = vpop.xlane.xlu0 %1437
        %v1439 = vrcp.pop 32.0
        %v1440 = vmul.f32 32.0, %v1439
        %v1441 = vsub.f32 1.0, %v1440
        %v1442 = vmul.f32 %v1439, %v1441
        %v1443 = vadd.f32 %v1439, %v1442
        %vm1444 = vweird.f32 %v1439
        %v1445 = vsel %vm1444, %v1439, %v1443
        %v1446 = vmul.f32 %v1438, %v1445
        %v1447 = vmul.f32 %v1435, %v1435
        %v1448 = vsel %vm986, %v1447, 0.0
        %1449 = vadd.xlane.f32.xlu0 %v1448
        %v1450 = vpop.xlane.xlu0 %1449
        %v1451 = vmul.f32 %v1450, %v1445
        %v1452 = vmul.f32 %v1446, %v1446
        %v1453 = vsub.f32 %v1451, %v1452
        %v1454 = vmax.f32 %v1453, 0.0
        %v1455 = vsub.f32 %v1435, %v1446
        %v1456 = vadd.f32 %v1454, 1e-05
        %v1457 = vrsqrt.pop %v1456
        %v1458 = vmul.f32 %v1457, %v1456
        %v1459 = vmul.f32 %v1458, %v1457
        %v1460 = vmul.f32 0.5, %v1459
        %v1461 = vsub.f32 1.5, %v1460
        %v1462 = vmul.f32 %v1457, %v1461
        %vm1463 = vweird.f32 %v1456
        %vm1464 = vweird.f32 %v1457
        %vm1465 = vmor %vm1463, %vm1464
        %v1466 = vsel %vm1465, %v1457, %v1462
        %v1467 = vmul.f32 %v1455, %v1466
        %v1469 = vperm.slane %v976, 0
        %v1471 = vmul.f32 %v1467, %v1469
        %v1473 = vperm.slane %v977, 0
        %v1475 = vadd.f32 %v1471, %v1473
        %v1476 = vld [vmem:[%s8] sm:$0xff]
        %v1477 = vld [vmem:[%s8 + $0x8] sm:$0xff]
        %v1478 = vld [vmem:[%s8 + $0x10] sm:$0xff]
        %v1479 = vld [vmem:[%s8 + $0x18] sm:$0xff]
        %v1480 = vld [vmem:[#allocation7] sm:$0x1]
        %v1482 = vperm.slane %v1480, 0
        %v1485 = vsel %vm986, %v1475, 0
        %1487 = vmatpush.msra.mxu0 0.0
        %1488 = vmatpush.msra.mxu0 0.0
        %1489 = vmatpush.msra.mxu0 0.0
        %1490 = vmatpush.msra.mxu0 0.0
        %1491 = vmatpush.msra.mxu0 0.0
        %1492 = vmatpush.msra.mxu0 0.0
        %1493 = vmatpush.msra.mxu0 0.0
        %1494 = vmatpush.msra.mxu0 0.0
        %1495 = vmatpush.msra.mxu0 0.0
        %1496 = vmatpush.msra.mxu0 0.0
        %1497 = vmatpush.msra.mxu0 0.0
        %1498 = vmatpush.msra.mxu0 0.0
        %1499 = vmatpush.msra.mxu0 %v1479
        %1500 = vmatpush.msra.mxu0 %v1478
        %1501 = vmatpush.msra.mxu0 %v1477
        %1502 = vmatpush.msra.mxu0 %v1476
        %1503 = vmatmul.f32.gmra.mxu0 %v1485
        %v1504 = vpop.f32.mrf.mxu0
        %v1505 = vadd.f32 %v1482, %v1504
        %1506 = vdwg.mxu0
        %v1507 = vld [vmem:[%s10] sm:$0xff]
        %v1508 = vld [vmem:[%s10 + $0x8] sm:$0xff]
        %v1509 = vld [vmem:[%s10 + $0x10] sm:$0xff]
        %v1510 = vld [vmem:[%s10 + $0x18] sm:$0xff]
        %v1511 = vld [vmem:[#allocation8] sm:$0x1]
        %v1513 = vperm.slane %v1511, 0
        %v1516 = vsel %vm986, %v964, 0
        %v1519 = vsel %vm986, %v965, 0
        %1521 = vmatpush.msra.mxu0 0.0
        %1522 = vmatpush.msra.mxu0 0.0
        %1523 = vmatpush.msra.mxu0 0.0
        %1524 = vmatpush.msra.mxu0 0.0
        %1525 = vmatpush.msra.mxu0 0.0
        %1526 = vmatpush.msra.mxu0 0.0
        %1527 = vmatpush.msra.mxu0 0.0
        %1528 = vmatpush.msra.mxu0 0.0
        %1529 = vmatpush.msra.mxu0 0.0
        %1530 = vmatpush.msra.mxu0 0.0
        %1531 = vmatpush.msra.mxu0 0.0
        %1532 = vmatpush.msra.mxu0 0.0
        %1533 = vmatpush.msra.mxu0 %v1510
        %1534 = vmatpush.msra.mxu0 %v1509
        %1535 = vmatpush.msra.mxu0 %v1508
        %1536 = vmatpush.msra.mxu0 %v1507
        %1537 = vmatmul.f32.gmra.mxu0 %v1516
        %v1538 = vpop.f32.mrf.mxu0
        %v1539 = vadd.f32 %v1513, %v1538
        %1540 = vmatmul.f32.gmra.mxu0 %v1519
        %v1541 = vpop.f32.mrf.mxu0
        %v1542 = vadd.f32 %v1513, %v1541
        %1543 = vdwg.mxu0
        %1545 = vrot.lane.b32.xlu0 %v1505, 120
        %v1546 = vpop.permute.xlu0 %1545
        %1547 = vrot.lane.b32.xlu0 %v1505, 112
        %v1548 = vpop.permute.xlu0 %1547
        %1549 = vrot.lane.b32.xlu0 %v1505, 104
        %v1550 = vpop.permute.xlu0 %1549
        %1553 = vrot.lane.b32.xlu0 %v1539, 120
        %v1554 = vpop.permute.xlu0 %1553
        %1555 = vrot.lane.b32.xlu0 %v1542, 120
        %v1556 = vpop.permute.xlu0 %1555
        %1557 = vrot.lane.b32.xlu0 %v1539, 112
        %v1558 = vpop.permute.xlu0 %1557
        %1559 = vrot.lane.b32.xlu0 %v1542, 112
        %v1560 = vpop.permute.xlu0 %1559
        %1561 = vrot.lane.b32.xlu0 %v1539, 104
        %v1562 = vpop.permute.xlu0 %1561
        %1563 = vrot.lane.b32.xlu0 %v1542, 104
        %v1564 = vpop.permute.xlu0 %1563
        %v1565 = vsel %vm1019, %v1505, 0
        %v1567 = vsel %vm1019, %v1539, 0
        %v1569 = vsel %vm1019, %v1542, 0
        %1571 = vmatpush.xpose.msra.mxu0 0.0
        %1572 = vmatpush.xpose.msra.mxu0 0.0
        %1573 = vmatpush.xpose.msra.mxu0 0.0
        %1574 = vmatpush.xpose.msra.mxu0 0.0
        %1575 = vmatpush.xpose.msra.mxu0 0.0
        %1576 = vmatpush.xpose.msra.mxu0 0.0
        %1577 = vmatpush.xpose.msra.mxu0 0.0
        %1578 = vmatpush.xpose.msra.mxu0 0.0
        %1579 = vmatpush.xpose.msra.mxu0 0.0
        %1580 = vmatpush.xpose.msra.mxu0 0.0
        %1581 = vmatpush.xpose.msra.mxu0 0.0
        %1582 = vmatpush.xpose.msra.mxu0 0.0
        %1583 = vmatpush.xpose.msra.mxu0 0.0
        %1584 = vmatpush.xpose.msra.mxu0 0.0
        %1585 = vmatpush.xpose.msra.mxu0 %v1569
        %1586 = vmatpush.xpose.msra.mxu0 %v1567
        %1587 = vmatmul.f32.gmra.mxu0 %v1565
        %v1588 = vpop.f32.mrf.mxu0
        %v1589 = vadd.f32 0.0, %v1588
        %1590 = vdwg.mxu0
        %v1591 = vsel %vm1019, %v1546, 0
        %v1593 = vsel %vm1019, %v1554, 0
        %v1595 = vsel %vm1019, %v1556, 0
        %1597 = vmatpush.xpose.msra.mxu0 0.0
        %1598 = vmatpush.xpose.msra.mxu0 0.0
        %1599 = vmatpush.xpose.msra.mxu0 0.0
        %1600 = vmatpush.xpose.msra.mxu0 0.0
        %1601 = vmatpush.xpose.msra.mxu0 0.0
        %1602 = vmatpush.xpose.msra.mxu0 0.0
        %1603 = vmatpush.xpose.msra.mxu0 0.0
        %1604 = vmatpush.xpose.msra.mxu0 0.0
        %1605 = vmatpush.xpose.msra.mxu0 0.0
        %1606 = vmatpush.xpose.msra.mxu0 0.0
        %1607 = vmatpush.xpose.msra.mxu0 0.0
        %1608 = vmatpush.xpose.msra.mxu0 0.0
        %1609 = vmatpush.xpose.msra.mxu0 0.0
        %1610 = vmatpush.xpose.msra.mxu0 0.0
        %1611 = vmatpush.xpose.msra.mxu0 %v1595
        %1612 = vmatpush.xpose.msra.mxu0 %v1593
        %1613 = vmatmul.f32.gmra.mxu0 %v1591
        %v1614 = vpop.f32.mrf.mxu0
        %v1615 = vadd.f32 0.0, %v1614
        %1616 = vdwg.mxu0
        %v1617 = vsel %vm1019, %v1548, 0
        %v1619 = vsel %vm1019, %v1558, 0
        %v1621 = vsel %vm1019, %v1560, 0
        %1623 = vmatpush.xpose.msra.mxu0 0.0
        %1624 = vmatpush.xpose.msra.mxu0 0.0
        %1625 = vmatpush.xpose.msra.mxu0 0.0
        %1626 = vmatpush.xpose.msra.mxu0 0.0
        %1627 = vmatpush.xpose.msra.mxu0 0.0
        %1628 = vmatpush.xpose.msra.mxu0 0.0
        %1629 = vmatpush.xpose.msra.mxu0 0.0
        %1630 = vmatpush.xpose.msra.mxu0 0.0
        %1631 = vmatpush.xpose.msra.mxu0 0.0
        %1632 = vmatpush.xpose.msra.mxu0 0.0
        %1633 = vmatpush.xpose.msra.mxu0 0.0
        %1634 = vmatpush.xpose.msra.mxu0 0.0
        %1635 = vmatpush.xpose.msra.mxu0 0.0
        %1636 = vmatpush.xpose.msra.mxu0 0.0
        %1637 = vmatpush.xpose.msra.mxu0 %v1621
        %1638 = vmatpush.xpose.msra.mxu0 %v1619
        %1639 = vmatmul.f32.gmra.mxu0 %v1617
        %v1640 = vpop.f32.mrf.mxu0
        %v1641 = vadd.f32 0.0, %v1640
        %1642 = vdwg.mxu0
        %v1643 = vsel %vm1019, %v1550, 0
        %v1645 = vsel %vm1019, %v1562, 0
        %v1647 = vsel %vm1019, %v1564, 0
        %1649 = vmatpush.xpose.msra.mxu0 0.0
        %1650 = vmatpush.xpose.msra.mxu0 0.0
        %1651 = vmatpush.xpose.msra.mxu0 0.0
        %1652 = vmatpush.xpose.msra.mxu0 0.0
        %1653 = vmatpush.xpose.msra.mxu0 0.0
        %1654 = vmatpush.xpose.msra.mxu0 0.0
        %1655 = vmatpush.xpose.msra.mxu0 0.0
        %1656 = vmatpush.xpose.msra.mxu0 0.0
        %1657 = vmatpush.xpose.msra.mxu0 0.0
        %1658 = vmatpush.xpose.msra.mxu0 0.0
        %1659 = vmatpush.xpose.msra.mxu0 0.0
        %1660 = vmatpush.xpose.msra.mxu0 0.0
        %1661 = vmatpush.xpose.msra.mxu0 0.0
        %1662 = vmatpush.xpose.msra.mxu0 0.0
        %1663 = vmatpush.xpose.msra.mxu0 %v1647
        %1664 = vmatpush.xpose.msra.mxu0 %v1645
        %1665 = vmatmul.f32.gmra.mxu0 %v1643
        %v1666 = vpop.f32.mrf.mxu0
        %v1667 = vadd.f32 0.0, %v1666
        %1668 = vdwg.mxu0
        %v1669 = vmul.f32 %v1589, 0.35355338
        %v1670 = vmul.f32 %v1615, 0.35355338
        %v1671 = vmul.f32 %v1641, 0.35355338
        %v1672 = vmul.f32 %v1667, 0.35355338
        %vm1673 = vcmask 80896
        %v1674 = vsel %vm1673, %v1669, -inf
        %1675 = vmax.xlane.f32.xlu0 %v1674
        %v1676 = vpop.xlane.xlu0 %1675
        %v1677 = vsel %vm1673, %v1670, -inf
        %1678 = vmax.xlane.f32.xlu0 %v1677
        %v1679 = vpop.xlane.xlu0 %1678
        %v1680 = vsel %vm1673, %v1671, -inf
        %1681 = vmax.xlane.f32.xlu0 %v1680
        %v1682 = vpop.xlane.xlu0 %1681
        %v1683 = vsel %vm1673, %v1672, -inf
        %1684 = vmax.xlane.f32.xlu0 %v1683
        %v1685 = vpop.xlane.xlu0 %1684
        %v1686 = vsub.f32 %v1669, %v1676
        %v1687 = vsub.f32 %v1670, %v1679
        %v1688 = vsub.f32 %v1671, %v1682
        %v1689 = vsub.f32 %v1672, %v1685
        %v1690 = vmul.f32 %v1686, 1.442695
        %v1691 = vpow.pop %v1690
        %v1692 = vmul.f32 %v1687, 1.442695
        %v1693 = vpow.pop %v1692
        %v1694 = vmul.f32 %v1688, 1.442695
        %v1695 = vpow.pop %v1694
        %v1696 = vmul.f32 %v1689, 1.442695
        %v1697 = vpow.pop %v1696
        %v1698 = vsel %vm1673, %v1691, 0.0
        %1699 = vadd.xlane.f32.xlu0 %v1698
        %v1700 = vpop.xlane.xlu0 %1699
        %v1701 = vsel %vm1673, %v1693, 0.0
        %1702 = vadd.xlane.f32.xlu0 %v1701
        %v1703 = vpop.xlane.xlu0 %1702
        %v1704 = vsel %vm1673, %v1695, 0.0
        %1705 = vadd.xlane.f32.xlu0 %v1704
        %v1706 = vpop.xlane.xlu0 %1705
        %v1707 = vsel %vm1673, %v1697, 0.0
        %1708 = vadd.xlane.f32.xlu0 %v1707
        %v1709 = vpop.xlane.xlu0 %1708
        %v1710 = vrcp.pop %v1700
        %v1711 = vmul.f32 %v1700, %v1710
        %v1712 = vsub.f32 1.0, %v1711
        %v1713 = vmul.f32 %v1710, %v1712
        %v1714 = vadd.f32 %v1710, %v1713
        %vm1715 = vweird.f32 %v1700
        %vm1716 = vweird.f32 %v1710
        %vm1717 = vmor %vm1715, %vm1716
        %v1718 = vsel %vm1717, %v1710, %v1714
        %v1719 = vand.u32 2147483647, %v1700
        %vm1720 = vcmp.eq.f32.partialorder %v1719, 8.507059e+37
        %v1721 = vand.u32 %v1700, 2147483648
        %v1722 = vor.u32 1.1754944e-38, %v1721
        %v1723 = vsel %vm1720, %v1722, %v1718
        %v1724 = vmul.f32 %v1691, %v1723
        %v1725 = vrcp.pop %v1703
        %v1726 = vmul.f32 %v1703, %v1725
        %v1727 = vsub.f32 1.0, %v1726
        %v1728 = vmul.f32 %v1725, %v1727
        %v1729 = vadd.f32 %v1725, %v1728
        %vm1730 = vweird.f32 %v1703
        %vm1731 = vweird.f32 %v1725
        %vm1732 = vmor %vm1730, %vm1731
        %v1733 = vsel %vm1732, %v1725, %v1729
        %v1734 = vand.u32 2147483647, %v1703
        %vm1735 = vcmp.eq.f32.partialorder %v1734, 8.507059e+37
        %v1736 = vand.u32 %v1703, 2147483648
        %v1737 = vor.u32 1.1754944e-38, %v1736
        %v1738 = vsel %vm1735, %v1737, %v1733
        %v1739 = vmul.f32 %v1693, %v1738
        %v1740 = vrcp.pop %v1706
        %v1741 = vmul.f32 %v1706, %v1740
        %v1742 = vsub.f32 1.0, %v1741
        %v1743 = vmul.f32 %v1740, %v1742
        %v1744 = vadd.f32 %v1740, %v1743
        %vm1745 = vweird.f32 %v1706
        %vm1746 = vweird.f32 %v1740
        %vm1747 = vmor %vm1745, %vm1746
        %v1748 = vsel %vm1747, %v1740, %v1744
        %v1749 = vand.u32 2147483647, %v1706
        %vm1750 = vcmp.eq.f32.partialorder %v1749, 8.507059e+37
        %v1751 = vand.u32 %v1706, 2147483648
        %v1752 = vor.u32 1.1754944e-38, %v1751
        %v1753 = vsel %vm1750, %v1752, %v1748
        %v1754 = vmul.f32 %v1695, %v1753
        %v1755 = vrcp.pop %v1709
        %v1756 = vmul.f32 %v1709, %v1755
        %v1757 = vsub.f32 1.0, %v1756
        %v1758 = vmul.f32 %v1755, %v1757
        %v1759 = vadd.f32 %v1755, %v1758
        %vm1760 = vweird.f32 %v1709
        %vm1761 = vweird.f32 %v1755
        %vm1762 = vmor %vm1760, %vm1761
        %v1763 = vsel %vm1762, %v1755, %v1759
        %v1764 = vand.u32 2147483647, %v1709
        %vm1765 = vcmp.eq.f32.partialorder %v1764, 8.507059e+37
        %v1766 = vand.u32 %v1709, 2147483648
        %v1767 = vor.u32 1.1754944e-38, %v1766
        %v1768 = vsel %vm1765, %v1767, %v1763
        %v1769 = vmul.f32 %v1697, %v1768
        %1770 = vrot.lane.b32.xlu0 %v1539, 96
        %v1771 = vpop.permute.xlu0 %1770
        %1772 = vrot.lane.b32.xlu0 %v1542, 96
        %v1773 = vpop.permute.xlu0 %1772
        %v1776 = vsel %vm1673, %v1724, 0
        %v1778 = vsel %vm937, %v1773, 0
        %1780 = vmatpush.msra.mxu0 0.0
        %1781 = vmatpush.msra.mxu0 0.0
        %1782 = vmatpush.msra.mxu0 0.0
        %1783 = vmatpush.msra.mxu0 0.0
        %1784 = vmatpush.msra.mxu0 0.0
        %1785 = vmatpush.msra.mxu0 0.0
        %1786 = vmatpush.msra.mxu0 0.0
        %1787 = vmatpush.msra.mxu0 0.0
        %1788 = vmatpush.msra.mxu0 0.0
        %1789 = vmatpush.msra.mxu0 0.0
        %1790 = vmatpush.msra.mxu0 0.0
        %1791 = vmatpush.msra.mxu0 0.0
        %1792 = vmatpush.msra.mxu0 0.0
        %1793 = vmatpush.msra.mxu0 0.0
        %1794 = vmatpush.msra.mxu0 %v1778
        %1795 = vmatpush.msra.mxu0 %v1771
        %1796 = vmatmul.f32.gmra.mxu0 %v1776
        %v1797 = vpop.f32.mrf.mxu0
        %v1798 = vadd.f32 0.0, %v1797
        %1799 = vdwg.mxu0
        %1800 = vrot.lane.b32.xlu0 %v1554, 96
        %v1801 = vpop.permute.xlu0 %1800
        %1802 = vrot.lane.b32.xlu0 %v1556, 96
        %v1803 = vpop.permute.xlu0 %1802
        %v1806 = vsel %vm1673, %v1739, 0
        %v1808 = vsel %vm937, %v1803, 0
        %1810 = vmatpush.msra.mxu0 0.0
        %1811 = vmatpush.msra.mxu0 0.0
        %1812 = vmatpush.msra.mxu0 0.0
        %1813 = vmatpush.msra.mxu0 0.0
        %1814 = vmatpush.msra.mxu0 0.0
        %1815 = vmatpush.msra.mxu0 0.0
        %1816 = vmatpush.msra.mxu0 0.0
        %1817 = vmatpush.msra.mxu0 0.0
        %1818 = vmatpush.msra.mxu0 0.0
        %1819 = vmatpush.msra.mxu0 0.0
        %1820 = vmatpush.msra.mxu0 0.0
        %1821 = vmatpush.msra.mxu0 0.0
        %1822 = vmatpush.msra.mxu0 0.0
        %1823 = vmatpush.msra.mxu0 0.0
        %1824 = vmatpush.msra.mxu0 %v1808
        %1825 = vmatpush.msra.mxu0 %v1801
        %1826 = vmatmul.f32.gmra.mxu0 %v1806
        %v1827 = vpop.f32.mrf.mxu0
        %v1828 = vadd.f32 0.0, %v1827
        %1829 = vdwg.mxu0
        %1830 = vrot.lane.b32.xlu0 %v1558, 96
        %v1831 = vpop.permute.xlu0 %1830
        %1832 = vrot.lane.b32.xlu0 %v1560, 96
        %v1833 = vpop.permute.xlu0 %1832
        %v1836 = vsel %vm1673, %v1754, 0
        %v1838 = vsel %vm937, %v1833, 0
        %1840 = vmatpush.msra.mxu0 0.0
        %1841 = vmatpush.msra.mxu0 0.0
        %1842 = vmatpush.msra.mxu0 0.0
        %1843 = vmatpush.msra.mxu0 0.0
        %1844 = vmatpush.msra.mxu0 0.0
        %1845 = vmatpush.msra.mxu0 0.0
        %1846 = vmatpush.msra.mxu0 0.0
        %1847 = vmatpush.msra.mxu0 0.0
        %1848 = vmatpush.msra.mxu0 0.0
        %1849 = vmatpush.msra.mxu0 0.0
        %1850 = vmatpush.msra.mxu0 0.0
        %1851 = vmatpush.msra.mxu0 0.0
        %1852 = vmatpush.msra.mxu0 0.0
        %1853 = vmatpush.msra.mxu0 0.0
        %1854 = vmatpush.msra.mxu0 %v1838
        %1855 = vmatpush.msra.mxu0 %v1831
        %1856 = vmatmul.f32.gmra.mxu0 %v1836
        %v1857 = vpop.f32.mrf.mxu0
        %v1858 = vadd.f32 0.0, %v1857
        %1859 = vdwg.mxu0
        %1860 = vrot.lane.b32.xlu0 %v1562, 96
        %v1861 = vpop.permute.xlu0 %1860
        %1862 = vrot.lane.b32.xlu0 %v1564, 96
        %v1863 = vpop.permute.xlu0 %1862
        %v1866 = vsel %vm1673, %v1769, 0
        %v1868 = vsel %vm937, %v1863, 0
        %1870 = vmatpush.msra.mxu0 0.0
        %1871 = vmatpush.msra.mxu0 0.0
        %1872 = vmatpush.msra.mxu0 0.0
        %1873 = vmatpush.msra.mxu0 0.0
        %1874 = vmatpush.msra.mxu0 0.0
        %1875 = vmatpush.msra.mxu0 0.0
        %1876 = vmatpush.msra.mxu0 0.0
        %1877 = vmatpush.msra.mxu0 0.0
        %1878 = vmatpush.msra.mxu0 0.0
        %1879 = vmatpush.msra.mxu0 0.0
        %1880 = vmatpush.msra.mxu0 0.0
        %1881 = vmatpush.msra.mxu0 0.0
        %1882 = vmatpush.msra.mxu0 0.0
        %1883 = vmatpush.msra.mxu0 0.0
        %1884 = vmatpush.msra.mxu0 %v1868
        %1885 = vmatpush.msra.mxu0 %v1861
        %1886 = vmatmul.f32.gmra.mxu0 %v1866
        %v1887 = vpop.f32.mrf.mxu0
        %v1888 = vadd.f32 0.0, %v1887
        %1889 = vdwg.mxu0
        %v1890 = vld [vmem:[%s12] sm:$0xff]
        %v1891 = vld [vmem:[%s12 + $0x8] sm:$0xff]
        %v1892 = vld [vmem:[%s12 + $0x10] sm:$0xff]
        %v1893 = vld [vmem:[%s12 + $0x18] sm:$0xff]
        %v1894 = vld [vmem:[#allocation10] sm:$0x1]
        %v1896 = vsel %vm1019, %v1828, 0
        %1898 = vmatpush.msra.mxu0 0.0
        %1899 = vmatpush.msra.mxu0 0.0
        %1900 = vmatpush.msra.mxu0 0.0
        %1901 = vmatpush.msra.mxu0 0.0
        %1902 = vmatpush.msra.mxu0 0.0
        %1903 = vmatpush.msra.mxu0 0.0
        %1904 = vmatpush.msra.mxu0 0.0
        %1905 = vmatpush.msra.mxu0 0.0
        %1906 = vmatpush.msra.mxu0 0.0
        %1907 = vmatpush.msra.mxu0 0.0
        %1908 = vmatpush.msra.mxu0 0.0
        %1909 = vmatpush.msra.mxu0 0.0
        %1910 = vmatpush.msra.mxu0 0.0
        %1911 = vmatpush.msra.mxu0 0.0
        %1912 = vmatpush.msra.mxu0 0.0
        %1913 = vmatpush.msra.mxu0 %v1891
        %1914 = vmatmul.f32.gmra.mxu0 %v1896
        %v1915 = vpop.f32.mrf.mxu0
        %v1916 = vadd.f32 0.0, %v1915
        %1917 = vdwg.mxu0
        %v1919 = vsel %vm1019, %v1798, 0
        %1921 = vmatpush.msra.mxu0 0.0
        %1922 = vmatpush.msra.mxu0 0.0
        %1923 = vmatpush.msra.mxu0 0.0
        %1924 = vmatpush.msra.mxu0 0.0
        %1925 = vmatpush.msra.mxu0 0.0
        %1926 = vmatpush.msra.mxu0 0.0
        %1927 = vmatpush.msra.mxu0 0.0
        %1928 = vmatpush.msra.mxu0 0.0
        %1929 = vmatpush.msra.mxu0 0.0
        %1930 = vmatpush.msra.mxu0 0.0
        %1931 = vmatpush.msra.mxu0 0.0
        %1932 = vmatpush.msra.mxu0 0.0
        %1933 = vmatpush.msra.mxu0 0.0
        %1934 = vmatpush.msra.mxu0 0.0
        %1935 = vmatpush.msra.mxu0 0.0
        %1936 = vmatpush.msra.mxu0 %v1890
        %1937 = vmatmul.f32.gmra.mxu0 %v1919
        %v1938 = vpop.f32.mrf.mxu0
        %v1939 = vadd.f32 %v1916, %v1938
        %1940 = vdwg.mxu0
        %v1942 = vsel %vm1019, %v1858, 0
        %1944 = vmatpush.msra.mxu0 0.0
        %1945 = vmatpush.msra.mxu0 0.0
        %1946 = vmatpush.msra.mxu0 0.0
        %1947 = vmatpush.msra.mxu0 0.0
        %1948 = vmatpush.msra.mxu0 0.0
        %1949 = vmatpush.msra.mxu0 0.0
        %1950 = vmatpush.msra.mxu0 0.0
        %1951 = vmatpush.msra.mxu0 0.0
        %1952 = vmatpush.msra.mxu0 0.0
        %1953 = vmatpush.msra.mxu0 0.0
        %1954 = vmatpush.msra.mxu0 0.0
        %1955 = vmatpush.msra.mxu0 0.0
        %1956 = vmatpush.msra.mxu0 0.0
        %1957 = vmatpush.msra.mxu0 0.0
        %1958 = vmatpush.msra.mxu0 0.0
        %1959 = vmatpush.msra.mxu0 %v1892
        %1960 = vmatmul.f32.gmra.mxu0 %v1942
        %v1961 = vpop.f32.mrf.mxu0
        %v1962 = vadd.f32 0.0, %v1961
        %1963 = vdwg.mxu0
        %v1964 = vadd.f32 %v1939, %v1962
        %v1966 = vsel %vm1019, %v1888, 0
        %1968 = vmatpush.msra.mxu0 0.0
        %1969 = vmatpush.msra.mxu0 0.0
        %1970 = vmatpush.msra.mxu0 0.0
        %1971 = vmatpush.msra.mxu0 0.0
        %1972 = vmatpush.msra.mxu0 0.0
        %1973 = vmatpush.msra.mxu0 0.0
        %1974 = vmatpush.msra.mxu0 0.0
        %1975 = vmatpush.msra.mxu0 0.0
        %1976 = vmatpush.msra.mxu0 0.0
        %1977 = vmatpush.msra.mxu0 0.0
        %1978 = vmatpush.msra.mxu0 0.0
        %1979 = vmatpush.msra.mxu0 0.0
        %1980 = vmatpush.msra.mxu0 0.0
        %1981 = vmatpush.msra.mxu0 0.0
        %1982 = vmatpush.msra.mxu0 0.0
        %1983 = vmatpush.msra.mxu0 %v1893
        %1984 = vmatmul.f32.gmra.mxu0 %v1966
        %v1985 = vpop.f32.mrf.mxu0
        %v1986 = vadd.f32 0.0, %v1985
        %1987 = vdwg.mxu0
        %v1988 = vadd.f32 %v1964, %v1986
        %v1990 = vperm.slane %v1894, 0
        %v1992 = vadd.f32 %v1988, %v1990
        %v1993 = vadd.f32 %v1475, %v1992
        %v1994 = vsel %vm986, %v1993, 0.0
        %1995 = vadd.xlane.f32.xlu0 %v1994
        %v1996 = vpop.xlane.xlu0 %1995
        %v1997 = vmul.f32 %v1996, %v1445
        %v1998 = vmul.f32 %v1993, %v1993
        %v1999 = vsel %vm986, %v1998, 0.0
        %2000 = vadd.xlane.f32.xlu0 %v1999
        %v2001 = vpop.xlane.xlu0 %2000
        %v2002 = vmul.f32 %v2001, %v1445
        %v2003 = vmul.f32 %v1997, %v1997
        %v2004 = vsub.f32 %v2002, %v2003
        %v2005 = vmax.f32 %v2004, 0.0
        %v2006 = vsub.f32 %v1993, %v1997
        %v2007 = vadd.f32 %v2005, 1e-05
        %v2008 = vrsqrt.pop %v2007
        %v2009 = vmul.f32 %v2008, %v2007
        %v2010 = vmul.f32 %v2009, %v2008
        %v2011 = vmul.f32 0.5, %v2010
        %v2012 = vsub.f32 1.5, %v2011
        %v2013 = vmul.f32 %v2008, %v2012
        %vm2014 = vweird.f32 %v2007
        %vm2015 = vweird.f32 %v2008
        %vm2016 = vmor %vm2014, %vm2015
        %v2017 = vsel %vm2016, %v2008, %v2013
        %v2018 = vmul.f32 %v2006, %v2017
        %v2019 = vmul.f32 %v2018, %v1469
        %v2020 = vadd.f32 %v2019, %v1473
        %v2021 = vld [vmem:[%s16] sm:$0xff]
        %v2022 = vld [vmem:[%s16 + $0x8] sm:$0xff]
        %v2023 = vld [vmem:[%s16 + $0x10] sm:$0xff]
        %v2024 = vld [vmem:[%s16 + $0x18] sm:$0xff]
        %v2025 = vld [vmem:[#allocation14] sm:$0x1]
        %v2027 = vperm.slane %v2025, 0
        %v2030 = vsel %vm986, %v2020, 0
        %2032 = vmatpush.msra.mxu0 0.0
        %2033 = vmatpush.msra.mxu0 0.0
        %2034 = vmatpush.msra.mxu0 0.0
        %2035 = vmatpush.msra.mxu0 0.0
        %2036 = vmatpush.msra.mxu0 0.0
        %2037 = vmatpush.msra.mxu0 0.0
        %2038 = vmatpush.msra.mxu0 0.0
        %2039 = vmatpush.msra.mxu0 0.0
        %2040 = vmatpush.msra.mxu0 0.0
        %2041 = vmatpush.msra.mxu0 0.0
        %2042 = vmatpush.msra.mxu0 0.0
        %2043 = vmatpush.msra.mxu0 0.0
        %2044 = vmatpush.msra.mxu0 %v2024
        %2045 = vmatpush.msra.mxu0 %v2023
        %2046 = vmatpush.msra.mxu0 %v2022
        %2047 = vmatpush.msra.mxu0 %v2021
        %2048 = vmatmul.f32.gmra.mxu0 %v2030
        %v2049 = vpop.f32.mrf.mxu0
        %v2050 = vadd.f32 %v2027, %v2049
        %2051 = vdwg.mxu0
        %v2052 = vmax.f32 %v2050, 0.0
        %v2053 = vld [vmem:[%s18] sm:$0xff]
        %v2054 = vld [vmem:[%s18 + $0x8] sm:$0xff]
        %v2055 = vld [vmem:[%s18 + $0x10] sm:$0xff]
        %v2056 = vld [vmem:[%s18 + $0x18] sm:$0xff]
        %v2057 = vld [vmem:[%s18 + $0x20] sm:$0xff]
        %v2058 = vld [vmem:[%s18 + $0x28] sm:$0xff]
        %v2059 = vld [vmem:[%s18 + $0x30] sm:$0xff]
        %v2060 = vld [vmem:[%s18 + $0x38] sm:$0xff]
        %v2061 = vld [vmem:[#allocation16] sm:$0x1]
        %v2063 = vperm.slane %v2061, 0
        %vm2065 = vcmask 523264
        %v2067 = vsel %vm2065, %v2052, 0
        %2069 = vmatpush.msra.mxu0 0.0
        %2070 = vmatpush.msra.mxu0 0.0
        %2071 = vmatpush.msra.mxu0 0.0
        %2072 = vmatpush.msra.mxu0 0.0
        %2073 = vmatpush.msra.mxu0 0.0
        %2074 = vmatpush.msra.mxu0 0.0
        %2075 = vmatpush.msra.mxu0 0.0
        %2076 = vmatpush.msra.mxu0 0.0
        %2077 = vmatpush.msra.mxu0 %v2060
        %2078 = vmatpush.msra.mxu0 %v2059
        %2079 = vmatpush.msra.mxu0 %v2058
        %2080 = vmatpush.msra.mxu0 %v2057
        %2081 = vmatpush.msra.mxu0 %v2056
        %2082 = vmatpush.msra.mxu0 %v2055
        %2083 = vmatpush.msra.mxu0 %v2054
        %2084 = vmatpush.msra.mxu0 %v2053
        %2085 = vmatmul.f32.gmra.mxu0 %v2067
        %v2086 = vpop.f32.mrf.mxu0
        %v2087 = vadd.f32 %v2063, %v2086
        %2088 = vdwg.mxu0
        %v2089 = vadd.f32 %v2020, %v2087
        %v2090 = vsel %vm986, %v2089, 0.0
        %2091 = vadd.xlane.f32.xlu0 %v2090
        %v2092 = vpop.xlane.xlu0 %2091
        %v2093 = vmul.f32 %v2092, %v1445
        %v2094 = vmul.f32 %v2089, %v2089
        %v2095 = vsel %vm986, %v2094, 0.0
        %2096 = vadd.xlane.f32.xlu0 %v2095
        %v2097 = vpop.xlane.xlu0 %2096
        %v2098 = vmul.f32 %v2097, %v1445
        %v2099 = vmul.f32 %v2093, %v2093
        %v2100 = vsub.f32 %v2098, %v2099
        %v2101 = vmax.f32 %v2100, 0.0
        %v2102 = vsub.f32 %v2089, %v2093
        %v2103 = vadd.f32 %v2101, 1e-05
        %v2104 = vrsqrt.pop %v2103
        %v2105 = vmul.f32 %v2104, %v2103
        %v2106 = vmul.f32 %v2105, %v2104
        %v2107 = vmul.f32 0.5, %v2106
        %v2108 = vsub.f32 1.5, %v2107
        %v2109 = vmul.f32 %v2104, %v2108
        %vm2110 = vweird.f32 %v2103
        %vm2111 = vweird.f32 %v2104
        %vm2112 = vmor %vm2110, %vm2111
        %v2113 = vsel %vm2112, %v2104, %v2109
        %v2114 = vmul.f32 %v2102, %v2113
        %v2115 = vmul.f32 %v2114, %v1469
        %v2116 = vadd.f32 %v2115, %v1473
        %s2117 = scalar_lea.vmem [#allocation11], 1
        %v2118 = vld [vmem:[%s2117] sm:$0x1]
        %s2119 = scalar_lea.vmem [#allocation13], 1
        %v2120 = vld [vmem:[%s2119] sm:$0x1]
        %s2121 = scalar_lea.vmem %s4, 32
        %v2122 = vld [vmem:[%s2121] sm:$0xff]
        %v2123 = vld [vmem:[%s2121 + $0x8] sm:$0xff]
        %v2124 = vld [vmem:[%s2121 + $0x10] sm:$0xff]
        %v2125 = vld [vmem:[%s2121 + $0x18] sm:$0xff]
        %s2126 = scalar_lea.vmem [#allocation2], 1
        %v2127 = vld [vmem:[%s2126] sm:$0x1]
        %v2129 = vperm.slane %v2127, 0
        %v2132 = vsel %vm986, %v2116, 0
        %2134 = vmatpush.msra.mxu0 0.0
        %2135 = vmatpush.msra.mxu0 0.0
        %2136 = vmatpush.msra.mxu0 0.0
        %2137 = vmatpush.msra.mxu0 0.0
        %2138 = vmatpush.msra.mxu0 0.0
        %2139 = vmatpush.msra.mxu0 0.0
        %2140 = vmatpush.msra.mxu0 0.0
        %2141 = vmatpush.msra.mxu0 0.0
        %2142 = vmatpush.msra.mxu0 0.0
        %2143 = vmatpush.msra.mxu0 0.0
        %2144 = vmatpush.msra.mxu0 0.0
        %2145 = vmatpush.msra.mxu0 0.0
        %2146 = vmatpush.msra.mxu0 %v2125
        %2147 = vmatpush.msra.mxu0 %v2124
        %2148 = vmatpush.msra.mxu0 %v2123
        %2149 = vmatpush.msra.mxu0 %v2122
        %2150 = vmatmul.f32.gmra.mxu0 %v2132
        %v2151 = vpop.f32.mrf.mxu0
        %v2152 = vadd.f32 %v2129, %v2151
        %2153 = vdwg.mxu0
        %2155 = vrot.lane.b32.xlu0 %v2152, 120
        %v2156 = vpop.permute.xlu0 %2155
        %2157 = vrot.lane.b32.xlu0 %v2152, 112
        %v2158 = vpop.permute.xlu0 %2157
        %2159 = vrot.lane.b32.xlu0 %v2152, 104
        %v2160 = vpop.permute.xlu0 %2159
        %2161 = vrot.lane.b32.xlu0 %v2152, 96
        %v2162 = vpop.permute.xlu0 %2161
        %v2163 = vsel %vm1019, %v2152, 0
        %v2165 = vsel %vm1019, %v2162, 0
        %2167 = vmatpush.xpose.msra.mxu0 0.0
        %2168 = vmatpush.xpose.msra.mxu0 0.0
        %2169 = vmatpush.xpose.msra.mxu0 0.0
        %2170 = vmatpush.xpose.msra.mxu0 0.0
        %2171 = vmatpush.xpose.msra.mxu0 0.0
        %2172 = vmatpush.xpose.msra.mxu0 0.0
        %2173 = vmatpush.xpose.msra.mxu0 0.0
        %2174 = vmatpush.xpose.msra.mxu0 0.0
        %2175 = vmatpush.xpose.msra.mxu0 0.0
        %2176 = vmatpush.xpose.msra.mxu0 0.0
        %2177 = vmatpush.xpose.msra.mxu0 0.0
        %2178 = vmatpush.xpose.msra.mxu0 0.0
        %2179 = vmatpush.xpose.msra.mxu0 0.0
        %2180 = vmatpush.xpose.msra.mxu0 0.0
        %2181 = vmatpush.xpose.msra.mxu0 0.0
        %2182 = vmatpush.xpose.msra.mxu0 %v2165
        %2183 = vmatmul.f32.gmra.mxu0 %v2163
        %v2184 = vpop.f32.mrf.mxu0
        %v2185 = vadd.f32 0.0, %v2184
        %2186 = vdwg.mxu0
        %2187 = vrot.lane.b32.xlu0 %v2156, 96
        %v2188 = vpop.permute.xlu0 %2187
        %v2189 = vsel %vm1019, %v2156, 0
        %v2191 = vsel %vm1019, %v2188, 0
        %2193 = vmatpush.xpose.msra.mxu0 0.0
        %2194 = vmatpush.xpose.msra.mxu0 0.0
        %2195 = vmatpush.xpose.msra.mxu0 0.0
        %2196 = vmatpush.xpose.msra.mxu0 0.0
        %2197 = vmatpush.xpose.msra.mxu0 0.0
        %2198 = vmatpush.xpose.msra.mxu0 0.0
        %2199 = vmatpush.xpose.msra.mxu0 0.0
        %2200 = vmatpush.xpose.msra.mxu0 0.0
        %2201 = vmatpush.xpose.msra.mxu0 0.0
        %2202 = vmatpush.xpose.msra.mxu0 0.0
        %2203 = vmatpush.xpose.msra.mxu0 0.0
        %2204 = vmatpush.xpose.msra.mxu0 0.0
        %2205 = vmatpush.xpose.msra.mxu0 0.0
        %2206 = vmatpush.xpose.msra.mxu0 0.0
        %2207 = vmatpush.xpose.msra.mxu0 0.0
        %2208 = vmatpush.xpose.msra.mxu0 %v2191
        %2209 = vmatmul.f32.gmra.mxu0 %v2189
        %v2210 = vpop.f32.mrf.mxu0
        %v2211 = vadd.f32 0.0, %v2210
        %2212 = vdwg.mxu0
        %2213 = vrot.lane.b32.xlu0 %v2158, 96
        %v2214 = vpop.permute.xlu0 %2213
        %v2215 = vsel %vm1019, %v2158, 0
        %v2217 = vsel %vm1019, %v2214, 0
        %2219 = vmatpush.xpose.msra.mxu0 0.0
        %2220 = vmatpush.xpose.msra.mxu0 0.0
        %2221 = vmatpush.xpose.msra.mxu0 0.0
        %2222 = vmatpush.xpose.msra.mxu0 0.0
        %2223 = vmatpush.xpose.msra.mxu0 0.0
        %2224 = vmatpush.xpose.msra.mxu0 0.0
        %2225 = vmatpush.xpose.msra.mxu0 0.0
        %2226 = vmatpush.xpose.msra.mxu0 0.0
        %2227 = vmatpush.xpose.msra.mxu0 0.0
        %2228 = vmatpush.xpose.msra.mxu0 0.0
        %2229 = vmatpush.xpose.msra.mxu0 0.0
        %2230 = vmatpush.xpose.msra.mxu0 0.0
        %2231 = vmatpush.xpose.msra.mxu0 0.0
        %2232 = vmatpush.xpose.msra.mxu0 0.0
        %2233 = vmatpush.xpose.msra.mxu0 0.0
        %2234 = vmatpush.xpose.msra.mxu0 %v2217
        %2235 = vmatmul.f32.gmra.mxu0 %v2215
        %v2236 = vpop.f32.mrf.mxu0
        %v2237 = vadd.f32 0.0, %v2236
        %2238 = vdwg.mxu0
        %2239 = vrot.lane.b32.xlu0 %v2160, 96
        %v2240 = vpop.permute.xlu0 %2239
        %v2241 = vsel %vm1019, %v2160, 0
        %v2243 = vsel %vm1019, %v2240, 0
        %2245 = vmatpush.xpose.msra.mxu0 0.0
        %2246 = vmatpush.xpose.msra.mxu0 0.0
        %2247 = vmatpush.xpose.msra.mxu0 0.0
        %2248 = vmatpush.xpose.msra.mxu0 0.0
        %2249 = vmatpush.xpose.msra.mxu0 0.0
        %2250 = vmatpush.xpose.msra.mxu0 0.0
        %2251 = vmatpush.xpose.msra.mxu0 0.0
        %2252 = vmatpush.xpose.msra.mxu0 0.0
        %2253 = vmatpush.xpose.msra.mxu0 0.0
        %2254 = vmatpush.xpose.msra.mxu0 0.0
        %2255 = vmatpush.xpose.msra.mxu0 0.0
        %2256 = vmatpush.xpose.msra.mxu0 0.0
        %2257 = vmatpush.xpose.msra.mxu0 0.0
        %2258 = vmatpush.xpose.msra.mxu0 0.0
        %2259 = vmatpush.xpose.msra.mxu0 0.0
        %2260 = vmatpush.xpose.msra.mxu0 %v2243
        %2261 = vmatmul.f32.gmra.mxu0 %v2241
        %v2262 = vpop.f32.mrf.mxu0
        %v2263 = vadd.f32 0.0, %v2262
        %2264 = vdwg.mxu0
        %v2265 = vmul.f32 %v2185, 0.35355338
        %v2266 = vmul.f32 %v2211, 0.35355338
        %v2267 = vmul.f32 %v2237, 0.35355338
        %v2268 = vmul.f32 %v2263, 0.35355338
        %v2269 = vsel %vm1127, %v2265, -1e+10
        %v2270 = vsel %vm1127, %v2266, -1e+10
        %v2271 = vsel %vm1127, %v2267, -1e+10
        %v2272 = vsel %vm1127, %v2268, -1e+10
        %v2273 = vsel %vm1019, %v2269, -inf
        %2274 = vmax.xlane.f32.xlu0 %v2273
        %v2275 = vpop.xlane.xlu0 %2274
        %v2276 = vsel %vm1019, %v2270, -inf
        %2277 = vmax.xlane.f32.xlu0 %v2276
        %v2278 = vpop.xlane.xlu0 %2277
        %v2279 = vsel %vm1019, %v2271, -inf
        %2280 = vmax.xlane.f32.xlu0 %v2279
        %v2281 = vpop.xlane.xlu0 %2280
        %v2282 = vsel %vm1019, %v2272, -inf
        %2283 = vmax.xlane.f32.xlu0 %v2282
        %v2284 = vpop.xlane.xlu0 %2283
        %v2285 = vsub.f32 %v2269, %v2275
        %v2286 = vsub.f32 %v2270, %v2278
        %v2287 = vsub.f32 %v2271, %v2281
        %v2288 = vsub.f32 %v2272, %v2284
        %v2289 = vmul.f32 %v2285, 1.442695
        %v2290 = vpow.pop %v2289
        %v2291 = vmul.f32 %v2286, 1.442695
        %v2292 = vpow.pop %v2291
        %v2293 = vmul.f32 %v2287, 1.442695
        %v2294 = vpow.pop %v2293
        %v2295 = vmul.f32 %v2288, 1.442695
        %v2296 = vpow.pop %v2295
        %v2297 = vsel %vm1019, %v2290, 0.0
        %2298 = vadd.xlane.f32.xlu0 %v2297
        %v2299 = vpop.xlane.xlu0 %2298
        %v2300 = vsel %vm1019, %v2292, 0.0
        %2301 = vadd.xlane.f32.xlu0 %v2300
        %v2302 = vpop.xlane.xlu0 %2301
        %v2303 = vsel %vm1019, %v2294, 0.0
        %2304 = vadd.xlane.f32.xlu0 %v2303
        %v2305 = vpop.xlane.xlu0 %2304
        %v2306 = vsel %vm1019, %v2296, 0.0
        %2307 = vadd.xlane.f32.xlu0 %v2306
        %v2308 = vpop.xlane.xlu0 %2307
        %v2309 = vrcp.pop %v2299
        %v2310 = vmul.f32 %v2299, %v2309
        %v2311 = vsub.f32 1.0, %v2310
        %v2312 = vmul.f32 %v2309, %v2311
        %v2313 = vadd.f32 %v2309, %v2312
        %vm2314 = vweird.f32 %v2299
        %vm2315 = vweird.f32 %v2309
        %vm2316 = vmor %vm2314, %vm2315
        %v2317 = vsel %vm2316, %v2309, %v2313
        %v2318 = vand.u32 2147483647, %v2299
        %vm2319 = vcmp.eq.f32.partialorder %v2318, 8.507059e+37
        %v2320 = vand.u32 %v2299, 2147483648
        %v2321 = vor.u32 1.1754944e-38, %v2320
        %v2322 = vsel %vm2319, %v2321, %v2317
        %v2323 = vmul.f32 %v2290, %v2322
        %v2324 = vrcp.pop %v2302
        %v2325 = vmul.f32 %v2302, %v2324
        %v2326 = vsub.f32 1.0, %v2325
        %v2327 = vmul.f32 %v2324, %v2326
        %v2328 = vadd.f32 %v2324, %v2327
        %vm2329 = vweird.f32 %v2302
        %vm2330 = vweird.f32 %v2324
        %vm2331 = vmor %vm2329, %vm2330
        %v2332 = vsel %vm2331, %v2324, %v2328
        %v2333 = vand.u32 2147483647, %v2302
        %vm2334 = vcmp.eq.f32.partialorder %v2333, 8.507059e+37
        %v2335 = vand.u32 %v2302, 2147483648
        %v2336 = vor.u32 1.1754944e-38, %v2335
        %v2337 = vsel %vm2334, %v2336, %v2332
        %v2338 = vmul.f32 %v2292, %v2337
        %v2339 = vrcp.pop %v2305
        %v2340 = vmul.f32 %v2305, %v2339
        %v2341 = vsub.f32 1.0, %v2340
        %v2342 = vmul.f32 %v2339, %v2341
        %v2343 = vadd.f32 %v2339, %v2342
        %vm2344 = vweird.f32 %v2305
        %vm2345 = vweird.f32 %v2339
        %vm2346 = vmor %vm2344, %vm2345
        %v2347 = vsel %vm2346, %v2339, %v2343
        %v2348 = vand.u32 2147483647, %v2305
        %vm2349 = vcmp.eq.f32.partialorder %v2348, 8.507059e+37
        %v2350 = vand.u32 %v2305, 2147483648
        %v2351 = vor.u32 1.1754944e-38, %v2350
        %v2352 = vsel %vm2349, %v2351, %v2347
        %v2353 = vmul.f32 %v2294, %v2352
        %v2354 = vrcp.pop %v2308
        %v2355 = vmul.f32 %v2308, %v2354
        %v2356 = vsub.f32 1.0, %v2355
        %v2357 = vmul.f32 %v2354, %v2356
        %v2358 = vadd.f32 %v2354, %v2357
        %vm2359 = vweird.f32 %v2308
        %vm2360 = vweird.f32 %v2354
        %vm2361 = vmor %vm2359, %vm2360
        %v2362 = vsel %vm2361, %v2354, %v2358
        %v2363 = vand.u32 2147483647, %v2308
        %vm2364 = vcmp.eq.f32.partialorder %v2363, 8.507059e+37
        %v2365 = vand.u32 %v2308, 2147483648
        %v2366 = vor.u32 1.1754944e-38, %v2365
        %v2367 = vsel %vm2364, %v2366, %v2362
        %v2368 = vmul.f32 %v2296, %v2367
        %2369 = vrot.lane.b32.xlu0 %v2152, 64
        %v2370 = vpop.permute.xlu0 %2369
        %v2373 = vsel %vm1019, %v2323, 0
        %2375 = vmatpush.msra.mxu0 0.0
        %2376 = vmatpush.msra.mxu0 0.0
        %2377 = vmatpush.msra.mxu0 0.0
        %2378 = vmatpush.msra.mxu0 0.0
        %2379 = vmatpush.msra.mxu0 0.0
        %2380 = vmatpush.msra.mxu0 0.0
        %2381 = vmatpush.msra.mxu0 0.0
        %2382 = vmatpush.msra.mxu0 0.0
        %2383 = vmatpush.msra.mxu0 0.0
        %2384 = vmatpush.msra.mxu0 0.0
        %2385 = vmatpush.msra.mxu0 0.0
        %2386 = vmatpush.msra.mxu0 0.0
        %2387 = vmatpush.msra.mxu0 0.0
        %2388 = vmatpush.msra.mxu0 0.0
        %2389 = vmatpush.msra.mxu0 0.0
        %2390 = vmatpush.msra.mxu0 %v2370
        %2391 = vmatmul.f32.gmra.mxu0 %v2373
        %v2392 = vpop.f32.mrf.mxu0
        %v2393 = vadd.f32 0.0, %v2392
        %2394 = vdwg.mxu0
        %2395 = vrot.lane.b32.xlu0 %v2156, 64
        %v2396 = vpop.permute.xlu0 %2395
        %v2399 = vsel %vm1019, %v2338, 0
        %2401 = vmatpush.msra.mxu0 0.0
        %2402 = vmatpush.msra.mxu0 0.0
        %2403 = vmatpush.msra.mxu0 0.0
        %2404 = vmatpush.msra.mxu0 0.0
        %2405 = vmatpush.msra.mxu0 0.0
        %2406 = vmatpush.msra.mxu0 0.0
        %2407 = vmatpush.msra.mxu0 0.0
        %2408 = vmatpush.msra.mxu0 0.0
        %2409 = vmatpush.msra.mxu0 0.0
        %2410 = vmatpush.msra.mxu0 0.0
        %2411 = vmatpush.msra.mxu0 0.0
        %2412 = vmatpush.msra.mxu0 0.0
        %2413 = vmatpush.msra.mxu0 0.0
        %2414 = vmatpush.msra.mxu0 0.0
        %2415 = vmatpush.msra.mxu0 0.0
        %2416 = vmatpush.msra.mxu0 %v2396
        %2417 = vmatmul.f32.gmra.mxu0 %v2399
        %v2418 = vpop.f32.mrf.mxu0
        %v2419 = vadd.f32 0.0, %v2418
        %2420 = vdwg.mxu0
        %2421 = vrot.lane.b32.xlu0 %v2158, 64
        %v2422 = vpop.permute.xlu0 %2421
        %v2425 = vsel %vm1019, %v2353, 0
        %2427 = vmatpush.msra.mxu0 0.0
        %2428 = vmatpush.msra.mxu0 0.0
        %2429 = vmatpush.msra.mxu0 0.0
        %2430 = vmatpush.msra.mxu0 0.0
        %2431 = vmatpush.msra.mxu0 0.0
        %2432 = vmatpush.msra.mxu0 0.0
        %2433 = vmatpush.msra.mxu0 0.0
        %2434 = vmatpush.msra.mxu0 0.0
        %2435 = vmatpush.msra.mxu0 0.0
        %2436 = vmatpush.msra.mxu0 0.0
        %2437 = vmatpush.msra.mxu0 0.0
        %2438 = vmatpush.msra.mxu0 0.0
        %2439 = vmatpush.msra.mxu0 0.0
        %2440 = vmatpush.msra.mxu0 0.0
        %2441 = vmatpush.msra.mxu0 0.0
        %2442 = vmatpush.msra.mxu0 %v2422
        %2443 = vmatmul.f32.gmra.mxu0 %v2425
        %v2444 = vpop.f32.mrf.mxu0
        %v2445 = vadd.f32 0.0, %v2444
        %2446 = vdwg.mxu0
        %2447 = vrot.lane.b32.xlu0 %v2160, 64
        %v2448 = vpop.permute.xlu0 %2447
        %v2451 = vsel %vm1019, %v2368, 0
        %2453 = vmatpush.msra.mxu0 0.0
        %2454 = vmatpush.msra.mxu0 0.0
        %2455 = vmatpush.msra.mxu0 0.0
        %2456 = vmatpush.msra.mxu0 0.0
        %2457 = vmatpush.msra.mxu0 0.0
        %2458 = vmatpush.msra.mxu0 0.0
        %2459 = vmatpush.msra.mxu0 0.0
        %2460 = vmatpush.msra.mxu0 0.0
        %2461 = vmatpush.msra.mxu0 0.0
        %2462 = vmatpush.msra.mxu0 0.0
        %2463 = vmatpush.msra.mxu0 0.0
        %2464 = vmatpush.msra.mxu0 0.0
        %2465 = vmatpush.msra.mxu0 0.0
        %2466 = vmatpush.msra.mxu0 0.0
        %2467 = vmatpush.msra.mxu0 0.0
        %2468 = vmatpush.msra.mxu0 %v2448
        %2469 = vmatmul.f32.gmra.mxu0 %v2451
        %v2470 = vpop.f32.mrf.mxu0
        %v2471 = vadd.f32 0.0, %v2470
        %2472 = vdwg.mxu0
        %s2473 = scalar_lea.vmem %s6, 32
        %v2474 = vld [vmem:[%s2473] sm:$0xff]
        %v2475 = vld [vmem:[%s2473 + $0x8] sm:$0xff]
        %v2476 = vld [vmem:[%s2473 + $0x10] sm:$0xff]
        %v2477 = vld [vmem:[%s2473 + $0x18] sm:$0xff]
        %s2478 = scalar_lea.vmem [#allocation5], 1
        %v2479 = vld [vmem:[%s2478] sm:$0x1]
        %v2481 = vsel %vm1019, %v2419, 0
        %2483 = vmatpush.msra.mxu0 0.0
        %2484 = vmatpush.msra.mxu0 0.0
        %2485 = vmatpush.msra.mxu0 0.0
        %2486 = vmatpush.msra.mxu0 0.0
        %2487 = vmatpush.msra.mxu0 0.0
        %2488 = vmatpush.msra.mxu0 0.0
        %2489 = vmatpush.msra.mxu0 0.0
        %2490 = vmatpush.msra.mxu0 0.0
        %2491 = vmatpush.msra.mxu0 0.0
        %2492 = vmatpush.msra.mxu0 0.0
        %2493 = vmatpush.msra.mxu0 0.0
        %2494 = vmatpush.msra.mxu0 0.0
        %2495 = vmatpush.msra.mxu0 0.0
        %2496 = vmatpush.msra.mxu0 0.0
        %2497 = vmatpush.msra.mxu0 0.0
        %2498 = vmatpush.msra.mxu0 %v2475
        %2499 = vmatmul.f32.gmra.mxu0 %v2481
        %v2500 = vpop.f32.mrf.mxu0
        %v2501 = vadd.f32 0.0, %v2500
        %2502 = vdwg.mxu0
        %v2504 = vsel %vm1019, %v2393, 0
        %2506 = vmatpush.msra.mxu0 0.0
        %2507 = vmatpush.msra.mxu0 0.0
        %2508 = vmatpush.msra.mxu0 0.0
        %2509 = vmatpush.msra.mxu0 0.0
        %2510 = vmatpush.msra.mxu0 0.0
        %2511 = vmatpush.msra.mxu0 0.0
        %2512 = vmatpush.msra.mxu0 0.0
        %2513 = vmatpush.msra.mxu0 0.0
        %2514 = vmatpush.msra.mxu0 0.0
        %2515 = vmatpush.msra.mxu0 0.0
        %2516 = vmatpush.msra.mxu0 0.0
        %2517 = vmatpush.msra.mxu0 0.0
        %2518 = vmatpush.msra.mxu0 0.0
        %2519 = vmatpush.msra.mxu0 0.0
        %2520 = vmatpush.msra.mxu0 0.0
        %2521 = vmatpush.msra.mxu0 %v2474
        %2522 = vmatmul.f32.gmra.mxu0 %v2504
        %v2523 = vpop.f32.mrf.mxu0
        %v2524 = vadd.f32 %v2501, %v2523
        %2525 = vdwg.mxu0
        %v2527 = vsel %vm1019, %v2445, 0
        %2529 = vmatpush.msra.mxu0 0.0
        %2530 = vmatpush.msra.mxu0 0.0
        %2531 = vmatpush.msra.mxu0 0.0
        %2532 = vmatpush.msra.mxu0 0.0
        %2533 = vmatpush.msra.mxu0 0.0
        %2534 = vmatpush.msra.mxu0 0.0
        %2535 = vmatpush.msra.mxu0 0.0
        %2536 = vmatpush.msra.mxu0 0.0
        %2537 = vmatpush.msra.mxu0 0.0
        %2538 = vmatpush.msra.mxu0 0.0
        %2539 = vmatpush.msra.mxu0 0.0
        %2540 = vmatpush.msra.mxu0 0.0
        %2541 = vmatpush.msra.mxu0 0.0
        %2542 = vmatpush.msra.mxu0 0.0
        %2543 = vmatpush.msra.mxu0 0.0
        %2544 = vmatpush.msra.mxu0 %v2476
        %2545 = vmatmul.f32.gmra.mxu0 %v2527
        %v2546 = vpop.f32.mrf.mxu0
        %v2547 = vadd.f32 0.0, %v2546
        %2548 = vdwg.mxu0
        %v2549 = vadd.f32 %v2524, %v2547
        %v2551 = vsel %vm1019, %v2471, 0
        %2553 = vmatpush.msra.mxu0 0.0
        %2554 = vmatpush.msra.mxu0 0.0
        %2555 = vmatpush.msra.mxu0 0.0
        %2556 = vmatpush.msra.mxu0 0.0
        %2557 = vmatpush.msra.mxu0 0.0
        %2558 = vmatpush.msra.mxu0 0.0
        %2559 = vmatpush.msra.mxu0 0.0
        %2560 = vmatpush.msra.mxu0 0.0
        %2561 = vmatpush.msra.mxu0 0.0
        %2562 = vmatpush.msra.mxu0 0.0
        %2563 = vmatpush.msra.mxu0 0.0
        %2564 = vmatpush.msra.mxu0 0.0
        %2565 = vmatpush.msra.mxu0 0.0
        %2566 = vmatpush.msra.mxu0 0.0
        %2567 = vmatpush.msra.mxu0 0.0
        %2568 = vmatpush.msra.mxu0 %v2477
        %2569 = vmatmul.f32.gmra.mxu0 %v2551
        %v2570 = vpop.f32.mrf.mxu0
        %v2571 = vadd.f32 0.0, %v2570
        %2572 = vdwg.mxu0
        %v2573 = vadd.f32 %v2549, %v2571
        %v2575 = vperm.slane %v2479, 0
        %v2577 = vadd.f32 %v2573, %v2575
        %v2578 = vadd.f32 %v2116, %v2577
        %v2579 = vsel %vm986, %v2578, 0.0
        %2580 = vadd.xlane.f32.xlu0 %v2579
        %v2581 = vpop.xlane.xlu0 %2580
        %v2582 = vmul.f32 %v2581, %v1445
        %v2583 = vmul.f32 %v2578, %v2578
        %v2584 = vsel %vm986, %v2583, 0.0
        %2585 = vadd.xlane.f32.xlu0 %v2584
        %v2586 = vpop.xlane.xlu0 %2585
        %v2587 = vmul.f32 %v2586, %v1445
        %v2588 = vmul.f32 %v2582, %v2582
        %v2589 = vsub.f32 %v2587, %v2588
        %v2590 = vmax.f32 %v2589, 0.0
        %v2591 = vsub.f32 %v2578, %v2582
        %v2592 = vadd.f32 %v2590, 1e-05
        %v2593 = vrsqrt.pop %v2592
        %v2594 = vmul.f32 %v2593, %v2592
        %v2595 = vmul.f32 %v2594, %v2593
        %v2596 = vmul.f32 0.5, %v2595
        %v2597 = vsub.f32 1.5, %v2596
        %v2598 = vmul.f32 %v2593, %v2597
        %vm2599 = vweird.f32 %v2592
        %vm2600 = vweird.f32 %v2593
        %vm2601 = vmor %vm2599, %vm2600
        %v2602 = vsel %vm2601, %v2593, %v2598
        %v2603 = vmul.f32 %v2591, %v2602
        %v2605 = vperm.slane %v2118, 0
        %v2607 = vmul.f32 %v2603, %v2605
        %v2609 = vperm.slane %v2120, 0
        %v2611 = vadd.f32 %v2607, %v2609
        %s2612 = scalar_lea.vmem %s8, 32
        %v2613 = vld [vmem:[%s2612] sm:$0xff]
        %v2614 = vld [vmem:[%s2612 + $0x8] sm:$0xff]
        %v2615 = vld [vmem:[%s2612 + $0x10] sm:$0xff]
        %v2616 = vld [vmem:[%s2612 + $0x18] sm:$0xff]
        %s2617 = scalar_lea.vmem [#allocation7], 1
        %v2618 = vld [vmem:[%s2617] sm:$0x1]
        %v2620 = vperm.slane %v2618, 0
        %v2623 = vsel %vm986, %v2611, 0
        %2625 = vmatpush.msra.mxu0 0.0
        %2626 = vmatpush.msra.mxu0 0.0
        %2627 = vmatpush.msra.mxu0 0.0
        %2628 = vmatpush.msra.mxu0 0.0
        %2629 = vmatpush.msra.mxu0 0.0
        %2630 = vmatpush.msra.mxu0 0.0
        %2631 = vmatpush.msra.mxu0 0.0
        %2632 = vmatpush.msra.mxu0 0.0
        %2633 = vmatpush.msra.mxu0 0.0
        %2634 = vmatpush.msra.mxu0 0.0
        %2635 = vmatpush.msra.mxu0 0.0
        %2636 = vmatpush.msra.mxu0 0.0
        %2637 = vmatpush.msra.mxu0 %v2616
        %2638 = vmatpush.msra.mxu0 %v2615
        %2639 = vmatpush.msra.mxu0 %v2614
        %2640 = vmatpush.msra.mxu0 %v2613
        %2641 = vmatmul.f32.gmra.mxu0 %v2623
        %v2642 = vpop.f32.mrf.mxu0
        %v2643 = vadd.f32 %v2620, %v2642
        %2644 = vdwg.mxu0
        %s2645 = scalar_lea.vmem %s10, 32
        %v2646 = vld [vmem:[%s2645] sm:$0xff]
        %v2647 = vld [vmem:[%s2645 + $0x8] sm:$0xff]
        %v2648 = vld [vmem:[%s2645 + $0x10] sm:$0xff]
        %v2649 = vld [vmem:[%s2645 + $0x18] sm:$0xff]
        %s2650 = scalar_lea.vmem [#allocation8], 1
        %v2651 = vld [vmem:[%s2650] sm:$0x1]
        %v2653 = vperm.slane %v2651, 0
        %2655 = vmatpush.msra.mxu0 0.0
        %2656 = vmatpush.msra.mxu0 0.0
        %2657 = vmatpush.msra.mxu0 0.0
        %2658 = vmatpush.msra.mxu0 0.0
        %2659 = vmatpush.msra.mxu0 0.0
        %2660 = vmatpush.msra.mxu0 0.0
        %2661 = vmatpush.msra.mxu0 0.0
        %2662 = vmatpush.msra.mxu0 0.0
        %2663 = vmatpush.msra.mxu0 0.0
        %2664 = vmatpush.msra.mxu0 0.0
        %2665 = vmatpush.msra.mxu0 0.0
        %2666 = vmatpush.msra.mxu0 0.0
        %2667 = vmatpush.msra.mxu0 %v2649
        %2668 = vmatpush.msra.mxu0 %v2648
        %2669 = vmatpush.msra.mxu0 %v2647
        %2670 = vmatpush.msra.mxu0 %v2646
        %2671 = vmatmul.f32.gmra.mxu0 %v1516
        %v2672 = vpop.f32.mrf.mxu0
        %v2673 = vadd.f32 %v2653, %v2672
        %2674 = vmatmul.f32.gmra.mxu0 %v1519
        %v2675 = vpop.f32.mrf.mxu0
        %v2676 = vadd.f32 %v2653, %v2675
        %2677 = vdwg.mxu0
        %2679 = vrot.lane.b32.xlu0 %v2643, 120
        %v2680 = vpop.permute.xlu0 %2679
        %2681 = vrot.lane.b32.xlu0 %v2643, 112
        %v2682 = vpop.permute.xlu0 %2681
        %2683 = vrot.lane.b32.xlu0 %v2643, 104
        %v2684 = vpop.permute.xlu0 %2683
        %2687 = vrot.lane.b32.xlu0 %v2673, 120
        %v2688 = vpop.permute.xlu0 %2687
        %2689 = vrot.lane.b32.xlu0 %v2676, 120
        %v2690 = vpop.permute.xlu0 %2689
        %2691 = vrot.lane.b32.xlu0 %v2673, 112
        %v2692 = vpop.permute.xlu0 %2691
        %2693 = vrot.lane.b32.xlu0 %v2676, 112
        %v2694 = vpop.permute.xlu0 %2693
        %2695 = vrot.lane.b32.xlu0 %v2673, 104
        %v2696 = vpop.permute.xlu0 %2695
        %2697 = vrot.lane.b32.xlu0 %v2676, 104
        %v2698 = vpop.permute.xlu0 %2697
        %v2699 = vsel %vm1019, %v2643, 0
        %v2701 = vsel %vm1019, %v2673, 0
        %v2703 = vsel %vm1019, %v2676, 0
        %2705 = vmatpush.xpose.msra.mxu0 0.0
        %2706 = vmatpush.xpose.msra.mxu0 0.0
        %2707 = vmatpush.xpose.msra.mxu0 0.0
        %2708 = vmatpush.xpose.msra.mxu0 0.0
        %2709 = vmatpush.xpose.msra.mxu0 0.0
        %2710 = vmatpush.xpose.msra.mxu0 0.0
        %2711 = vmatpush.xpose.msra.mxu0 0.0
        %2712 = vmatpush.xpose.msra.mxu0 0.0
        %2713 = vmatpush.xpose.msra.mxu0 0.0
        %2714 = vmatpush.xpose.msra.mxu0 0.0
        %2715 = vmatpush.xpose.msra.mxu0 0.0
        %2716 = vmatpush.xpose.msra.mxu0 0.0
        %2717 = vmatpush.xpose.msra.mxu0 0.0
        %2718 = vmatpush.xpose.msra.mxu0 0.0
        %2719 = vmatpush.xpose.msra.mxu0 %v2703
        %2720 = vmatpush.xpose.msra.mxu0 %v2701
        %2721 = vmatmul.f32.gmra.mxu0 %v2699
        %v2722 = vpop.f32.mrf.mxu0
        %v2723 = vadd.f32 0.0, %v2722
        %2724 = vdwg.mxu0
        %v2725 = vsel %vm1019, %v2680, 0
        %v2727 = vsel %vm1019, %v2688, 0
        %v2729 = vsel %vm1019, %v2690, 0
        %2731 = vmatpush.xpose.msra.mxu0 0.0
        %2732 = vmatpush.xpose.msra.mxu0 0.0
        %2733 = vmatpush.xpose.msra.mxu0 0.0
        %2734 = vmatpush.xpose.msra.mxu0 0.0
        %2735 = vmatpush.xpose.msra.mxu0 0.0
        %2736 = vmatpush.xpose.msra.mxu0 0.0
        %2737 = vmatpush.xpose.msra.mxu0 0.0
        %2738 = vmatpush.xpose.msra.mxu0 0.0
        %2739 = vmatpush.xpose.msra.mxu0 0.0
        %2740 = vmatpush.xpose.msra.mxu0 0.0
        %2741 = vmatpush.xpose.msra.mxu0 0.0
        %2742 = vmatpush.xpose.msra.mxu0 0.0
        %2743 = vmatpush.xpose.msra.mxu0 0.0
        %2744 = vmatpush.xpose.msra.mxu0 0.0
        %2745 = vmatpush.xpose.msra.mxu0 %v2729
        %2746 = vmatpush.xpose.msra.mxu0 %v2727
        %2747 = vmatmul.f32.gmra.mxu0 %v2725
        %v2748 = vpop.f32.mrf.mxu0
        %v2749 = vadd.f32 0.0, %v2748
        %2750 = vdwg.mxu0
        %v2751 = vsel %vm1019, %v2682, 0
        %v2753 = vsel %vm1019, %v2692, 0
        %v2755 = vsel %vm1019, %v2694, 0
        %2757 = vmatpush.xpose.msra.mxu0 0.0
        %2758 = vmatpush.xpose.msra.mxu0 0.0
        %2759 = vmatpush.xpose.msra.mxu0 0.0
        %2760 = vmatpush.xpose.msra.mxu0 0.0
        %2761 = vmatpush.xpose.msra.mxu0 0.0
        %2762 = vmatpush.xpose.msra.mxu0 0.0
        %2763 = vmatpush.xpose.msra.mxu0 0.0
        %2764 = vmatpush.xpose.msra.mxu0 0.0
        %2765 = vmatpush.xpose.msra.mxu0 0.0
        %2766 = vmatpush.xpose.msra.mxu0 0.0
        %2767 = vmatpush.xpose.msra.mxu0 0.0
        %2768 = vmatpush.xpose.msra.mxu0 0.0
        %2769 = vmatpush.xpose.msra.mxu0 0.0
        %2770 = vmatpush.xpose.msra.mxu0 0.0
        %2771 = vmatpush.xpose.msra.mxu0 %v2755
        %2772 = vmatpush.xpose.msra.mxu0 %v2753
        %2773 = vmatmul.f32.gmra.mxu0 %v2751
        %v2774 = vpop.f32.mrf.mxu0
        %v2775 = vadd.f32 0.0, %v2774
        %2776 = vdwg.mxu0
        %v2777 = vsel %vm1019, %v2684, 0
        %v2779 = vsel %vm1019, %v2696, 0
        %v2781 = vsel %vm1019, %v2698, 0
        %2783 = vmatpush.xpose.msra.mxu0 0.0
        %2784 = vmatpush.xpose.msra.mxu0 0.0
        %2785 = vmatpush.xpose.msra.mxu0 0.0
        %2786 = vmatpush.xpose.msra.mxu0 0.0
        %2787 = vmatpush.xpose.msra.mxu0 0.0
        %2788 = vmatpush.xpose.msra.mxu0 0.0
        %2789 = vmatpush.xpose.msra.mxu0 0.0
        %2790 = vmatpush.xpose.msra.mxu0 0.0
        %2791 = vmatpush.xpose.msra.mxu0 0.0
        %2792 = vmatpush.xpose.msra.mxu0 0.0
        %2793 = vmatpush.xpose.msra.mxu0 0.0
        %2794 = vmatpush.xpose.msra.mxu0 0.0
        %2795 = vmatpush.xpose.msra.mxu0 0.0
        %2796 = vmatpush.xpose.msra.mxu0 0.0
        %2797 = vmatpush.xpose.msra.mxu0 %v2781
        %2798 = vmatpush.xpose.msra.mxu0 %v2779
        %2799 = vmatmul.f32.gmra.mxu0 %v2777
        %v2800 = vpop.f32.mrf.mxu0
        %v2801 = vadd.f32 0.0, %v2800
        %2802 = vdwg.mxu0
        %v2803 = vmul.f32 %v2723, 0.35355338
        %v2804 = vmul.f32 %v2749, 0.35355338
        %v2805 = vmul.f32 %v2775, 0.35355338
        %v2806 = vmul.f32 %v2801, 0.35355338
        %v2807 = vsel %vm1673, %v2803, -inf
        %2808 = vmax.xlane.f32.xlu0 %v2807
        %v2809 = vpop.xlane.xlu0 %2808
        %v2810 = vsel %vm1673, %v2804, -inf
        %2811 = vmax.xlane.f32.xlu0 %v2810
        %v2812 = vpop.xlane.xlu0 %2811
        %v2813 = vsel %vm1673, %v2805, -inf
        %2814 = vmax.xlane.f32.xlu0 %v2813
        %v2815 = vpop.xlane.xlu0 %2814
        %v2816 = vsel %vm1673, %v2806, -inf
        %2817 = vmax.xlane.f32.xlu0 %v2816
        %v2818 = vpop.xlane.xlu0 %2817
        %v2819 = vsub.f32 %v2803, %v2809
        %v2820 = vsub.f32 %v2804, %v2812
        %v2821 = vsub.f32 %v2805, %v2815
        %v2822 = vsub.f32 %v2806, %v2818
        %v2823 = vmul.f32 %v2819, 1.442695
        %v2824 = vpow.pop %v2823
        %v2825 = vmul.f32 %v2820, 1.442695
        %v2826 = vpow.pop %v2825
        %v2827 = vmul.f32 %v2821, 1.442695
        %v2828 = vpow.pop %v2827
        %v2829 = vmul.f32 %v2822, 1.442695
        %v2830 = vpow.pop %v2829
        %v2831 = vsel %vm1673, %v2824, 0.0
        %2832 = vadd.xlane.f32.xlu0 %v2831
        %v2833 = vpop.xlane.xlu0 %2832
        %v2834 = vsel %vm1673, %v2826, 0.0
        %2835 = vadd.xlane.f32.xlu0 %v2834
        %v2836 = vpop.xlane.xlu0 %2835
        %v2837 = vsel %vm1673, %v2828, 0.0
        %2838 = vadd.xlane.f32.xlu0 %v2837
        %v2839 = vpop.xlane.xlu0 %2838
        %v2840 = vsel %vm1673, %v2830, 0.0
        %2841 = vadd.xlane.f32.xlu0 %v2840
        %v2842 = vpop.xlane.xlu0 %2841
        %v2843 = vrcp.pop %v2833
        %v2844 = vmul.f32 %v2833, %v2843
        %v2845 = vsub.f32 1.0, %v2844
        %v2846 = vmul.f32 %v2843, %v2845
        %v2847 = vadd.f32 %v2843, %v2846
        %vm2848 = vweird.f32 %v2833
        %vm2849 = vweird.f32 %v2843
        %vm2850 = vmor %vm2848, %vm2849
        %v2851 = vsel %vm2850, %v2843, %v2847
        %v2852 = vand.u32 2147483647, %v2833
        %vm2853 = vcmp.eq.f32.partialorder %v2852, 8.507059e+37
        %v2854 = vand.u32 %v2833, 2147483648
        %v2855 = vor.u32 1.1754944e-38, %v2854
        %v2856 = vsel %vm2853, %v2855, %v2851
        %v2857 = vmul.f32 %v2824, %v2856
        %v2858 = vrcp.pop %v2836
        %v2859 = vmul.f32 %v2836, %v2858
        %v2860 = vsub.f32 1.0, %v2859
        %v2861 = vmul.f32 %v2858, %v2860
        %v2862 = vadd.f32 %v2858, %v2861
        %vm2863 = vweird.f32 %v2836
        %vm2864 = vweird.f32 %v2858
        %vm2865 = vmor %vm2863, %vm2864
        %v2866 = vsel %vm2865, %v2858, %v2862
        %v2867 = vand.u32 2147483647, %v2836
        %vm2868 = vcmp.eq.f32.partialorder %v2867, 8.507059e+37
        %v2869 = vand.u32 %v2836, 2147483648
        %v2870 = vor.u32 1.1754944e-38, %v2869
        %v2871 = vsel %vm2868, %v2870, %v2866
        %v2872 = vmul.f32 %v2826, %v2871
        %v2873 = vrcp.pop %v2839
        %v2874 = vmul.f32 %v2839, %v2873
        %v2875 = vsub.f32 1.0, %v2874
        %v2876 = vmul.f32 %v2873, %v2875
        %v2877 = vadd.f32 %v2873, %v2876
        %vm2878 = vweird.f32 %v2839
        %vm2879 = vweird.f32 %v2873
        %vm2880 = vmor %vm2878, %vm2879
        %v2881 = vsel %vm2880, %v2873, %v2877
        %v2882 = vand.u32 2147483647, %v2839
        %vm2883 = vcmp.eq.f32.partialorder %v2882, 8.507059e+37
        %v2884 = vand.u32 %v2839, 2147483648
        %v2885 = vor.u32 1.1754944e-38, %v2884
        %v2886 = vsel %vm2883, %v2885, %v2881
        %v2887 = vmul.f32 %v2828, %v2886
        %v2888 = vrcp.pop %v2842
        %v2889 = vmul.f32 %v2842, %v2888
        %v2890 = vsub.f32 1.0, %v2889
        %v2891 = vmul.f32 %v2888, %v2890
        %v2892 = vadd.f32 %v2888, %v2891
        %vm2893 = vweird.f32 %v2842
        %vm2894 = vweird.f32 %v2888
        %vm2895 = vmor %vm2893, %vm2894
        %v2896 = vsel %vm2895, %v2888, %v2892
        %v2897 = vand.u32 2147483647, %v2842
        %vm2898 = vcmp.eq.f32.partialorder %v2897, 8.507059e+37
        %v2899 = vand.u32 %v2842, 2147483648
        %v2900 = vor.u32 1.1754944e-38, %v2899
        %v2901 = vsel %vm2898, %v2900, %v2896
        %v2902 = vmul.f32 %v2830, %v2901
        %2903 = vst [vmem:[%s907] sm:$0xff] 0.0
        %2904 = vst [vmem:[%s907 + $0x8] sm:$0xff] 0.0
        %2905 = vst [vmem:[%s907 + $0x10] sm:$0xff] 0.0
        %2906 = vst [vmem:[%s907 + $0x18] sm:$0xff] 0.0
        %2907 = vst.msk [vmem:[%s907] sm:$0xff] %vm1673, %v2857
        %2908 = vst.msk [vmem:[%s907 + $0x8] sm:$0xff] %vm1673, %v2872
        %2909 = vst.msk [vmem:[%s907 + $0x10] sm:$0xff] %vm1673, %v2887
        %2910 = vst.msk [vmem:[%s907 + $0x18] sm:$0xff] %vm1673, %v2902
        %2911 = vrot.lane.b32.xlu0 %v2673, 96
        %v2912 = vpop.permute.xlu0 %2911
        %2913 = vrot.lane.b32.xlu0 %v2676, 96
        %v2914 = vpop.permute.xlu0 %2913
        %v2917 = vsel %vm1673, %v2857, 0
        %v2919 = vsel %vm937, %v2914, 0
        %2921 = vmatpush.msra.mxu0 0.0
        %2922 = vmatpush.msra.mxu0 0.0
        %2923 = vmatpush.msra.mxu0 0.0
        %2924 = vmatpush.msra.mxu0 0.0
        %2925 = vmatpush.msra.mxu0 0.0
        %2926 = vmatpush.msra.mxu0 0.0
        %2927 = vmatpush.msra.mxu0 0.0
        %2928 = vmatpush.msra.mxu0 0.0
        %2929 = vmatpush.msra.mxu0 0.0
        %2930 = vmatpush.msra.mxu0 0.0
        %2931 = vmatpush.msra.mxu0 0.0
        %2932 = vmatpush.msra.mxu0 0.0
        %2933 = vmatpush.msra.mxu0 0.0
        %2934 = vmatpush.msra.mxu0 0.0
        %2935 = vmatpush.msra.mxu0 %v2919
        %2936 = vmatpush.msra.mxu0 %v2912
        %2937 = vmatmul.f32.gmra.mxu0 %v2917
        %v2938 = vpop.f32.mrf.mxu0
        %v2939 = vadd.f32 0.0, %v2938
        %2940 = vdwg.mxu0
        %2941 = vrot.lane.b32.xlu0 %v2688, 96
        %v2942 = vpop.permute.xlu0 %2941
        %2943 = vrot.lane.b32.xlu0 %v2690, 96
        %v2944 = vpop.permute.xlu0 %2943
        %v2947 = vsel %vm1673, %v2872, 0
        %v2949 = vsel %vm937, %v2944, 0
        %2951 = vmatpush.msra.mxu0 0.0
        %2952 = vmatpush.msra.mxu0 0.0
        %2953 = vmatpush.msra.mxu0 0.0
        %2954 = vmatpush.msra.mxu0 0.0
        %2955 = vmatpush.msra.mxu0 0.0
        %2956 = vmatpush.msra.mxu0 0.0
        %2957 = vmatpush.msra.mxu0 0.0
        %2958 = vmatpush.msra.mxu0 0.0
        %2959 = vmatpush.msra.mxu0 0.0
        %2960 = vmatpush.msra.mxu0 0.0
        %2961 = vmatpush.msra.mxu0 0.0
        %2962 = vmatpush.msra.mxu0 0.0
        %2963 = vmatpush.msra.mxu0 0.0
        %2964 = vmatpush.msra.mxu0 0.0
        %2965 = vmatpush.msra.mxu0 %v2949
        %2966 = vmatpush.msra.mxu0 %v2942
        %2967 = vmatmul.f32.gmra.mxu0 %v2947
        %v2968 = vpop.f32.mrf.mxu0
        %v2969 = vadd.f32 0.0, %v2968
        %2970 = vdwg.mxu0
        %2971 = vrot.lane.b32.xlu0 %v2692, 96
        %v2972 = vpop.permute.xlu0 %2971
        %2973 = vrot.lane.b32.xlu0 %v2694, 96
        %v2974 = vpop.permute.xlu0 %2973
        %v2977 = vsel %vm1673, %v2887, 0
        %v2979 = vsel %vm937, %v2974, 0
        %2981 = vmatpush.msra.mxu0 0.0
        %2982 = vmatpush.msra.mxu0 0.0
        %2983 = vmatpush.msra.mxu0 0.0
        %2984 = vmatpush.msra.mxu0 0.0
        %2985 = vmatpush.msra.mxu0 0.0
        %2986 = vmatpush.msra.mxu0 0.0
        %2987 = vmatpush.msra.mxu0 0.0
        %2988 = vmatpush.msra.mxu0 0.0
        %2989 = vmatpush.msra.mxu0 0.0
        %2990 = vmatpush.msra.mxu0 0.0
        %2991 = vmatpush.msra.mxu0 0.0
        %2992 = vmatpush.msra.mxu0 0.0
        %2993 = vmatpush.msra.mxu0 0.0
        %2994 = vmatpush.msra.mxu0 0.0
        %2995 = vmatpush.msra.mxu0 %v2979
        %2996 = vmatpush.msra.mxu0 %v2972
        %2997 = vmatmul.f32.gmra.mxu0 %v2977
        %v2998 = vpop.f32.mrf.mxu0
        %v2999 = vadd.f32 0.0, %v2998
        %3000 = vdwg.mxu0
        %3001 = vrot.lane.b32.xlu0 %v2696, 96
        %v3002 = vpop.permute.xlu0 %3001
        %3003 = vrot.lane.b32.xlu0 %v2698, 96
        %v3004 = vpop.permute.xlu0 %3003
        %v3007 = vsel %vm1673, %v2902, 0
        %v3009 = vsel %vm937, %v3004, 0
        %3011 = vmatpush.msra.mxu0 0.0
        %3012 = vmatpush.msra.mxu0 0.0
        %3013 = vmatpush.msra.mxu0 0.0
        %3014 = vmatpush.msra.mxu0 0.0
        %3015 = vmatpush.msra.mxu0 0.0
        %3016 = vmatpush.msra.mxu0 0.0
        %3017 = vmatpush.msra.mxu0 0.0
        %3018 = vmatpush.msra.mxu0 0.0
        %3019 = vmatpush.msra.mxu0 0.0
        %3020 = vmatpush.msra.mxu0 0.0
        %3021 = vmatpush.msra.mxu0 0.0
        %3022 = vmatpush.msra.mxu0 0.0
        %3023 = vmatpush.msra.mxu0 0.0
        %3024 = vmatpush.msra.mxu0 0.0
        %3025 = vmatpush.msra.mxu0 %v3009
        %3026 = vmatpush.msra.mxu0 %v3002
        %3027 = vmatmul.f32.gmra.mxu0 %v3007
        %v3028 = vpop.f32.mrf.mxu0
        %v3029 = vadd.f32 0.0, %v3028
        %3030 = vdwg.mxu0
        %s3031 = scalar_lea.vmem %s12, 32
        %v3032 = vld [vmem:[%s3031] sm:$0xff]
        %v3033 = vld [vmem:[%s3031 + $0x8] sm:$0xff]
        %v3034 = vld [vmem:[%s3031 + $0x10] sm:$0xff]
        %v3035 = vld [vmem:[%s3031 + $0x18] sm:$0xff]
        %s3036 = scalar_lea.vmem [#allocation10], 1
        %v3037 = vld [vmem:[%s3036] sm:$0x1]
        %v3039 = vsel %vm1019, %v2969, 0
        %3041 = vmatpush.msra.mxu0 0.0
        %3042 = vmatpush.msra.mxu0 0.0
        %3043 = vmatpush.msra.mxu0 0.0
        %3044 = vmatpush.msra.mxu0 0.0
        %3045 = vmatpush.msra.mxu0 0.0
        %3046 = vmatpush.msra.mxu0 0.0
        %3047 = vmatpush.msra.mxu0 0.0
        %3048 = vmatpush.msra.mxu0 0.0
        %3049 = vmatpush.msra.mxu0 0.0
        %3050 = vmatpush.msra.mxu0 0.0
        %3051 = vmatpush.msra.mxu0 0.0
        %3052 = vmatpush.msra.mxu0 0.0
        %3053 = vmatpush.msra.mxu0 0.0
        %3054 = vmatpush.msra.mxu0 0.0
        %3055 = vmatpush.msra.mxu0 0.0
        %3056 = vmatpush.msra.mxu0 %v3033
        %3057 = vmatmul.f32.gmra.mxu0 %v3039
        %v3058 = vpop.f32.mrf.mxu0
        %v3059 = vadd.f32 0.0, %v3058
        %3060 = vdwg.mxu0
        %v3062 = vsel %vm1019, %v2939, 0
        %3064 = vmatpush.msra.mxu0 0.0
        %3065 = vmatpush.msra.mxu0 0.0
        %3066 = vmatpush.msra.mxu0 0.0
        %3067 = vmatpush.msra.mxu0 0.0
        %3068 = vmatpush.msra.mxu0 0.0
        %3069 = vmatpush.msra.mxu0 0.0
        %3070 = vmatpush.msra.mxu0 0.0
        %3071 = vmatpush.msra.mxu0 0.0
        %3072 = vmatpush.msra.mxu0 0.0
        %3073 = vmatpush.msra.mxu0 0.0
        %3074 = vmatpush.msra.mxu0 0.0
        %3075 = vmatpush.msra.mxu0 0.0
        %3076 = vmatpush.msra.mxu0 0.0
        %3077 = vmatpush.msra.mxu0 0.0
        %3078 = vmatpush.msra.mxu0 0.0
        %3079 = vmatpush.msra.mxu0 %v3032
        %3080 = vmatmul.f32.gmra.mxu0 %v3062
        %v3081 = vpop.f32.mrf.mxu0
        %v3082 = vadd.f32 %v3059, %v3081
        %3083 = vdwg.mxu0
        %v3085 = vsel %vm1019, %v2999, 0
        %3087 = vmatpush.msra.mxu0 0.0
        %3088 = vmatpush.msra.mxu0 0.0
        %3089 = vmatpush.msra.mxu0 0.0
        %3090 = vmatpush.msra.mxu0 0.0
        %3091 = vmatpush.msra.mxu0 0.0
        %3092 = vmatpush.msra.mxu0 0.0
        %3093 = vmatpush.msra.mxu0 0.0
        %3094 = vmatpush.msra.mxu0 0.0
        %3095 = vmatpush.msra.mxu0 0.0
        %3096 = vmatpush.msra.mxu0 0.0
        %3097 = vmatpush.msra.mxu0 0.0
        %3098 = vmatpush.msra.mxu0 0.0
        %3099 = vmatpush.msra.mxu0 0.0
        %3100 = vmatpush.msra.mxu0 0.0
        %3101 = vmatpush.msra.mxu0 0.0
        %3102 = vmatpush.msra.mxu0 %v3034
        %3103 = vmatmul.f32.gmra.mxu0 %v3085
        %v3104 = vpop.f32.mrf.mxu0
        %v3105 = vadd.f32 0.0, %v3104
        %3106 = vdwg.mxu0
        %v3107 = vadd.f32 %v3082, %v3105
        %v3109 = vsel %vm1019, %v3029, 0
        %3111 = vmatpush.msra.mxu0 0.0
        %3112 = vmatpush.msra.mxu0 0.0
        %3113 = vmatpush.msra.mxu0 0.0
        %3114 = vmatpush.msra.mxu0 0.0
        %3115 = vmatpush.msra.mxu0 0.0
        %3116 = vmatpush.msra.mxu0 0.0
        %3117 = vmatpush.msra.mxu0 0.0
        %3118 = vmatpush.msra.mxu0 0.0
        %3119 = vmatpush.msra.mxu0 0.0
        %3120 = vmatpush.msra.mxu0 0.0
        %3121 = vmatpush.msra.mxu0 0.0
        %3122 = vmatpush.msra.mxu0 0.0
        %3123 = vmatpush.msra.mxu0 0.0
        %3124 = vmatpush.msra.mxu0 0.0
        %3125 = vmatpush.msra.mxu0 0.0
        %3126 = vmatpush.msra.mxu0 %v3035
        %3127 = vmatmul.f32.gmra.mxu0 %v3109
        %v3128 = vpop.f32.mrf.mxu0
        %v3129 = vadd.f32 0.0, %v3128
        %3130 = vdwg.mxu0
        %v3131 = vadd.f32 %v3107, %v3129
        %v3133 = vperm.slane %v3037, 0
        %v3135 = vadd.f32 %v3131, %v3133
        %v3136 = vadd.f32 %v2611, %v3135
        %v3137 = vsel %vm986, %v3136, 0.0
        %3138 = vadd.xlane.f32.xlu0 %v3137
        %v3139 = vpop.xlane.xlu0 %3138
        %v3140 = vmul.f32 %v3139, %v1445
        %v3141 = vmul.f32 %v3136, %v3136
        %v3142 = vsel %vm986, %v3141, 0.0
        %3143 = vadd.xlane.f32.xlu0 %v3142
        %v3144 = vpop.xlane.xlu0 %3143
        %v3145 = vmul.f32 %v3144, %v1445
        %v3146 = vmul.f32 %v3140, %v3140
        %v3147 = vsub.f32 %v3145, %v3146
        %v3148 = vmax.f32 %v3147, 0.0
        %v3149 = vsub.f32 %v3136, %v3140
        %v3150 = vadd.f32 %v3148, 1e-05
        %v3151 = vrsqrt.pop %v3150
        %v3152 = vmul.f32 %v3151, %v3150
        %v3153 = vmul.f32 %v3152, %v3151
        %v3154 = vmul.f32 0.5, %v3153
        %v3155 = vsub.f32 1.5, %v3154
        %v3156 = vmul.f32 %v3151, %v3155
        %vm3157 = vweird.f32 %v3150
        %vm3158 = vweird.f32 %v3151
        %vm3159 = vmor %vm3157, %vm3158
        %v3160 = vsel %vm3159, %v3151, %v3156
        %v3161 = vmul.f32 %v3149, %v3160
        %v3162 = vmul.f32 %v3161, %v2605
        %v3163 = vadd.f32 %v3162, %v2609
        %s3164 = scalar_lea.vmem %s16, 32
        %v3165 = vld [vmem:[%s3164] sm:$0xff]
        %v3166 = vld [vmem:[%s3164 + $0x8] sm:$0xff]
        %v3167 = vld [vmem:[%s3164 + $0x10] sm:$0xff]
        %v3168 = vld [vmem:[%s3164 + $0x18] sm:$0xff]
        %s3169 = scalar_lea.vmem [#allocation14], 1
        %v3170 = vld [vmem:[%s3169] sm:$0x1]
        %v3172 = vperm.slane %v3170, 0
        %v3175 = vsel %vm986, %v3163, 0
        %3177 = vmatpush.msra.mxu0 0.0
        %3178 = vmatpush.msra.mxu0 0.0
        %3179 = vmatpush.msra.mxu0 0.0
        %3180 = vmatpush.msra.mxu0 0.0
        %3181 = vmatpush.msra.mxu0 0.0
        %3182 = vmatpush.msra.mxu0 0.0
        %3183 = vmatpush.msra.mxu0 0.0
        %3184 = vmatpush.msra.mxu0 0.0
        %3185 = vmatpush.msra.mxu0 0.0
        %3186 = vmatpush.msra.mxu0 0.0
        %3187 = vmatpush.msra.mxu0 0.0
        %3188 = vmatpush.msra.mxu0 0.0
        %3189 = vmatpush.msra.mxu0 %v3168
        %3190 = vmatpush.msra.mxu0 %v3167
        %3191 = vmatpush.msra.mxu0 %v3166
        %3192 = vmatpush.msra.mxu0 %v3165
        %3193 = vmatmul.f32.gmra.mxu0 %v3175
        %v3194 = vpop.f32.mrf.mxu0
        %v3195 = vadd.f32 %v3172, %v3194
        %3196 = vdwg.mxu0
        %v3197 = vmax.f32 %v3195, 0.0
        %s3198 = scalar_lea.vmem %s18, 64
        %v3199 = vld [vmem:[%s3198] sm:$0xff]
        %v3200 = vld [vmem:[%s3198 + $0x8] sm:$0xff]
        %v3201 = vld [vmem:[%s3198 + $0x10] sm:$0xff]
        %v3202 = vld [vmem:[%s3198 + $0x18] sm:$0xff]
        %v3203 = vld [vmem:[%s3198 + $0x20] sm:$0xff]
        %v3204 = vld [vmem:[%s3198 + $0x28] sm:$0xff]
        %v3205 = vld [vmem:[%s3198 + $0x30] sm:$0xff]
        %v3206 = vld [vmem:[%s3198 + $0x38] sm:$0xff]
        %s3207 = scalar_lea.vmem [#allocation16], 1
        %v3208 = vld [vmem:[%s3207] sm:$0x1]
        %v3210 = vperm.slane %v3208, 0
        %v3213 = vsel %vm2065, %v3197, 0
        %3215 = vmatpush.msra.mxu0 0.0
        %3216 = vmatpush.msra.mxu0 0.0
        %3217 = vmatpush.msra.mxu0 0.0
        %3218 = vmatpush.msra.mxu0 0.0
        %3219 = vmatpush.msra.mxu0 0.0
        %3220 = vmatpush.msra.mxu0 0.0
        %3221 = vmatpush.msra.mxu0 0.0
        %3222 = vmatpush.msra.mxu0 0.0
        %3223 = vmatpush.msra.mxu0 %v3206
        %3224 = vmatpush.msra.mxu0 %v3205
        %3225 = vmatpush.msra.mxu0 %v3204
        %3226 = vmatpush.msra.mxu0 %v3203
        %3227 = vmatpush.msra.mxu0 %v3202
        %3228 = vmatpush.msra.mxu0 %v3201
        %3229 = vmatpush.msra.mxu0 %v3200
        %3230 = vmatpush.msra.mxu0 %v3199
        %3231 = vmatmul.f32.gmra.mxu0 %v3213
        %v3232 = vpop.f32.mrf.mxu0
        %v3233 = vadd.f32 %v3210, %v3232
        %3234 = vdwg.mxu0
        %v3235 = vadd.f32 %v3163, %v3233
        %v3236 = vsel %vm986, %v3235, 0.0
        %3237 = vadd.xlane.f32.xlu0 %v3236
        %v3238 = vpop.xlane.xlu0 %3237
        %v3239 = vmul.f32 %v3238, %v1445
        %v3240 = vmul.f32 %v3235, %v3235
        %v3241 = vsel %vm986, %v3240, 0.0
        %3242 = vadd.xlane.f32.xlu0 %v3241
        %v3243 = vpop.xlane.xlu0 %3242
        %v3244 = vmul.f32 %v3243, %v1445
        %v3245 = vmul.f32 %v3239, %v3239
        %v3246 = vsub.f32 %v3244, %v3245
        %v3247 = vmax.f32 %v3246, 0.0
        %v3248 = vsub.f32 %v3235, %v3239
        %v3249 = vadd.f32 %v3247, 1e-05
        %v3250 = vrsqrt.pop %v3249
        %v3251 = vmul.f32 %v3250, %v3249
        %v3252 = vmul.f32 %v3251, %v3250
        %v3253 = vmul.f32 0.5, %v3252
        %v3254 = vsub.f32 1.5, %v3253
        %v3255 = vmul.f32 %v3250, %v3254
        %vm3256 = vweird.f32 %v3249
        %vm3257 = vweird.f32 %v3250
        %vm3258 = vmor %vm3256, %vm3257
        %v3259 = vsel %vm3258, %v3250, %v3255
        %v3260 = vmul.f32 %v3248, %v3259
        %v3261 = vmul.f32 %v3260, %v2605
        %v3262 = vadd.f32 %v3261, %v2609
        %v3263 = vld [vmem:[#allocation17] sm:$0xff]
        %v3264 = vld [vmem:[#allocation17 + $0x8] sm:$0xff]
        %v3265 = vld [vmem:[#allocation17 + $0x10] sm:$0xff]
        %v3266 = vld [vmem:[#allocation17 + $0x18] sm:$0xff]
        %v3267 = vld [vmem:[#allocation19] sm:$0x1]
        %v3269 = vperm.slane %v3267, 0
        %v3272 = vsel %vm986, %v3262, 0
        %3274 = vmatpush.msra.mxu0 0.0
        %3275 = vmatpush.msra.mxu0 0.0
        %3276 = vmatpush.msra.mxu0 0.0
        %3277 = vmatpush.msra.mxu0 0.0
        %3278 = vmatpush.msra.mxu0 0.0
        %3279 = vmatpush.msra.mxu0 0.0
        %3280 = vmatpush.msra.mxu0 0.0
        %3281 = vmatpush.msra.mxu0 0.0
        %3282 = vmatpush.msra.mxu0 0.0
        %3283 = vmatpush.msra.mxu0 0.0
        %3284 = vmatpush.msra.mxu0 0.0
        %3285 = vmatpush.msra.mxu0 0.0
        %3286 = vmatpush.msra.mxu0 %v3266
        %3287 = vmatpush.msra.mxu0 %v3265
        %3288 = vmatpush.msra.mxu0 %v3264
        %3289 = vmatpush.msra.mxu0 %v3263
        %3290 = vmatmul.f32.gmra.mxu0 %v3272
        %v3291 = vpop.f32.mrf.mxu0
        %v3292 = vadd.f32 %v3269, %v3291
        %3293 = vdwg.mxu0
        %3294 = vst [vmem:[%s900] sm:$0xff] %v3292
        %s3295 = sand.u32 %s527, 1
        %s3296 = scalar_lea.sflag [#allocation4], %s3295
        %s3297 = sand.u32 %s527, 1
        %s3298 = smul.addr %s3297, 8
        %s3299 = scalar_lea.vmem [#allocation20], %s3298
        %s3300 = sand.u32 %s553, 1
        %s3301 = scalar_lea.sflag [#allocation22], %s3300
        %s3302 = sand.u32 %s553, 1
        %s3303 = smul.addr %s3302, 32
        %s3304 = scalar_lea.vmem [#allocation21], %s3303
        // Predicated region
        $region153: #{decoder_forward.1} parent=107 // pred_check
          %p3305 = pneg %p537
        $region154: #{decoder_forward.1} parent=107 // pred_check_branch
          %3307 = sbr.rel (%p3305) target = $region156
        $region155: #{decoder_forward.1} parent=107 // pred_region
          %3309 = vsyncadd %s3296, 0
          %s3310 = smul.addr %s47, 8
          %s3311 = scalar_lea.hbm %s22, %s3310
          %s3313 = sshll.u32 %s3299, 4
          %s3314 = int_to_ptr.vmem [resolvable:$true] %s3313
          %s3315 = sshll.u32 %s3311, 4
          %s3316 = int_to_ptr.hbm [resolvable:$true] %s3315
          %3318 = dma.vmem_to_hbm [thread:$0]  %s3314, 128, %s3316, %s3296
        $region156: #{decoder_forward.1} parent=107 // pred_fallthru
          _
        // Predicated region
        $region157: #{decoder_forward.1} parent=107 // pred_check
          %p3319 = pneg %p563
        $region158: #{decoder_forward.1} parent=107 // pred_check_branch
          %3321 = sbr.rel (%p3319) target = $region160
        $region159: #{decoder_forward.1} parent=107 // pred_region
          %3323 = vsyncadd %s3301, 0
          %s3324 = smul.addr %s47, 4
          %s3325 = smul.addr %s3324, 8
          %s3326 = scalar_lea.hbm %s23, %s3325
          %s3327 = sshll.u32 %s3304, 4
          %s3328 = int_to_ptr.vmem [resolvable:$true] %s3327
          %s3329 = sshll.u32 %s3326, 4
          %s3330 = int_to_ptr.hbm [resolvable:$true] %s3329
          %3335 = dma.vmem_to_hbm [thread:$0]  %s3328, 512, %s3330, %s3301, 128, 128, 8
        $region160: #{decoder_forward.1} parent=107 // pred_fallthru
          _
      $region108: #{decoder_forward.1} parent=5 // pred_fallthru
        _
      %p3336 = scmp.le.s32.totalorder 2, %s42
      // Predicated region
      $region161: #{decoder_forward.1} parent=5 // pred_check
        %p3337 = pneg %p3336
      $region162: #{decoder_forward.1} parent=5 // pred_check_branch
        %3339 = sbr.rel (%p3337) target = $region164
      $region163: #{decoder_forward.1} parent=5 // pred_region
        %s3340 = ssub.s32 %s42, 2
        // Predicated region
        $region165: #{decoder_forward.1} parent=163 // pred_check
          %p3341 = pneg %p543
        $region166: #{decoder_forward.1} parent=163 // pred_check_branch
          %3343 = sbr.rel (%p3341) target = $region168
        $region167: #{decoder_forward.1} parent=163 // pred_region
          %s3344 = sand.u32 %s528, 1
          %s3345 = scalar_lea.sflag [#allocation4], %s3344
          %s3346 = sand.u32 %s528, 1
          %s3347 = smul.addr %s3346, 8
          %s3348 = scalar_lea.vmem [#allocation20], %s3347
          %3350 = dma.done %s3345, 128
        $region168: #{decoder_forward.1} parent=163 // pred_fallthru
          _
        // Predicated region
        $region169: #{decoder_forward.1} parent=163 // pred_check
          %p3351 = pneg %p569
        $region170: #{decoder_forward.1} parent=163 // pred_check_branch
          %3353 = sbr.rel (%p3351) target = $region172
        $region171: #{decoder_forward.1} parent=163 // pred_region
          %s3354 = sand.u32 %s554, 1
          %s3355 = scalar_lea.sflag [#allocation22], %s3354
          %s3356 = sand.u32 %s554, 1
          %s3357 = smul.addr %s3356, 32
          %s3358 = scalar_lea.vmem [#allocation21], %s3357
          %3360 = dma.done %s3355, 512
        $region172: #{decoder_forward.1} parent=163 // pred_fallthru
          _
      $region164: #{decoder_forward.1} parent=5 // pred_fallthru
        _
    $region6: #{decoder_forward.1} parent=1 // loop_footer
      %s46 = sadd.s32 1, %s42
    $region7: #{decoder_forward.1} parent=1 // loop_footer_branch
      %41 = sbr.rel target = $region3
    $region8: #{decoder_forward.1} parent=1 // loop_exit
      _
    %3361 = vsyncpa [#allocation3], 1
    %s3362 = scalar_lea.sflag [#allocation3], 1
    %3363 = vsyncpa %s3362, 1
    %3364 = vsyncpa [#allocation6], 1
    %3365 = vsyncpa [#allocation9], 1
    %3366 = vsyncpa [#allocation12], 1
    %3367 = vsyncpa [#allocation15], 1
    %3368 = vsyncpa [#allocation18], 1
    %3369 = vsyncpa [#allocation4], 1
    %s3370 = scalar_lea.sflag [#allocation4], 1
    %3371 = vsyncpa %s3370, 1
    %3372 = vsyncpa [#allocation22], 1
    %s3373 = scalar_lea.sflag [#allocation22], 1
    %3374 = vsyncpa %s3373, 1

</llo_original>
